<compile_context>
chip_gen: v7x
topology: tpu7x:2x2x1
jax: 0.10.0
libtpu: 0.0.40
codegen_flags: <defaults>
</compile_context>

<pallas_src>
import functools

import jax
import jax.numpy as jnp
from jax.experimental import pallas as pl
from jax.experimental.pallas import tpu as pltpu  # noqa: F401  (kept for parity / future tuning)


def _softplus(x):
    # matches torch.nn.functional.softplus (beta=1, threshold=20); inf-safe
    return jnp.where(x > 20.0, x, jnp.log1p(jnp.exp(x)))


def _transition_kernel(
    # flattened (Tm1*B, F) sequence inputs
    act_ref, obs_ref, nt_ref, pn_ref, qn_ref,
    # initial posterior state / belief, (B, F)
    s0_ref, b0_ref,
    # fc_embed_state_action: state part, action part, bias
    w_sa_s, w_sa_a, b_sa,
    # fused GRUCell weights: input->3 gates, hidden->3 gates, folded biases
    w_gi, b_gi, w_gh, b_hn,
    # prior head: belief embed + fused (mean|std) output layer
    w_pe, b_pe, w_p, b_p,
    # posterior head: belief part, observation part, embed bias, fused output
    w_qe_b, w_qe_o, b_qe, w_q, b_q,
    # packed output: [belief | p_mean | p_std | p_state | q_mean | q_std | q_state]
    out_ref,
    *, Tm1, B, S, Hb, min_std_dev,
):
    f32 = jnp.float32

    # Batched embeddings for every timestep, hoisted off the serial recurrence.
    act_emb = jnp.dot(act_ref[...], w_sa_a[...], preferred_element_type=f32) + b_sa[...]
    obs_emb = jnp.dot(obs_ref[...], w_qe_o[...], preferred_element_type=f32) + b_qe[...]

    state = s0_ref[...]
    belief = b0_ref[...]

    beliefs, q_means, q_stds, q_states = [], [], [], []
    for t in range(Tm1):                     # fully unrolled; all indices static
        if t > 0:
            nt = nt_ref[(t - 1) * B:t * B, :]     # (B, 1)
            state = state * nt
            belief = belief * nt

        # hidden = relu(fc_embed_state_action([state, action]))
        hidden = jax.nn.relu(
            jnp.dot(state, w_sa_s[...], preferred_element_type=f32)
            + act_emb[t * B:(t + 1) * B, :])

        # GRUCell(hidden, belief) with fused gate matmuls.
        gi = jnp.dot(hidden, w_gi[...], preferred_element_type=f32) + b_gi[...]
        gh = jnp.dot(belief, w_gh[...], preferred_element_type=f32)
        r = jax.nn.sigmoid(gi[:, 0:Hb] + gh[:, 0:Hb])
        z = jax.nn.sigmoid(gi[:, Hb:2 * Hb] + gh[:, Hb:2 * Hb])
        n = jnp.tanh(gi[:, 2 * Hb:3 * Hb] + r * (gh[:, 2 * Hb:3 * Hb] + b_hn[...]))
        belief = (1.0 - z) * n + z * belief
        beliefs.append(belief)

        # Posterior head (must stay in the loop: q_state feeds the recurrence).
        hq = jax.nn.relu(
            jnp.dot(belief, w_qe_b[...], preferred_element_type=f32)
            + obs_emb[t * B:(t + 1) * B, :])
        q_raw = jnp.dot(hq, w_q[...], preferred_element_type=f32) + b_q[...]
        q_mean = q_raw[:, 0:S]
        q_std = _softplus(q_raw[:, S:2 * S]) + min_std_dev
        q_state = q_mean + q_std * qn_ref[t * B:(t + 1) * B, :]
        q_means.append(q_mean)
        q_stds.append(q_std)
        q_states.append(q_state)
        state = q_state

    bel_all = jnp.concatenate(beliefs, axis=0)           # (Tm1*B, Hb)
    q_mean_all = jnp.concatenate(q_means, axis=0)        # (Tm1*B, S)
    q_std_all = jnp.concatenate(q_stds, axis=0)
    q_state_all = jnp.concatenate(q_states, axis=0)

    # Prior head, batched over every timestep (hoisted out of the recurrence —
    # prior states never feed back when observations are provided).
    hp = jax.nn.relu(
        jnp.dot(bel_all, w_pe[...], preferred_element_type=f32) + b_pe[...])
    p_raw = jnp.dot(hp, w_p[...], preferred_element_type=f32) + b_p[...]
    p_mean = p_raw[:, 0:S]
    p_std = _softplus(p_raw[:, S:2 * S]) + min_std_dev
    p_state = p_mean + p_std * pn_ref[...]

    # Single packed output tensor, written once.
    out_ref[:, 0:Hb] = bel_all
    out_ref[:, Hb + 0 * S:Hb + 1 * S] = p_mean
    out_ref[:, Hb + 1 * S:Hb + 2 * S] = p_std
    out_ref[:, Hb + 2 * S:Hb + 3 * S] = p_state
    out_ref[:, Hb + 3 * S:Hb + 4 * S] = q_mean_all
    out_ref[:, Hb + 4 * S:Hb + 5 * S] = q_std_all
    out_ref[:, Hb + 5 * S:Hb + 6 * S] = q_state_all


def transition_model_pallas(prev_state, actions, prev_belief, observations,
                            nonterminals, prior_noise, post_noise, params,
                            min_std_dev=0.1):
    Tm1, B, A = actions.shape
    S = prev_state.shape[1]
    Hb = prev_belief.shape[1]
    E = observations.shape[2]

    # ---- one-time weight fusion / bias folding (cheap XLA ops) ----
    w_gi = jnp.concatenate([params["w_ir"], params["w_iz"], params["w_in"]], axis=1)
    w_gh = jnp.concatenate([params["w_hr"], params["w_hz"], params["w_hn"]], axis=1)
    b_gi = jnp.concatenate([params["b_ir"] + params["b_hr"],
                            params["b_iz"] + params["b_hz"],
                            params["b_in"]], axis=1)
    b_hn = params["b_hn"]                       # stays inside r * (...)
    w_p = jnp.concatenate([params["w_pm"], params["w_psd"]], axis=1)
    b_p = jnp.concatenate([params["b_pm"], params["b_psd"]], axis=1)
    w_q = jnp.concatenate([params["w_qm"], params["w_qsd"]], axis=1)
    b_q = jnp.concatenate([params["b_qm"], params["b_qsd"]], axis=1)

    # ---- flatten time x batch (pure metadata reshapes) ----
    acts_flat = actions.reshape(Tm1 * B, A)
    obs_flat = observations.reshape(Tm1 * B, E)
    nt_flat = nonterminals.reshape(Tm1 * B, 1)
    pn_flat = prior_noise.reshape(Tm1 * B, S)
    qn_flat = post_noise.reshape(Tm1 * B, S)

    kernel = functools.partial(_transition_kernel, Tm1=Tm1, B=B, S=S, Hb=Hb,
                               min_std_dev=min_std_dev)

    packed = pl.pallas_call(
        kernel,
        out_shape=jax.ShapeDtypeStruct((Tm1 * B, Hb + 6 * S), jnp.float32),
    )(acts_flat, obs_flat, nt_flat, pn_flat, qn_flat,
      prev_state, prev_belief,
      params["w_sa_s"], params["w_sa_a"], params["b_sa"],
      w_gi, b_gi, w_gh, b_hn,
      params["w_pe"], params["b_pe"], w_p, b_p,
      params["w_qe_b"], params["w_qe_o"], params["b_qe"], w_q, b_q)

    def unpack(lo, width):
        return packed[:, lo:lo + width].reshape(Tm1, B, width)

    beliefs = unpack(0, Hb)
    p_mean = unpack(Hb + 0 * S, S)
    p_std = unpack(Hb + 1 * S, S)
    p_state = unpack(Hb + 2 * S, S)
    q_mean = unpack(Hb + 3 * S, S)
    q_std = unpack(Hb + 4 * S, S)
    q_state = unpack(Hb + 5 * S, S)

    # StatePredictions ordering from the PyTorch module
    return beliefs, p_state, p_mean, p_std, q_state, q_mean, q_std


def _reference(prev_state, actions, prev_belief, observations, nonterminals,
               prior_noise, post_noise, p, min_std_dev=0.1):
    Tm1 = actions.shape[0]
    belief, state = prev_belief, prev_state
    outs = {k: [] for k in ("b", "pm", "psd", "pst", "qm", "qsd", "qst")}
    for t in range(Tm1):
        nt = jnp.ones_like(nonterminals[0]) if t == 0 else nonterminals[t - 1]
        s, b = state * nt, belief * nt
        hidden = jax.nn.relu(s @ p["w_sa_s"] + actions[t] @ p["w_sa_a"] + p["b_sa"])
        r = jax.nn.sigmoid(hidden @ p["w_ir"] + p["b_ir"] + b @ p["w_hr"] + p["b_hr"])
        z = jax.nn.sigmoid(hidden @ p["w_iz"] + p["b_iz"] + b @ p["w_hz"] + p["b_hz"])
        n = jnp.tanh(hidden @ p["w_in"] + p["b_in"] + r * (b @ p["w_hn"] + p["b_hn"]))
        belief = (1.0 - z) * n + z * b
        hp = jax.nn.relu(belief @ p["w_pe"] + p["b_pe"])
        pm = hp @ p["w_pm"] + p["b_pm"]
        psd = _softplus(hp @ p["w_psd"] + p["b_psd"]) + min_std_dev
        pst = pm + psd * prior_noise[t]
        hq = jax.nn.relu(belief @ p["w_qe_b"] + observations[t] @ p["w_qe_o"] + p["b_qe"])
        qm = hq @ p["w_qm"] + p["b_qm"]
        qsd = _softplus(hq @ p["w_qsd"] + p["b_qsd"]) + min_std_dev
        qst = qm + qsd * post_noise[t]
        state = qst
        for k, v in zip(("b", "pm", "psd", "pst", "qm", "qsd", "qst"),
                        (belief, pm, psd, pst, qm, qsd, qst)):
            outs[k].append(v)
    stk = {k: jnp.stack(v) for k, v in outs.items()}
    return (stk["b"], stk["pst"], stk["pm"], stk["psd"],
            stk["qst"], stk["qm"], stk["qsd"])


def _init_params(key, S, A, Hb, H, E):
    ks = iter(jax.random.split(key, 40))

    def w(shape):
        return jax.random.normal(next(ks), shape, jnp.float32) * 0.1

    return {
        "w_sa_s": w((S, Hb)), "w_sa_a": w((A, Hb)), "b_sa": w((1, Hb)),
        "w_ir": w((Hb, Hb)), "w_iz": w((Hb, Hb)), "w_in": w((Hb, Hb)),
        "b_ir": w((1, Hb)), "b_iz": w((1, Hb)), "b_in": w((1, Hb)),
        "w_hr": w((Hb, Hb)), "w_hz": w((Hb, Hb)), "w_hn": w((Hb, Hb)),
        "b_hr": w((1, Hb)), "b_hz": w((1, Hb)), "b_hn": w((1, Hb)),
        "w_pe": w((Hb, H)), "b_pe": w((1, H)),
        "w_pm": w((H, S)), "b_pm": w((1, S)),
        "w_psd": w((H, S)), "b_psd": w((1, S)),
        "w_qe_b": w((Hb, H)), "w_qe_o": w((E, H)), "b_qe": w((1, H)),
        "w_qm": w((H, S)), "b_qm": w((1, S)),
        "w_qsd": w((H, S)), "b_qsd": w((1, S)),
    }


if __name__ == "__main__":
    # sizes: belief_size=32, state_size=8, action_size=4, hidden_size=32,
    # embedding_size=16, batch=8, sequence length (T-1)=6
    Hb, S, A, H, E = 32, 8, 4, 32, 16
    B, Tm1 = 8, 6

    key = jax.random.PRNGKey(0)
    k_par, k_s, k_b, k_a, k_o, k_nt, k_pn, k_qn = jax.random.split(key, 8)

    params = _init_params(k_par, S, A, Hb, H, E)

    prev_state = jax.random.normal(k_s, (B, S), jnp.float32)
    prev_belief = jax.random.normal(k_b, (B, Hb), jnp.float32)
    actions = jax.random.normal(k_a, (Tm1, B, A), jnp.float32)
    observations = jax.random.normal(k_o, (Tm1, B, E), jnp.float32)
    nonterminals = (jax.random.uniform(k_nt, (Tm1, B, 1)) > 0.1).astype(jnp.float32)
    prior_noise = jax.random.normal(k_pn, (Tm1, B, S), jnp.float32)
    post_noise = jax.random.normal(k_qn, (Tm1, B, S), jnp.float32)

    outs = transition_model_pallas(prev_state, actions, prev_belief,
                                   observations, nonterminals,
                                   prior_noise, post_noise, params)
    outs = jax.block_until_ready(outs)

    refs = _reference(prev_state, actions, prev_belief, observations,
                      nonterminals, prior_noise, post_noise, params)
    for o, r in zip(outs, refs):
        assert o.shape == r.shape
        assert jnp.allclose(o, r, atol=1e-4, rtol=1e-4), float(jnp.abs(o - r).max())

    print("KERNEL_OK")
</pallas_src>

<mosaic_0001>
module attributes {stable_mosaic.version = 11 : i64} {
  func.func @_transition_kernel(%arg0: memref<48x4xf32, #tpu.memory_space<vmem>>, %arg1: memref<48x16xf32, #tpu.memory_space<vmem>>, %arg2: memref<48x1xf32, #tpu.memory_space<vmem>>, %arg3: memref<48x8xf32, #tpu.memory_space<vmem>>, %arg4: memref<48x8xf32, #tpu.memory_space<vmem>>, %arg5: memref<8x8xf32, #tpu.memory_space<vmem>>, %arg6: memref<8x32xf32, #tpu.memory_space<vmem>>, %arg7: memref<8x32xf32, #tpu.memory_space<vmem>>, %arg8: memref<4x32xf32, #tpu.memory_space<vmem>>, %arg9: memref<1x32xf32, #tpu.memory_space<vmem>>, %arg10: memref<32x96xf32, #tpu.memory_space<vmem>>, %arg11: memref<1x96xf32, #tpu.memory_space<vmem>>, %arg12: memref<32x96xf32, #tpu.memory_space<vmem>>, %arg13: memref<1x32xf32, #tpu.memory_space<vmem>>, %arg14: memref<32x32xf32, #tpu.memory_space<vmem>>, %arg15: memref<1x32xf32, #tpu.memory_space<vmem>>, %arg16: memref<32x16xf32, #tpu.memory_space<vmem>>, %arg17: memref<1x16xf32, #tpu.memory_space<vmem>>, %arg18: memref<32x32xf32, #tpu.memory_space<vmem>>, %arg19: memref<16x32xf32, #tpu.memory_space<vmem>>, %arg20: memref<1x32xf32, #tpu.memory_space<vmem>>, %arg21: memref<32x16xf32, #tpu.memory_space<vmem>>, %arg22: memref<1x16xf32, #tpu.memory_space<vmem>>, %arg23: memref<48x80xf32, #tpu.memory_space<vmem>>) attributes {dimension_semantics = [], scalar_prefetch = 0 : i64, scratch_operands = 0 : i64, tpu.core_type = #tpu.core_type<tc>} {
    %c0 = arith.constant 0 : index
    %c0_0 = arith.constant 0 : index
    %0 = vector.load %arg0[%c0, %c0_0] : memref<48x4xf32, #tpu.memory_space<vmem>>, vector<48x4xf32>
    %c0_1 = arith.constant 0 : index
    %c0_2 = arith.constant 0 : index
    %1 = vector.load %arg8[%c0_1, %c0_2] : memref<4x32xf32, #tpu.memory_space<vmem>>, vector<4x32xf32>
    %cst = arith.constant dense<0.000000e+00> : vector<48x32xf32>
    %2 = tpu.matmul %0, %1, %cst {dimension_numbers = #tpu.dot_dimension_numbers<[1], [0], [0], [1], [0, 0, 1, 1], [], []>} : vector<48x4xf32>, vector<4x32xf32>, vector<48x32xf32> -> vector<48x32xf32>
    %c0_3 = arith.constant 0 : index
    %c0_4 = arith.constant 0 : index
    %3 = vector.load %arg9[%c0_3, %c0_4] : memref<1x32xf32, #tpu.memory_space<vmem>>, vector<1x32xf32>
    %4 = vector.broadcast %3 : vector<1x32xf32> to vector<48x32xf32>
    %5 = arith.addf %2, %4 : vector<48x32xf32>
    %c0_5 = arith.constant 0 : index
    %c0_6 = arith.constant 0 : index
    %6 = vector.load %arg1[%c0_5, %c0_6] : memref<48x16xf32, #tpu.memory_space<vmem>>, vector<48x16xf32>
    %c0_7 = arith.constant 0 : index
    %c0_8 = arith.constant 0 : index
    %7 = vector.load %arg19[%c0_7, %c0_8] : memref<16x32xf32, #tpu.memory_space<vmem>>, vector<16x32xf32>
    %cst_9 = arith.constant dense<0.000000e+00> : vector<48x32xf32>
    %8 = tpu.matmul %6, %7, %cst_9 {dimension_numbers = #tpu.dot_dimension_numbers<[1], [0], [0], [1], [0, 0, 1, 1], [], []>} : vector<48x16xf32>, vector<16x32xf32>, vector<48x32xf32> -> vector<48x32xf32>
    %c0_10 = arith.constant 0 : index
    %c0_11 = arith.constant 0 : index
    %9 = vector.load %arg20[%c0_10, %c0_11] : memref<1x32xf32, #tpu.memory_space<vmem>>, vector<1x32xf32>
    %10 = vector.broadcast %9 : vector<1x32xf32> to vector<48x32xf32>
    %11 = arith.addf %8, %10 : vector<48x32xf32>
    %c0_12 = arith.constant 0 : index
    %c0_13 = arith.constant 0 : index
    %12 = vector.load %arg5[%c0_12, %c0_13] : memref<8x8xf32, #tpu.memory_space<vmem>>, vector<8x8xf32>
    %c0_14 = arith.constant 0 : index
    %c0_15 = arith.constant 0 : index
    %13 = vector.load %arg6[%c0_14, %c0_15] : memref<8x32xf32, #tpu.memory_space<vmem>>, vector<8x32xf32>
    %c0_16 = arith.constant 0 : index
    %c0_17 = arith.constant 0 : index
    %14 = vector.load %arg7[%c0_16, %c0_17] : memref<8x32xf32, #tpu.memory_space<vmem>>, vector<8x32xf32>
    %cst_18 = arith.constant dense<0.000000e+00> : vector<8x32xf32>
    %15 = tpu.matmul %12, %14, %cst_18 {dimension_numbers = #tpu.dot_dimension_numbers<[1], [0], [0], [1], [0, 0, 1, 1], [], []>} : vector<8x8xf32>, vector<8x32xf32>, vector<8x32xf32> -> vector<8x32xf32>
    %16 = vector.extract_strided_slice %5 {offsets = [0, 0], sizes = [8, 32], strides = [1, 1]} : vector<48x32xf32> to vector<8x32xf32>
    %17 = arith.addf %15, %16 : vector<8x32xf32>
    %cst_19 = arith.constant 0.000000e+00 : f32
    %18 = vector.broadcast %cst_19 : f32 to vector<8x32xf32>
    %19 = arith.maximumf %17, %18 : vector<8x32xf32>
    %c0_20 = arith.constant 0 : index
    %c0_21 = arith.constant 0 : index
    %20 = vector.load %arg10[%c0_20, %c0_21] : memref<32x96xf32, #tpu.memory_space<vmem>>, vector<32x96xf32>
    %cst_22 = arith.constant dense<0.000000e+00> : vector<8x96xf32>
    %21 = tpu.matmul %19, %20, %cst_22 {dimension_numbers = #tpu.dot_dimension_numbers<[1], [0], [0], [1], [0, 0, 1, 1], [], []>} : vector<8x32xf32>, vector<32x96xf32>, vector<8x96xf32> -> vector<8x96xf32>
    %c0_23 = arith.constant 0 : index
    %c0_24 = arith.constant 0 : index
    %22 = vector.load %arg11[%c0_23, %c0_24] : memref<1x96xf32, #tpu.memory_space<vmem>>, vector<1x96xf32>
    %23 = vector.broadcast %22 : vector<1x96xf32> to vector<8x96xf32>
    %24 = arith.addf %21, %23 : vector<8x96xf32>
    %c0_25 = arith.constant 0 : index
    %c0_26 = arith.constant 0 : index
    %25 = vector.load %arg12[%c0_25, %c0_26] : memref<32x96xf32, #tpu.memory_space<vmem>>, vector<32x96xf32>
    %cst_27 = arith.constant dense<0.000000e+00> : vector<8x96xf32>
    %26 = tpu.matmul %13, %25, %cst_27 {dimension_numbers = #tpu.dot_dimension_numbers<[1], [0], [0], [1], [0, 0, 1, 1], [], []>} : vector<8x32xf32>, vector<32x96xf32>, vector<8x96xf32> -> vector<8x96xf32>
    %27 = vector.extract_strided_slice %24 {offsets = [0, 0], sizes = [8, 32], strides = [1, 1]} : vector<8x96xf32> to vector<8x32xf32>
    %28 = vector.extract_strided_slice %26 {offsets = [0, 0], sizes = [8, 32], strides = [1, 1]} : vector<8x96xf32> to vector<8x32xf32>
    %29 = arith.addf %27, %28 : vector<8x32xf32>
    %30 = arith.negf %29 : vector<8x32xf32>
    %31 = math.exp %30 : vector<8x32xf32>
    %cst_28 = arith.constant 1.000000e+00 : f32
    %32 = vector.broadcast %cst_28 : f32 to vector<8x32xf32>
    %33 = arith.addf %32, %31 : vector<8x32xf32>
    %34 = arith.divf %32, %33 : vector<8x32xf32>
    %35 = vector.extract_strided_slice %24 {offsets = [0, 32], sizes = [8, 32], strides = [1, 1]} : vector<8x96xf32> to vector<8x32xf32>
    %36 = vector.extract_strided_slice %26 {offsets = [0, 32], sizes = [8, 32], strides = [1, 1]} : vector<8x96xf32> to vector<8x32xf32>
    %37 = arith.addf %35, %36 : vector<8x32xf32>
    %38 = arith.negf %37 : vector<8x32xf32>
    %39 = math.exp %38 : vector<8x32xf32>
    %cst_29 = arith.constant 1.000000e+00 : f32
    %40 = vector.broadcast %cst_29 : f32 to vector<8x32xf32>
    %41 = arith.addf %40, %39 : vector<8x32xf32>
    %42 = arith.divf %40, %41 : vector<8x32xf32>
    %43 = vector.extract_strided_slice %24 {offsets = [0, 64], sizes = [8, 32], strides = [1, 1]} : vector<8x96xf32> to vector<8x32xf32>
    %44 = vector.extract_strided_slice %26 {offsets = [0, 64], sizes = [8, 32], strides = [1, 1]} : vector<8x96xf32> to vector<8x32xf32>
    %c0_30 = arith.constant 0 : index
    %c0_31 = arith.constant 0 : index
    %45 = vector.load %arg13[%c0_30, %c0_31] : memref<1x32xf32, #tpu.memory_space<vmem>>, vector<1x32xf32>
    %46 = vector.broadcast %45 : vector<1x32xf32> to vector<8x32xf32>
    %47 = arith.addf %44, %46 : vector<8x32xf32>
    %48 = arith.mulf %34, %47 : vector<8x32xf32>
    %49 = arith.addf %43, %48 : vector<8x32xf32>
    %50 = math.tanh %49 : vector<8x32xf32>
    %cst_32 = arith.constant 1.000000e+00 : f32
    %51 = vector.broadcast %cst_32 : f32 to vector<8x32xf32>
    %52 = arith.subf %51, %42 : vector<8x32xf32>
    %53 = arith.mulf %52, %50 : vector<8x32xf32>
    %54 = arith.mulf %42, %13 : vector<8x32xf32>
    %55 = arith.addf %53, %54 : vector<8x32xf32>
    %c0_33 = arith.constant 0 : index
    %c0_34 = arith.constant 0 : index
    %56 = vector.load %arg18[%c0_33, %c0_34] : memref<32x32xf32, #tpu.memory_space<vmem>>, vector<32x32xf32>
    %cst_35 = arith.constant dense<0.000000e+00> : vector<8x32xf32>
    %57 = tpu.matmul %55, %56, %cst_35 {dimension_numbers = #tpu.dot_dimension_numbers<[1], [0], [0], [1], [0, 0, 1, 1], [], []>} : vector<8x32xf32>, vector<32x32xf32>, vector<8x32xf32> -> vector<8x32xf32>
    %58 = vector.extract_strided_slice %11 {offsets = [0, 0], sizes = [8, 32], strides = [1, 1]} : vector<48x32xf32> to vector<8x32xf32>
    %59 = arith.addf %57, %58 : vector<8x32xf32>
    %cst_36 = arith.constant 0.000000e+00 : f32
    %60 = vector.broadcast %cst_36 : f32 to vector<8x32xf32>
    %61 = arith.maximumf %59, %60 : vector<8x32xf32>
    %c0_37 = arith.constant 0 : index
    %c0_38 = arith.constant 0 : index
    %62 = vector.load %arg21[%c0_37, %c0_38] : memref<32x16xf32, #tpu.memory_space<vmem>>, vector<32x16xf32>
    %cst_39 = arith.constant dense<0.000000e+00> : vector<8x16xf32>
    %63 = tpu.matmul %61, %62, %cst_39 {dimension_numbers = #tpu.dot_dimension_numbers<[1], [0], [0], [1], [0, 0, 1, 1], [], []>} : vector<8x32xf32>, vector<32x16xf32>, vector<8x16xf32> -> vector<8x16xf32>
    %c0_40 = arith.constant 0 : index
    %c0_41 = arith.constant 0 : index
    %64 = vector.load %arg22[%c0_40, %c0_41] : memref<1x16xf32, #tpu.memory_space<vmem>>, vector<1x16xf32>
    %65 = vector.broadcast %64 : vector<1x16xf32> to vector<8x16xf32>
    %66 = arith.addf %63, %65 : vector<8x16xf32>
    %67 = vector.extract_strided_slice %66 {offsets = [0, 0], sizes = [8, 8], strides = [1, 1]} : vector<8x16xf32> to vector<8x8xf32>
    %68 = vector.extract_strided_slice %66 {offsets = [0, 8], sizes = [8, 8], strides = [1, 1]} : vector<8x16xf32> to vector<8x8xf32>
    %cst_42 = arith.constant 2.000000e+01 : f32
    %69 = vector.broadcast %cst_42 : f32 to vector<8x8xf32>
    %70 = arith.cmpf ogt, %68, %69 : vector<8x8xf32>
    %71 = math.exp %68 : vector<8x8xf32>
    %72 = math.log1p %71 : vector<8x8xf32>
    %73 = arith.select %70, %68, %72 : vector<8x8xi1>, vector<8x8xf32>
    %cst_43 = arith.constant 1.000000e-01 : f32
    %74 = vector.broadcast %cst_43 : f32 to vector<8x8xf32>
    %75 = arith.addf %73, %74 : vector<8x8xf32>
    %c0_44 = arith.constant 0 : index
    %c0_45 = arith.constant 0 : index
    %76 = vector.load %arg4[%c0_44, %c0_45] : memref<48x8xf32, #tpu.memory_space<vmem>>, vector<8x8xf32>
    %77 = arith.mulf %75, %76 : vector<8x8xf32>
    %78 = arith.addf %67, %77 : vector<8x8xf32>
    %c0_46 = arith.constant 0 : index
    %c0_47 = arith.constant 0 : index
    %79 = vector.load %arg2[%c0_46, %c0_47] : memref<48x1xf32, #tpu.memory_space<vmem>>, vector<8x1xf32>
    %80 = vector.broadcast %79 : vector<8x1xf32> to vector<8x8xf32>
    %81 = arith.mulf %78, %80 : vector<8x8xf32>
    %82 = vector.broadcast %79 : vector<8x1xf32> to vector<8x32xf32>
    %83 = arith.mulf %55, %82 : vector<8x32xf32>
    %c0_48 = arith.constant 0 : index
    %c0_49 = arith.constant 0 : index
    %84 = vector.load %arg7[%c0_48, %c0_49] : memref<8x32xf32, #tpu.memory_space<vmem>>, vector<8x32xf32>
    %cst_50 = arith.constant dense<0.000000e+00> : vector<8x32xf32>
    %85 = tpu.matmul %81, %84, %cst_50 {dimension_numbers = #tpu.dot_dimension_numbers<[1], [0], [0], [1], [0, 0, 1, 1], [], []>} : vector<8x8xf32>, vector<8x32xf32>, vector<8x32xf32> -> vector<8x32xf32>
    %86 = vector.extract_strided_slice %5 {offsets = [8, 0], sizes = [8, 32], strides = [1, 1]} : vector<48x32xf32> to vector<8x32xf32>
    %87 = arith.addf %85, %86 : vector<8x32xf32>
    %cst_51 = arith.constant 0.000000e+00 : f32
    %88 = vector.broadcast %cst_51 : f32 to vector<8x32xf32>
    %89 = arith.maximumf %87, %88 : vector<8x32xf32>
    %c0_52 = arith.constant 0 : index
    %c0_53 = arith.constant 0 : index
    %90 = vector.load %arg10[%c0_52, %c0_53] : memref<32x96xf32, #tpu.memory_space<vmem>>, vector<32x96xf32>
    %cst_54 = arith.constant dense<0.000000e+00> : vector<8x96xf32>
    %91 = tpu.matmul %89, %90, %cst_54 {dimension_numbers = #tpu.dot_dimension_numbers<[1], [0], [0], [1], [0, 0, 1, 1], [], []>} : vector<8x32xf32>, vector<32x96xf32>, vector<8x96xf32> -> vector<8x96xf32>
    %c0_55 = arith.constant 0 : index
    %c0_56 = arith.constant 0 : index
    %92 = vector.load %arg11[%c0_55, %c0_56] : memref<1x96xf32, #tpu.memory_space<vmem>>, vector<1x96xf32>
    %93 = vector.broadcast %92 : vector<1x96xf32> to vector<8x96xf32>
    %94 = arith.addf %91, %93 : vector<8x96xf32>
    %c0_57 = arith.constant 0 : index
    %c0_58 = arith.constant 0 : index
    %95 = vector.load %arg12[%c0_57, %c0_58] : memref<32x96xf32, #tpu.memory_space<vmem>>, vector<32x96xf32>
    %cst_59 = arith.constant dense<0.000000e+00> : vector<8x96xf32>
    %96 = tpu.matmul %83, %95, %cst_59 {dimension_numbers = #tpu.dot_dimension_numbers<[1], [0], [0], [1], [0, 0, 1, 1], [], []>} : vector<8x32xf32>, vector<32x96xf32>, vector<8x96xf32> -> vector<8x96xf32>
    %97 = vector.extract_strided_slice %94 {offsets = [0, 0], sizes = [8, 32], strides = [1, 1]} : vector<8x96xf32> to vector<8x32xf32>
    %98 = vector.extract_strided_slice %96 {offsets = [0, 0], sizes = [8, 32], strides = [1, 1]} : vector<8x96xf32> to vector<8x32xf32>
    %99 = arith.addf %97, %98 : vector<8x32xf32>
    %100 = arith.negf %99 : vector<8x32xf32>
    %101 = math.exp %100 : vector<8x32xf32>
    %cst_60 = arith.constant 1.000000e+00 : f32
    %102 = vector.broadcast %cst_60 : f32 to vector<8x32xf32>
    %103 = arith.addf %102, %101 : vector<8x32xf32>
    %104 = arith.divf %102, %103 : vector<8x32xf32>
    %105 = vector.extract_strided_slice %94 {offsets = [0, 32], sizes = [8, 32], strides = [1, 1]} : vector<8x96xf32> to vector<8x32xf32>
    %106 = vector.extract_strided_slice %96 {offsets = [0, 32], sizes = [8, 32], strides = [1, 1]} : vector<8x96xf32> to vector<8x32xf32>
    %107 = arith.addf %105, %106 : vector<8x32xf32>
    %108 = arith.negf %107 : vector<8x32xf32>
    %109 = math.exp %108 : vector<8x32xf32>
    %cst_61 = arith.constant 1.000000e+00 : f32
    %110 = vector.broadcast %cst_61 : f32 to vector<8x32xf32>
    %111 = arith.addf %110, %109 : vector<8x32xf32>
    %112 = arith.divf %110, %111 : vector<8x32xf32>
    %113 = vector.extract_strided_slice %94 {offsets = [0, 64], sizes = [8, 32], strides = [1, 1]} : vector<8x96xf32> to vector<8x32xf32>
    %114 = vector.extract_strided_slice %96 {offsets = [0, 64], sizes = [8, 32], strides = [1, 1]} : vector<8x96xf32> to vector<8x32xf32>
    %c0_62 = arith.constant 0 : index
    %c0_63 = arith.constant 0 : index
    %115 = vector.load %arg13[%c0_62, %c0_63] : memref<1x32xf32, #tpu.memory_space<vmem>>, vector<1x32xf32>
    %116 = vector.broadcast %115 : vector<1x32xf32> to vector<8x32xf32>
    %117 = arith.addf %114, %116 : vector<8x32xf32>
    %118 = arith.mulf %104, %117 : vector<8x32xf32>
    %119 = arith.addf %113, %118 : vector<8x32xf32>
    %120 = math.tanh %119 : vector<8x32xf32>
    %cst_64 = arith.constant 1.000000e+00 : f32
    %121 = vector.broadcast %cst_64 : f32 to vector<8x32xf32>
    %122 = arith.subf %121, %112 : vector<8x32xf32>
    %123 = arith.mulf %122, %120 : vector<8x32xf32>
    %124 = arith.mulf %112, %83 : vector<8x32xf32>
    %125 = arith.addf %123, %124 : vector<8x32xf32>
    %c0_65 = arith.constant 0 : index
    %c0_66 = arith.constant 0 : index
    %126 = vector.load %arg18[%c0_65, %c0_66] : memref<32x32xf32, #tpu.memory_space<vmem>>, vector<32x32xf32>
    %cst_67 = arith.constant dense<0.000000e+00> : vector<8x32xf32>
    %127 = tpu.matmul %125, %126, %cst_67 {dimension_numbers = #tpu.dot_dimension_numbers<[1], [0], [0], [1], [0, 0, 1, 1], [], []>} : vector<8x32xf32>, vector<32x32xf32>, vector<8x32xf32> -> vector<8x32xf32>
    %128 = vector.extract_strided_slice %11 {offsets = [8, 0], sizes = [8, 32], strides = [1, 1]} : vector<48x32xf32> to vector<8x32xf32>
    %129 = arith.addf %127, %128 : vector<8x32xf32>
    %cst_68 = arith.constant 0.000000e+00 : f32
    %130 = vector.broadcast %cst_68 : f32 to vector<8x32xf32>
    %131 = arith.maximumf %129, %130 : vector<8x32xf32>
    %c0_69 = arith.constant 0 : index
    %c0_70 = arith.constant 0 : index
    %132 = vector.load %arg21[%c0_69, %c0_70] : memref<32x16xf32, #tpu.memory_space<vmem>>, vector<32x16xf32>
    %cst_71 = arith.constant dense<0.000000e+00> : vector<8x16xf32>
    %133 = tpu.matmul %131, %132, %cst_71 {dimension_numbers = #tpu.dot_dimension_numbers<[1], [0], [0], [1], [0, 0, 1, 1], [], []>} : vector<8x32xf32>, vector<32x16xf32>, vector<8x16xf32> -> vector<8x16xf32>
    %c0_72 = arith.constant 0 : index
    %c0_73 = arith.constant 0 : index
    %134 = vector.load %arg22[%c0_72, %c0_73] : memref<1x16xf32, #tpu.memory_space<vmem>>, vector<1x16xf32>
    %135 = vector.broadcast %134 : vector<1x16xf32> to vector<8x16xf32>
    %136 = arith.addf %133, %135 : vector<8x16xf32>
    %137 = vector.extract_strided_slice %136 {offsets = [0, 0], sizes = [8, 8], strides = [1, 1]} : vector<8x16xf32> to vector<8x8xf32>
    %138 = vector.extract_strided_slice %136 {offsets = [0, 8], sizes = [8, 8], strides = [1, 1]} : vector<8x16xf32> to vector<8x8xf32>
    %cst_74 = arith.constant 2.000000e+01 : f32
    %139 = vector.broadcast %cst_74 : f32 to vector<8x8xf32>
    %140 = arith.cmpf ogt, %138, %139 : vector<8x8xf32>
    %141 = math.exp %138 : vector<8x8xf32>
    %142 = math.log1p %141 : vector<8x8xf32>
    %143 = arith.select %140, %138, %142 : vector<8x8xi1>, vector<8x8xf32>
    %cst_75 = arith.constant 1.000000e-01 : f32
    %144 = vector.broadcast %cst_75 : f32 to vector<8x8xf32>
    %145 = arith.addf %143, %144 : vector<8x8xf32>
    %c8 = arith.constant 8 : index
    %c0_76 = arith.constant 0 : index
    %146 = vector.load %arg4[%c8, %c0_76] : memref<48x8xf32, #tpu.memory_space<vmem>>, vector<8x8xf32>
    %147 = arith.mulf %145, %146 : vector<8x8xf32>
    %148 = arith.addf %137, %147 : vector<8x8xf32>
    %c8_77 = arith.constant 8 : index
    %c0_78 = arith.constant 0 : index
    %149 = vector.load %arg2[%c8_77, %c0_78] : memref<48x1xf32, #tpu.memory_space<vmem>>, vector<8x1xf32>
    %150 = vector.broadcast %149 : vector<8x1xf32> to vector<8x8xf32>
    %151 = arith.mulf %148, %150 : vector<8x8xf32>
    %152 = vector.broadcast %149 : vector<8x1xf32> to vector<8x32xf32>
    %153 = arith.mulf %125, %152 : vector<8x32xf32>
    %c0_79 = arith.constant 0 : index
    %c0_80 = arith.constant 0 : index
    %154 = vector.load %arg7[%c0_79, %c0_80] : memref<8x32xf32, #tpu.memory_space<vmem>>, vector<8x32xf32>
    %cst_81 = arith.constant dense<0.000000e+00> : vector<8x32xf32>
    %155 = tpu.matmul %151, %154, %cst_81 {dimension_numbers = #tpu.dot_dimension_numbers<[1], [0], [0], [1], [0, 0, 1, 1], [], []>} : vector<8x8xf32>, vector<8x32xf32>, vector<8x32xf32> -> vector<8x32xf32>
    %156 = vector.extract_strided_slice %5 {offsets = [16, 0], sizes = [8, 32], strides = [1, 1]} : vector<48x32xf32> to vector<8x32xf32>
    %157 = arith.addf %155, %156 : vector<8x32xf32>
    %cst_82 = arith.constant 0.000000e+00 : f32
    %158 = vector.broadcast %cst_82 : f32 to vector<8x32xf32>
    %159 = arith.maximumf %157, %158 : vector<8x32xf32>
    %c0_83 = arith.constant 0 : index
    %c0_84 = arith.constant 0 : index
    %160 = vector.load %arg10[%c0_83, %c0_84] : memref<32x96xf32, #tpu.memory_space<vmem>>, vector<32x96xf32>
    %cst_85 = arith.constant dense<0.000000e+00> : vector<8x96xf32>
    %161 = tpu.matmul %159, %160, %cst_85 {dimension_numbers = #tpu.dot_dimension_numbers<[1], [0], [0], [1], [0, 0, 1, 1], [], []>} : vector<8x32xf32>, vector<32x96xf32>, vector<8x96xf32> -> vector<8x96xf32>
    %c0_86 = arith.constant 0 : index
    %c0_87 = arith.constant 0 : index
    %162 = vector.load %arg11[%c0_86, %c0_87] : memref<1x96xf32, #tpu.memory_space<vmem>>, vector<1x96xf32>
    %163 = vector.broadcast %162 : vector<1x96xf32> to vector<8x96xf32>
    %164 = arith.addf %161, %163 : vector<8x96xf32>
    %c0_88 = arith.constant 0 : index
    %c0_89 = arith.constant 0 : index
    %165 = vector.load %arg12[%c0_88, %c0_89] : memref<32x96xf32, #tpu.memory_space<vmem>>, vector<32x96xf32>
    %cst_90 = arith.constant dense<0.000000e+00> : vector<8x96xf32>
    %166 = tpu.matmul %153, %165, %cst_90 {dimension_numbers = #tpu.dot_dimension_numbers<[1], [0], [0], [1], [0, 0, 1, 1], [], []>} : vector<8x32xf32>, vector<32x96xf32>, vector<8x96xf32> -> vector<8x96xf32>
    %167 = vector.extract_strided_slice %164 {offsets = [0, 0], sizes = [8, 32], strides = [1, 1]} : vector<8x96xf32> to vector<8x32xf32>
    %168 = vector.extract_strided_slice %166 {offsets = [0, 0], sizes = [8, 32], strides = [1, 1]} : vector<8x96xf32> to vector<8x32xf32>
    %169 = arith.addf %167, %168 : vector<8x32xf32>
    %170 = arith.negf %169 : vector<8x32xf32>
    %171 = math.exp %170 : vector<8x32xf32>
    %cst_91 = arith.constant 1.000000e+00 : f32
    %172 = vector.broadcast %cst_91 : f32 to vector<8x32xf32>
    %173 = arith.addf %172, %171 : vector<8x32xf32>
    %174 = arith.divf %172, %173 : vector<8x32xf32>
    %175 = vector.extract_strided_slice %164 {offsets = [0, 32], sizes = [8, 32], strides = [1, 1]} : vector<8x96xf32> to vector<8x32xf32>
    %176 = vector.extract_strided_slice %166 {offsets = [0, 32], sizes = [8, 32], strides = [1, 1]} : vector<8x96xf32> to vector<8x32xf32>
    %177 = arith.addf %175, %176 : vector<8x32xf32>
    %178 = arith.negf %177 : vector<8x32xf32>
    %179 = math.exp %178 : vector<8x32xf32>
    %cst_92 = arith.constant 1.000000e+00 : f32
    %180 = vector.broadcast %cst_92 : f32 to vector<8x32xf32>
    %181 = arith.addf %180, %179 : vector<8x32xf32>
    %182 = arith.divf %180, %181 : vector<8x32xf32>
    %183 = vector.extract_strided_slice %164 {offsets = [0, 64], sizes = [8, 32], strides = [1, 1]} : vector<8x96xf32> to vector<8x32xf32>
    %184 = vector.extract_strided_slice %166 {offsets = [0, 64], sizes = [8, 32], strides = [1, 1]} : vector<8x96xf32> to vector<8x32xf32>
    %c0_93 = arith.constant 0 : index
    %c0_94 = arith.constant 0 : index
    %185 = vector.load %arg13[%c0_93, %c0_94] : memref<1x32xf32, #tpu.memory_space<vmem>>, vector<1x32xf32>
    %186 = vector.broadcast %185 : vector<1x32xf32> to vector<8x32xf32>
    %187 = arith.addf %184, %186 : vector<8x32xf32>
    %188 = arith.mulf %174, %187 : vector<8x32xf32>
    %189 = arith.addf %183, %188 : vector<8x32xf32>
    %190 = math.tanh %189 : vector<8x32xf32>
    %cst_95 = arith.constant 1.000000e+00 : f32
    %191 = vector.broadcast %cst_95 : f32 to vector<8x32xf32>
    %192 = arith.subf %191, %182 : vector<8x32xf32>
    %193 = arith.mulf %192, %190 : vector<8x32xf32>
    %194 = arith.mulf %182, %153 : vector<8x32xf32>
    %195 = arith.addf %193, %194 : vector<8x32xf32>
    %c0_96 = arith.constant 0 : index
    %c0_97 = arith.constant 0 : index
    %196 = vector.load %arg18[%c0_96, %c0_97] : memref<32x32xf32, #tpu.memory_space<vmem>>, vector<32x32xf32>
    %cst_98 = arith.constant dense<0.000000e+00> : vector<8x32xf32>
    %197 = tpu.matmul %195, %196, %cst_98 {dimension_numbers = #tpu.dot_dimension_numbers<[1], [0], [0], [1], [0, 0, 1, 1], [], []>} : vector<8x32xf32>, vector<32x32xf32>, vector<8x32xf32> -> vector<8x32xf32>
    %198 = vector.extract_strided_slice %11 {offsets = [16, 0], sizes = [8, 32], strides = [1, 1]} : vector<48x32xf32> to vector<8x32xf32>
    %199 = arith.addf %197, %198 : vector<8x32xf32>
    %cst_99 = arith.constant 0.000000e+00 : f32
    %200 = vector.broadcast %cst_99 : f32 to vector<8x32xf32>
    %201 = arith.maximumf %199, %200 : vector<8x32xf32>
    %c0_100 = arith.constant 0 : index
    %c0_101 = arith.constant 0 : index
    %202 = vector.load %arg21[%c0_100, %c0_101] : memref<32x16xf32, #tpu.memory_space<vmem>>, vector<32x16xf32>
    %cst_102 = arith.constant dense<0.000000e+00> : vector<8x16xf32>
    %203 = tpu.matmul %201, %202, %cst_102 {dimension_numbers = #tpu.dot_dimension_numbers<[1], [0], [0], [1], [0, 0, 1, 1], [], []>} : vector<8x32xf32>, vector<32x16xf32>, vector<8x16xf32> -> vector<8x16xf32>
    %c0_103 = arith.constant 0 : index
    %c0_104 = arith.constant 0 : index
    %204 = vector.load %arg22[%c0_103, %c0_104] : memref<1x16xf32, #tpu.memory_space<vmem>>, vector<1x16xf32>
    %205 = vector.broadcast %204 : vector<1x16xf32> to vector<8x16xf32>
    %206 = arith.addf %203, %205 : vector<8x16xf32>
    %207 = vector.extract_strided_slice %206 {offsets = [0, 0], sizes = [8, 8], strides = [1, 1]} : vector<8x16xf32> to vector<8x8xf32>
    %208 = vector.extract_strided_slice %206 {offsets = [0, 8], sizes = [8, 8], strides = [1, 1]} : vector<8x16xf32> to vector<8x8xf32>
    %cst_105 = arith.constant 2.000000e+01 : f32
    %209 = vector.broadcast %cst_105 : f32 to vector<8x8xf32>
    %210 = arith.cmpf ogt, %208, %209 : vector<8x8xf32>
    %211 = math.exp %208 : vector<8x8xf32>
    %212 = math.log1p %211 : vector<8x8xf32>
    %213 = arith.select %210, %208, %212 : vector<8x8xi1>, vector<8x8xf32>
    %cst_106 = arith.constant 1.000000e-01 : f32
    %214 = vector.broadcast %cst_106 : f32 to vector<8x8xf32>
    %215 = arith.addf %213, %214 : vector<8x8xf32>
    %c16 = arith.constant 16 : index
    %c0_107 = arith.constant 0 : index
    %216 = vector.load %arg4[%c16, %c0_107] : memref<48x8xf32, #tpu.memory_space<vmem>>, vector<8x8xf32>
    %217 = arith.mulf %215, %216 : vector<8x8xf32>
    %218 = arith.addf %207, %217 : vector<8x8xf32>
    %c16_108 = arith.constant 16 : index
    %c0_109 = arith.constant 0 : index
    %219 = vector.load %arg2[%c16_108, %c0_109] : memref<48x1xf32, #tpu.memory_space<vmem>>, vector<8x1xf32>
    %220 = vector.broadcast %219 : vector<8x1xf32> to vector<8x8xf32>
    %221 = arith.mulf %218, %220 : vector<8x8xf32>
    %222 = vector.broadcast %219 : vector<8x1xf32> to vector<8x32xf32>
    %223 = arith.mulf %195, %222 : vector<8x32xf32>
    %c0_110 = arith.constant 0 : index
    %c0_111 = arith.constant 0 : index
    %224 = vector.load %arg7[%c0_110, %c0_111] : memref<8x32xf32, #tpu.memory_space<vmem>>, vector<8x32xf32>
    %cst_112 = arith.constant dense<0.000000e+00> : vector<8x32xf32>
    %225 = tpu.matmul %221, %224, %cst_112 {dimension_numbers = #tpu.dot_dimension_numbers<[1], [0], [0], [1], [0, 0, 1, 1], [], []>} : vector<8x8xf32>, vector<8x32xf32>, vector<8x32xf32> -> vector<8x32xf32>
    %226 = vector.extract_strided_slice %5 {offsets = [24, 0], sizes = [8, 32], strides = [1, 1]} : vector<48x32xf32> to vector<8x32xf32>
    %227 = arith.addf %225, %226 : vector<8x32xf32>
    %cst_113 = arith.constant 0.000000e+00 : f32
    %228 = vector.broadcast %cst_113 : f32 to vector<8x32xf32>
    %229 = arith.maximumf %227, %228 : vector<8x32xf32>
    %c0_114 = arith.constant 0 : index
    %c0_115 = arith.constant 0 : index
    %230 = vector.load %arg10[%c0_114, %c0_115] : memref<32x96xf32, #tpu.memory_space<vmem>>, vector<32x96xf32>
    %cst_116 = arith.constant dense<0.000000e+00> : vector<8x96xf32>
    %231 = tpu.matmul %229, %230, %cst_116 {dimension_numbers = #tpu.dot_dimension_numbers<[1], [0], [0], [1], [0, 0, 1, 1], [], []>} : vector<8x32xf32>, vector<32x96xf32>, vector<8x96xf32> -> vector<8x96xf32>
    %c0_117 = arith.constant 0 : index
    %c0_118 = arith.constant 0 : index
    %232 = vector.load %arg11[%c0_117, %c0_118] : memref<1x96xf32, #tpu.memory_space<vmem>>, vector<1x96xf32>
    %233 = vector.broadcast %232 : vector<1x96xf32> to vector<8x96xf32>
    %234 = arith.addf %231, %233 : vector<8x96xf32>
    %c0_119 = arith.constant 0 : index
    %c0_120 = arith.constant 0 : index
    %235 = vector.load %arg12[%c0_119, %c0_120] : memref<32x96xf32, #tpu.memory_space<vmem>>, vector<32x96xf32>
    %cst_121 = arith.constant dense<0.000000e+00> : vector<8x96xf32>
    %236 = tpu.matmul %223, %235, %cst_121 {dimension_numbers = #tpu.dot_dimension_numbers<[1], [0], [0], [1], [0, 0, 1, 1], [], []>} : vector<8x32xf32>, vector<32x96xf32>, vector<8x96xf32> -> vector<8x96xf32>
    %237 = vector.extract_strided_slice %234 {offsets = [0, 0], sizes = [8, 32], strides = [1, 1]} : vector<8x96xf32> to vector<8x32xf32>
    %238 = vector.extract_strided_slice %236 {offsets = [0, 0], sizes = [8, 32], strides = [1, 1]} : vector<8x96xf32> to vector<8x32xf32>
    %239 = arith.addf %237, %238 : vector<8x32xf32>
    %240 = arith.negf %239 : vector<8x32xf32>
    %241 = math.exp %240 : vector<8x32xf32>
    %cst_122 = arith.constant 1.000000e+00 : f32
    %242 = vector.broadcast %cst_122 : f32 to vector<8x32xf32>
    %243 = arith.addf %242, %241 : vector<8x32xf32>
    %244 = arith.divf %242, %243 : vector<8x32xf32>
    %245 = vector.extract_strided_slice %234 {offsets = [0, 32], sizes = [8, 32], strides = [1, 1]} : vector<8x96xf32> to vector<8x32xf32>
    %246 = vector.extract_strided_slice %236 {offsets = [0, 32], sizes = [8, 32], strides = [1, 1]} : vector<8x96xf32> to vector<8x32xf32>
    %247 = arith.addf %245, %246 : vector<8x32xf32>
    %248 = arith.negf %247 : vector<8x32xf32>
    %249 = math.exp %248 : vector<8x32xf32>
    %cst_123 = arith.constant 1.000000e+00 : f32
    %250 = vector.broadcast %cst_123 : f32 to vector<8x32xf32>
    %251 = arith.addf %250, %249 : vector<8x32xf32>
    %252 = arith.divf %250, %251 : vector<8x32xf32>
    %253 = vector.extract_strided_slice %234 {offsets = [0, 64], sizes = [8, 32], strides = [1, 1]} : vector<8x96xf32> to vector<8x32xf32>
    %254 = vector.extract_strided_slice %236 {offsets = [0, 64], sizes = [8, 32], strides = [1, 1]} : vector<8x96xf32> to vector<8x32xf32>
    %c0_124 = arith.constant 0 : index
    %c0_125 = arith.constant 0 : index
    %255 = vector.load %arg13[%c0_124, %c0_125] : memref<1x32xf32, #tpu.memory_space<vmem>>, vector<1x32xf32>
    %256 = vector.broadcast %255 : vector<1x32xf32> to vector<8x32xf32>
    %257 = arith.addf %254, %256 : vector<8x32xf32>
    %258 = arith.mulf %244, %257 : vector<8x32xf32>
    %259 = arith.addf %253, %258 : vector<8x32xf32>
    %260 = math.tanh %259 : vector<8x32xf32>
    %cst_126 = arith.constant 1.000000e+00 : f32
    %261 = vector.broadcast %cst_126 : f32 to vector<8x32xf32>
    %262 = arith.subf %261, %252 : vector<8x32xf32>
    %263 = arith.mulf %262, %260 : vector<8x32xf32>
    %264 = arith.mulf %252, %223 : vector<8x32xf32>
    %265 = arith.addf %263, %264 : vector<8x32xf32>
    %c0_127 = arith.constant 0 : index
    %c0_128 = arith.constant 0 : index
    %266 = vector.load %arg18[%c0_127, %c0_128] : memref<32x32xf32, #tpu.memory_space<vmem>>, vector<32x32xf32>
    %cst_129 = arith.constant dense<0.000000e+00> : vector<8x32xf32>
    %267 = tpu.matmul %265, %266, %cst_129 {dimension_numbers = #tpu.dot_dimension_numbers<[1], [0], [0], [1], [0, 0, 1, 1], [], []>} : vector<8x32xf32>, vector<32x32xf32>, vector<8x32xf32> -> vector<8x32xf32>
    %268 = vector.extract_strided_slice %11 {offsets = [24, 0], sizes = [8, 32], strides = [1, 1]} : vector<48x32xf32> to vector<8x32xf32>
    %269 = arith.addf %267, %268 : vector<8x32xf32>
    %cst_130 = arith.constant 0.000000e+00 : f32
    %270 = vector.broadcast %cst_130 : f32 to vector<8x32xf32>
    %271 = arith.maximumf %269, %270 : vector<8x32xf32>
    %c0_131 = arith.constant 0 : index
    %c0_132 = arith.constant 0 : index
    %272 = vector.load %arg21[%c0_131, %c0_132] : memref<32x16xf32, #tpu.memory_space<vmem>>, vector<32x16xf32>
    %cst_133 = arith.constant dense<0.000000e+00> : vector<8x16xf32>
    %273 = tpu.matmul %271, %272, %cst_133 {dimension_numbers = #tpu.dot_dimension_numbers<[1], [0], [0], [1], [0, 0, 1, 1], [], []>} : vector<8x32xf32>, vector<32x16xf32>, vector<8x16xf32> -> vector<8x16xf32>
    %c0_134 = arith.constant 0 : index
    %c0_135 = arith.constant 0 : index
    %274 = vector.load %arg22[%c0_134, %c0_135] : memref<1x16xf32, #tpu.memory_space<vmem>>, vector<1x16xf32>
    %275 = vector.broadcast %274 : vector<1x16xf32> to vector<8x16xf32>
    %276 = arith.addf %273, %275 : vector<8x16xf32>
    %277 = vector.extract_strided_slice %276 {offsets = [0, 0], sizes = [8, 8], strides = [1, 1]} : vector<8x16xf32> to vector<8x8xf32>
    %278 = vector.extract_strided_slice %276 {offsets = [0, 8], sizes = [8, 8], strides = [1, 1]} : vector<8x16xf32> to vector<8x8xf32>
    %cst_136 = arith.constant 2.000000e+01 : f32
    %279 = vector.broadcast %cst_136 : f32 to vector<8x8xf32>
    %280 = arith.cmpf ogt, %278, %279 : vector<8x8xf32>
    %281 = math.exp %278 : vector<8x8xf32>
    %282 = math.log1p %281 : vector<8x8xf32>
    %283 = arith.select %280, %278, %282 : vector<8x8xi1>, vector<8x8xf32>
    %cst_137 = arith.constant 1.000000e-01 : f32
    %284 = vector.broadcast %cst_137 : f32 to vector<8x8xf32>
    %285 = arith.addf %283, %284 : vector<8x8xf32>
    %c24 = arith.constant 24 : index
    %c0_138 = arith.constant 0 : index
    %286 = vector.load %arg4[%c24, %c0_138] : memref<48x8xf32, #tpu.memory_space<vmem>>, vector<8x8xf32>
    %287 = arith.mulf %285, %286 : vector<8x8xf32>
    %288 = arith.addf %277, %287 : vector<8x8xf32>
    %c24_139 = arith.constant 24 : index
    %c0_140 = arith.constant 0 : index
    %289 = vector.load %arg2[%c24_139, %c0_140] : memref<48x1xf32, #tpu.memory_space<vmem>>, vector<8x1xf32>
    %290 = vector.broadcast %289 : vector<8x1xf32> to vector<8x8xf32>
    %291 = arith.mulf %288, %290 : vector<8x8xf32>
    %292 = vector.broadcast %289 : vector<8x1xf32> to vector<8x32xf32>
    %293 = arith.mulf %265, %292 : vector<8x32xf32>
    %c0_141 = arith.constant 0 : index
    %c0_142 = arith.constant 0 : index
    %294 = vector.load %arg7[%c0_141, %c0_142] : memref<8x32xf32, #tpu.memory_space<vmem>>, vector<8x32xf32>
    %cst_143 = arith.constant dense<0.000000e+00> : vector<8x32xf32>
    %295 = tpu.matmul %291, %294, %cst_143 {dimension_numbers = #tpu.dot_dimension_numbers<[1], [0], [0], [1], [0, 0, 1, 1], [], []>} : vector<8x8xf32>, vector<8x32xf32>, vector<8x32xf32> -> vector<8x32xf32>
    %296 = vector.extract_strided_slice %5 {offsets = [32, 0], sizes = [8, 32], strides = [1, 1]} : vector<48x32xf32> to vector<8x32xf32>
    %297 = arith.addf %295, %296 : vector<8x32xf32>
    %cst_144 = arith.constant 0.000000e+00 : f32
    %298 = vector.broadcast %cst_144 : f32 to vector<8x32xf32>
    %299 = arith.maximumf %297, %298 : vector<8x32xf32>
    %c0_145 = arith.constant 0 : index
    %c0_146 = arith.constant 0 : index
    %300 = vector.load %arg10[%c0_145, %c0_146] : memref<32x96xf32, #tpu.memory_space<vmem>>, vector<32x96xf32>
    %cst_147 = arith.constant dense<0.000000e+00> : vector<8x96xf32>
    %301 = tpu.matmul %299, %300, %cst_147 {dimension_numbers = #tpu.dot_dimension_numbers<[1], [0], [0], [1], [0, 0, 1, 1], [], []>} : vector<8x32xf32>, vector<32x96xf32>, vector<8x96xf32> -> vector<8x96xf32>
    %c0_148 = arith.constant 0 : index
    %c0_149 = arith.constant 0 : index
    %302 = vector.load %arg11[%c0_148, %c0_149] : memref<1x96xf32, #tpu.memory_space<vmem>>, vector<1x96xf32>
    %303 = vector.broadcast %302 : vector<1x96xf32> to vector<8x96xf32>
    %304 = arith.addf %301, %303 : vector<8x96xf32>
    %c0_150 = arith.constant 0 : index
    %c0_151 = arith.constant 0 : index
    %305 = vector.load %arg12[%c0_150, %c0_151] : memref<32x96xf32, #tpu.memory_space<vmem>>, vector<32x96xf32>
    %cst_152 = arith.constant dense<0.000000e+00> : vector<8x96xf32>
    %306 = tpu.matmul %293, %305, %cst_152 {dimension_numbers = #tpu.dot_dimension_numbers<[1], [0], [0], [1], [0, 0, 1, 1], [], []>} : vector<8x32xf32>, vector<32x96xf32>, vector<8x96xf32> -> vector<8x96xf32>
    %307 = vector.extract_strided_slice %304 {offsets = [0, 0], sizes = [8, 32], strides = [1, 1]} : vector<8x96xf32> to vector<8x32xf32>
    %308 = vector.extract_strided_slice %306 {offsets = [0, 0], sizes = [8, 32], strides = [1, 1]} : vector<8x96xf32> to vector<8x32xf32>
    %309 = arith.addf %307, %308 : vector<8x32xf32>
    %310 = arith.negf %309 : vector<8x32xf32>
    %311 = math.exp %310 : vector<8x32xf32>
    %cst_153 = arith.constant 1.000000e+00 : f32
    %312 = vector.broadcast %cst_153 : f32 to vector<8x32xf32>
    %313 = arith.addf %312, %311 : vector<8x32xf32>
    %314 = arith.divf %312, %313 : vector<8x32xf32>
    %315 = vector.extract_strided_slice %304 {offsets = [0, 32], sizes = [8, 32], strides = [1, 1]} : vector<8x96xf32> to vector<8x32xf32>
    %316 = vector.extract_strided_slice %306 {offsets = [0, 32], sizes = [8, 32], strides = [1, 1]} : vector<8x96xf32> to vector<8x32xf32>
    %317 = arith.addf %315, %316 : vector<8x32xf32>
    %318 = arith.negf %317 : vector<8x32xf32>
    %319 = math.exp %318 : vector<8x32xf32>
    %cst_154 = arith.constant 1.000000e+00 : f32
    %320 = vector.broadcast %cst_154 : f32 to vector<8x32xf32>
    %321 = arith.addf %320, %319 : vector<8x32xf32>
    %322 = arith.divf %320, %321 : vector<8x32xf32>
    %323 = vector.extract_strided_slice %304 {offsets = [0, 64], sizes = [8, 32], strides = [1, 1]} : vector<8x96xf32> to vector<8x32xf32>
    %324 = vector.extract_strided_slice %306 {offsets = [0, 64], sizes = [8, 32], strides = [1, 1]} : vector<8x96xf32> to vector<8x32xf32>
    %c0_155 = arith.constant 0 : index
    %c0_156 = arith.constant 0 : index
    %325 = vector.load %arg13[%c0_155, %c0_156] : memref<1x32xf32, #tpu.memory_space<vmem>>, vector<1x32xf32>
    %326 = vector.broadcast %325 : vector<1x32xf32> to vector<8x32xf32>
    %327 = arith.addf %324, %326 : vector<8x32xf32>
    %328 = arith.mulf %314, %327 : vector<8x32xf32>
    %329 = arith.addf %323, %328 : vector<8x32xf32>
    %330 = math.tanh %329 : vector<8x32xf32>
    %cst_157 = arith.constant 1.000000e+00 : f32
    %331 = vector.broadcast %cst_157 : f32 to vector<8x32xf32>
    %332 = arith.subf %331, %322 : vector<8x32xf32>
    %333 = arith.mulf %332, %330 : vector<8x32xf32>
    %334 = arith.mulf %322, %293 : vector<8x32xf32>
    %335 = arith.addf %333, %334 : vector<8x32xf32>
    %c0_158 = arith.constant 0 : index
    %c0_159 = arith.constant 0 : index
    %336 = vector.load %arg18[%c0_158, %c0_159] : memref<32x32xf32, #tpu.memory_space<vmem>>, vector<32x32xf32>
    %cst_160 = arith.constant dense<0.000000e+00> : vector<8x32xf32>
    %337 = tpu.matmul %335, %336, %cst_160 {dimension_numbers = #tpu.dot_dimension_numbers<[1], [0], [0], [1], [0, 0, 1, 1], [], []>} : vector<8x32xf32>, vector<32x32xf32>, vector<8x32xf32> -> vector<8x32xf32>
    %338 = vector.extract_strided_slice %11 {offsets = [32, 0], sizes = [8, 32], strides = [1, 1]} : vector<48x32xf32> to vector<8x32xf32>
    %339 = arith.addf %337, %338 : vector<8x32xf32>
    %cst_161 = arith.constant 0.000000e+00 : f32
    %340 = vector.broadcast %cst_161 : f32 to vector<8x32xf32>
    %341 = arith.maximumf %339, %340 : vector<8x32xf32>
    %c0_162 = arith.constant 0 : index
    %c0_163 = arith.constant 0 : index
    %342 = vector.load %arg21[%c0_162, %c0_163] : memref<32x16xf32, #tpu.memory_space<vmem>>, vector<32x16xf32>
    %cst_164 = arith.constant dense<0.000000e+00> : vector<8x16xf32>
    %343 = tpu.matmul %341, %342, %cst_164 {dimension_numbers = #tpu.dot_dimension_numbers<[1], [0], [0], [1], [0, 0, 1, 1], [], []>} : vector<8x32xf32>, vector<32x16xf32>, vector<8x16xf32> -> vector<8x16xf32>
    %c0_165 = arith.constant 0 : index
    %c0_166 = arith.constant 0 : index
    %344 = vector.load %arg22[%c0_165, %c0_166] : memref<1x16xf32, #tpu.memory_space<vmem>>, vector<1x16xf32>
    %345 = vector.broadcast %344 : vector<1x16xf32> to vector<8x16xf32>
    %346 = arith.addf %343, %345 : vector<8x16xf32>
    %347 = vector.extract_strided_slice %346 {offsets = [0, 0], sizes = [8, 8], strides = [1, 1]} : vector<8x16xf32> to vector<8x8xf32>
    %348 = vector.extract_strided_slice %346 {offsets = [0, 8], sizes = [8, 8], strides = [1, 1]} : vector<8x16xf32> to vector<8x8xf32>
    %cst_167 = arith.constant 2.000000e+01 : f32
    %349 = vector.broadcast %cst_167 : f32 to vector<8x8xf32>
    %350 = arith.cmpf ogt, %348, %349 : vector<8x8xf32>
    %351 = math.exp %348 : vector<8x8xf32>
    %352 = math.log1p %351 : vector<8x8xf32>
    %353 = arith.select %350, %348, %352 : vector<8x8xi1>, vector<8x8xf32>
    %cst_168 = arith.constant 1.000000e-01 : f32
    %354 = vector.broadcast %cst_168 : f32 to vector<8x8xf32>
    %355 = arith.addf %353, %354 : vector<8x8xf32>
    %c32 = arith.constant 32 : index
    %c0_169 = arith.constant 0 : index
    %356 = vector.load %arg4[%c32, %c0_169] : memref<48x8xf32, #tpu.memory_space<vmem>>, vector<8x8xf32>
    %357 = arith.mulf %355, %356 : vector<8x8xf32>
    %358 = arith.addf %347, %357 : vector<8x8xf32>
    %c32_170 = arith.constant 32 : index
    %c0_171 = arith.constant 0 : index
    %359 = vector.load %arg2[%c32_170, %c0_171] : memref<48x1xf32, #tpu.memory_space<vmem>>, vector<8x1xf32>
    %360 = vector.broadcast %359 : vector<8x1xf32> to vector<8x8xf32>
    %361 = arith.mulf %358, %360 : vector<8x8xf32>
    %362 = vector.broadcast %359 : vector<8x1xf32> to vector<8x32xf32>
    %363 = arith.mulf %335, %362 : vector<8x32xf32>
    %c0_172 = arith.constant 0 : index
    %c0_173 = arith.constant 0 : index
    %364 = vector.load %arg7[%c0_172, %c0_173] : memref<8x32xf32, #tpu.memory_space<vmem>>, vector<8x32xf32>
    %cst_174 = arith.constant dense<0.000000e+00> : vector<8x32xf32>
    %365 = tpu.matmul %361, %364, %cst_174 {dimension_numbers = #tpu.dot_dimension_numbers<[1], [0], [0], [1], [0, 0, 1, 1], [], []>} : vector<8x8xf32>, vector<8x32xf32>, vector<8x32xf32> -> vector<8x32xf32>
    %366 = vector.extract_strided_slice %5 {offsets = [40, 0], sizes = [8, 32], strides = [1, 1]} : vector<48x32xf32> to vector<8x32xf32>
    %367 = arith.addf %365, %366 : vector<8x32xf32>
    %cst_175 = arith.constant 0.000000e+00 : f32
    %368 = vector.broadcast %cst_175 : f32 to vector<8x32xf32>
    %369 = arith.maximumf %367, %368 : vector<8x32xf32>
    %c0_176 = arith.constant 0 : index
    %c0_177 = arith.constant 0 : index
    %370 = vector.load %arg10[%c0_176, %c0_177] : memref<32x96xf32, #tpu.memory_space<vmem>>, vector<32x96xf32>
    %cst_178 = arith.constant dense<0.000000e+00> : vector<8x96xf32>
    %371 = tpu.matmul %369, %370, %cst_178 {dimension_numbers = #tpu.dot_dimension_numbers<[1], [0], [0], [1], [0, 0, 1, 1], [], []>} : vector<8x32xf32>, vector<32x96xf32>, vector<8x96xf32> -> vector<8x96xf32>
    %c0_179 = arith.constant 0 : index
    %c0_180 = arith.constant 0 : index
    %372 = vector.load %arg11[%c0_179, %c0_180] : memref<1x96xf32, #tpu.memory_space<vmem>>, vector<1x96xf32>
    %373 = vector.broadcast %372 : vector<1x96xf32> to vector<8x96xf32>
    %374 = arith.addf %371, %373 : vector<8x96xf32>
    %c0_181 = arith.constant 0 : index
    %c0_182 = arith.constant 0 : index
    %375 = vector.load %arg12[%c0_181, %c0_182] : memref<32x96xf32, #tpu.memory_space<vmem>>, vector<32x96xf32>
    %cst_183 = arith.constant dense<0.000000e+00> : vector<8x96xf32>
    %376 = tpu.matmul %363, %375, %cst_183 {dimension_numbers = #tpu.dot_dimension_numbers<[1], [0], [0], [1], [0, 0, 1, 1], [], []>} : vector<8x32xf32>, vector<32x96xf32>, vector<8x96xf32> -> vector<8x96xf32>
    %377 = vector.extract_strided_slice %374 {offsets = [0, 0], sizes = [8, 32], strides = [1, 1]} : vector<8x96xf32> to vector<8x32xf32>
    %378 = vector.extract_strided_slice %376 {offsets = [0, 0], sizes = [8, 32], strides = [1, 1]} : vector<8x96xf32> to vector<8x32xf32>
    %379 = arith.addf %377, %378 : vector<8x32xf32>
    %380 = arith.negf %379 : vector<8x32xf32>
    %381 = math.exp %380 : vector<8x32xf32>
    %cst_184 = arith.constant 1.000000e+00 : f32
    %382 = vector.broadcast %cst_184 : f32 to vector<8x32xf32>
    %383 = arith.addf %382, %381 : vector<8x32xf32>
    %384 = arith.divf %382, %383 : vector<8x32xf32>
    %385 = vector.extract_strided_slice %374 {offsets = [0, 32], sizes = [8, 32], strides = [1, 1]} : vector<8x96xf32> to vector<8x32xf32>
    %386 = vector.extract_strided_slice %376 {offsets = [0, 32], sizes = [8, 32], strides = [1, 1]} : vector<8x96xf32> to vector<8x32xf32>
    %387 = arith.addf %385, %386 : vector<8x32xf32>
    %388 = arith.negf %387 : vector<8x32xf32>
    %389 = math.exp %388 : vector<8x32xf32>
    %cst_185 = arith.constant 1.000000e+00 : f32
    %390 = vector.broadcast %cst_185 : f32 to vector<8x32xf32>
    %391 = arith.addf %390, %389 : vector<8x32xf32>
    %392 = arith.divf %390, %391 : vector<8x32xf32>
    %393 = vector.extract_strided_slice %374 {offsets = [0, 64], sizes = [8, 32], strides = [1, 1]} : vector<8x96xf32> to vector<8x32xf32>
    %394 = vector.extract_strided_slice %376 {offsets = [0, 64], sizes = [8, 32], strides = [1, 1]} : vector<8x96xf32> to vector<8x32xf32>
    %c0_186 = arith.constant 0 : index
    %c0_187 = arith.constant 0 : index
    %395 = vector.load %arg13[%c0_186, %c0_187] : memref<1x32xf32, #tpu.memory_space<vmem>>, vector<1x32xf32>
    %396 = vector.broadcast %395 : vector<1x32xf32> to vector<8x32xf32>
    %397 = arith.addf %394, %396 : vector<8x32xf32>
    %398 = arith.mulf %384, %397 : vector<8x32xf32>
    %399 = arith.addf %393, %398 : vector<8x32xf32>
    %400 = math.tanh %399 : vector<8x32xf32>
    %cst_188 = arith.constant 1.000000e+00 : f32
    %401 = vector.broadcast %cst_188 : f32 to vector<8x32xf32>
    %402 = arith.subf %401, %392 : vector<8x32xf32>
    %403 = arith.mulf %402, %400 : vector<8x32xf32>
    %404 = arith.mulf %392, %363 : vector<8x32xf32>
    %405 = arith.addf %403, %404 : vector<8x32xf32>
    %c0_189 = arith.constant 0 : index
    %c0_190 = arith.constant 0 : index
    %406 = vector.load %arg18[%c0_189, %c0_190] : memref<32x32xf32, #tpu.memory_space<vmem>>, vector<32x32xf32>
    %cst_191 = arith.constant dense<0.000000e+00> : vector<8x32xf32>
    %407 = tpu.matmul %405, %406, %cst_191 {dimension_numbers = #tpu.dot_dimension_numbers<[1], [0], [0], [1], [0, 0, 1, 1], [], []>} : vector<8x32xf32>, vector<32x32xf32>, vector<8x32xf32> -> vector<8x32xf32>
    %408 = vector.extract_strided_slice %11 {offsets = [40, 0], sizes = [8, 32], strides = [1, 1]} : vector<48x32xf32> to vector<8x32xf32>
    %409 = arith.addf %407, %408 : vector<8x32xf32>
    %cst_192 = arith.constant 0.000000e+00 : f32
    %410 = vector.broadcast %cst_192 : f32 to vector<8x32xf32>
    %411 = arith.maximumf %409, %410 : vector<8x32xf32>
    %c0_193 = arith.constant 0 : index
    %c0_194 = arith.constant 0 : index
    %412 = vector.load %arg21[%c0_193, %c0_194] : memref<32x16xf32, #tpu.memory_space<vmem>>, vector<32x16xf32>
    %cst_195 = arith.constant dense<0.000000e+00> : vector<8x16xf32>
    %413 = tpu.matmul %411, %412, %cst_195 {dimension_numbers = #tpu.dot_dimension_numbers<[1], [0], [0], [1], [0, 0, 1, 1], [], []>} : vector<8x32xf32>, vector<32x16xf32>, vector<8x16xf32> -> vector<8x16xf32>
    %c0_196 = arith.constant 0 : index
    %c0_197 = arith.constant 0 : index
    %414 = vector.load %arg22[%c0_196, %c0_197] : memref<1x16xf32, #tpu.memory_space<vmem>>, vector<1x16xf32>
    %415 = vector.broadcast %414 : vector<1x16xf32> to vector<8x16xf32>
    %416 = arith.addf %413, %415 : vector<8x16xf32>
    %417 = vector.extract_strided_slice %416 {offsets = [0, 0], sizes = [8, 8], strides = [1, 1]} : vector<8x16xf32> to vector<8x8xf32>
    %418 = vector.extract_strided_slice %416 {offsets = [0, 8], sizes = [8, 8], strides = [1, 1]} : vector<8x16xf32> to vector<8x8xf32>
    %cst_198 = arith.constant 2.000000e+01 : f32
    %419 = vector.broadcast %cst_198 : f32 to vector<8x8xf32>
    %420 = arith.cmpf ogt, %418, %419 : vector<8x8xf32>
    %421 = math.exp %418 : vector<8x8xf32>
    %422 = math.log1p %421 : vector<8x8xf32>
    %423 = arith.select %420, %418, %422 : vector<8x8xi1>, vector<8x8xf32>
    %cst_199 = arith.constant 1.000000e-01 : f32
    %424 = vector.broadcast %cst_199 : f32 to vector<8x8xf32>
    %425 = arith.addf %423, %424 : vector<8x8xf32>
    %c40 = arith.constant 40 : index
    %c0_200 = arith.constant 0 : index
    %426 = vector.load %arg4[%c40, %c0_200] : memref<48x8xf32, #tpu.memory_space<vmem>>, vector<8x8xf32>
    %427 = arith.mulf %425, %426 : vector<8x8xf32>
    %428 = arith.addf %417, %427 : vector<8x8xf32>
    %429 = tpu.concatenate %55, %125, %195, %265, %335, %405 in 0 : vector<8x32xf32>, vector<8x32xf32>, vector<8x32xf32>, vector<8x32xf32>, vector<8x32xf32>, vector<8x32xf32> -> vector<48x32xf32>
    %430 = tpu.concatenate %67, %137, %207, %277, %347, %417 in 0 : vector<8x8xf32>, vector<8x8xf32>, vector<8x8xf32>, vector<8x8xf32>, vector<8x8xf32>, vector<8x8xf32> -> vector<48x8xf32>
    %431 = tpu.concatenate %75, %145, %215, %285, %355, %425 in 0 : vector<8x8xf32>, vector<8x8xf32>, vector<8x8xf32>, vector<8x8xf32>, vector<8x8xf32>, vector<8x8xf32> -> vector<48x8xf32>
    %432 = tpu.concatenate %78, %148, %218, %288, %358, %428 in 0 : vector<8x8xf32>, vector<8x8xf32>, vector<8x8xf32>, vector<8x8xf32>, vector<8x8xf32>, vector<8x8xf32> -> vector<48x8xf32>
    %c0_201 = arith.constant 0 : index
    %c0_202 = arith.constant 0 : index
    %433 = vector.load %arg14[%c0_201, %c0_202] : memref<32x32xf32, #tpu.memory_space<vmem>>, vector<32x32xf32>
    %cst_203 = arith.constant dense<0.000000e+00> : vector<48x32xf32>
    %434 = tpu.matmul %429, %433, %cst_203 {dimension_numbers = #tpu.dot_dimension_numbers<[1], [0], [0], [1], [0, 0, 1, 1], [], []>} : vector<48x32xf32>, vector<32x32xf32>, vector<48x32xf32> -> vector<48x32xf32>
    %c0_204 = arith.constant 0 : index
    %c0_205 = arith.constant 0 : index
    %435 = vector.load %arg15[%c0_204, %c0_205] : memref<1x32xf32, #tpu.memory_space<vmem>>, vector<1x32xf32>
    %436 = vector.broadcast %435 : vector<1x32xf32> to vector<48x32xf32>
    %437 = arith.addf %434, %436 : vector<48x32xf32>
    %cst_206 = arith.constant 0.000000e+00 : f32
    %438 = vector.broadcast %cst_206 : f32 to vector<48x32xf32>
    %439 = arith.maximumf %437, %438 : vector<48x32xf32>
    %c0_207 = arith.constant 0 : index
    %c0_208 = arith.constant 0 : index
    %440 = vector.load %arg16[%c0_207, %c0_208] : memref<32x16xf32, #tpu.memory_space<vmem>>, vector<32x16xf32>
    %cst_209 = arith.constant dense<0.000000e+00> : vector<48x16xf32>
    %441 = tpu.matmul %439, %440, %cst_209 {dimension_numbers = #tpu.dot_dimension_numbers<[1], [0], [0], [1], [0, 0, 1, 1], [], []>} : vector<48x32xf32>, vector<32x16xf32>, vector<48x16xf32> -> vector<48x16xf32>
    %c0_210 = arith.constant 0 : index
    %c0_211 = arith.constant 0 : index
    %442 = vector.load %arg17[%c0_210, %c0_211] : memref<1x16xf32, #tpu.memory_space<vmem>>, vector<1x16xf32>
    %443 = vector.broadcast %442 : vector<1x16xf32> to vector<48x16xf32>
    %444 = arith.addf %441, %443 : vector<48x16xf32>
    %445 = vector.extract_strided_slice %444 {offsets = [0, 0], sizes = [48, 8], strides = [1, 1]} : vector<48x16xf32> to vector<48x8xf32>
    %446 = vector.extract_strided_slice %444 {offsets = [0, 8], sizes = [48, 8], strides = [1, 1]} : vector<48x16xf32> to vector<48x8xf32>
    %cst_212 = arith.constant 2.000000e+01 : f32
    %447 = vector.broadcast %cst_212 : f32 to vector<48x8xf32>
    %448 = arith.cmpf ogt, %446, %447 : vector<48x8xf32>
    %449 = math.exp %446 : vector<48x8xf32>
    %450 = math.log1p %449 : vector<48x8xf32>
    %451 = arith.select %448, %446, %450 : vector<48x8xi1>, vector<48x8xf32>
    %cst_213 = arith.constant 1.000000e-01 : f32
    %452 = vector.broadcast %cst_213 : f32 to vector<48x8xf32>
    %453 = arith.addf %451, %452 : vector<48x8xf32>
    %c0_214 = arith.constant 0 : index
    %c0_215 = arith.constant 0 : index
    %454 = vector.load %arg3[%c0_214, %c0_215] : memref<48x8xf32, #tpu.memory_space<vmem>>, vector<48x8xf32>
    %455 = arith.mulf %453, %454 : vector<48x8xf32>
    %456 = arith.addf %445, %455 : vector<48x8xf32>
    %c0_216 = arith.constant 0 : index
    %c0_217 = arith.constant 0 : index
    %457 = vector.load %arg23[%c0_216, %c0_217] : memref<48x80xf32, #tpu.memory_space<vmem>>, vector<48x32xf32>
    tpu.vector_store %arg23[%c0_216, %c0_217], %429 {strides = array<i32>} : memref<48x80xf32, #tpu.memory_space<vmem>>, vector<48x32xf32>,
    %c0_218 = arith.constant 0 : index
    %c32_219 = arith.constant 32 : index
    %458 = vector.load %arg23[%c0_218, %c32_219] : memref<48x80xf32, #tpu.memory_space<vmem>>, vector<48x8xf32>
    tpu.vector_store %arg23[%c0_218, %c32_219], %445 {strides = array<i32>} : memref<48x80xf32, #tpu.memory_space<vmem>>, vector<48x8xf32>,
    %c0_220 = arith.constant 0 : index
    %c40_221 = arith.constant 40 : index
    %459 = vector.load %arg23[%c0_220, %c40_221] : memref<48x80xf32, #tpu.memory_space<vmem>>, vector<48x8xf32>
    tpu.vector_store %arg23[%c0_220, %c40_221], %453 {strides = array<i32>} : memref<48x80xf32, #tpu.memory_space<vmem>>, vector<48x8xf32>,
    %c0_222 = arith.constant 0 : index
    %c48 = arith.constant 48 : index
    %460 = vector.load %arg23[%c0_222, %c48] : memref<48x80xf32, #tpu.memory_space<vmem>>, vector<48x8xf32>
    tpu.vector_store %arg23[%c0_222, %c48], %456 {strides = array<i32>} : memref<48x80xf32, #tpu.memory_space<vmem>>, vector<48x8xf32>,
    %c0_223 = arith.constant 0 : index
    %c56 = arith.constant 56 : index
    %461 = vector.load %arg23[%c0_223, %c56] : memref<48x80xf32, #tpu.memory_space<vmem>>, vector<48x8xf32>
    tpu.vector_store %arg23[%c0_223, %c56], %430 {strides = array<i32>} : memref<48x80xf32, #tpu.memory_space<vmem>>, vector<48x8xf32>,
    %c0_224 = arith.constant 0 : index
    %c64 = arith.constant 64 : index
    %462 = vector.load %arg23[%c0_224, %c64] : memref<48x80xf32, #tpu.memory_space<vmem>>, vector<48x8xf32>
    tpu.vector_store %arg23[%c0_224, %c64], %431 {strides = array<i32>} : memref<48x80xf32, #tpu.memory_space<vmem>>, vector<48x8xf32>,
    %c0_225 = arith.constant 0 : index
    %c72 = arith.constant 72 : index
    %463 = vector.load %arg23[%c0_225, %c72] : memref<48x80xf32, #tpu.memory_space<vmem>>, vector<48x8xf32>
    tpu.vector_store %arg23[%c0_225, %c72], %432 {strides = array<i32>} : memref<48x80xf32, #tpu.memory_space<vmem>>, vector<48x8xf32>,
    return
  }
}

</mosaic_0001>

<llo_original>
// kernel: tpu_custom_call.1
$region0: #{tpu_custom_call.1}
  #allocation0 [shape = 'u32[]', space=smem, size = 0x4, offset = 0x4, fixed_abs, tag = 'smem constant byte address 0x4 - core index']
  #allocation1 [shape = 'u32[144,128]{1,0:T(1,128)}', space=vmem, size = 0x12000, scoped, tag = 'internal scratch']
  %s0 = inlined_call_operand.vmem [shape: f32[48,4], index: 0, kind: input, shape index: {}]
  %s1 = inlined_call_operand.vmem [shape: f32[48,16], index: 1, kind: input, shape index: {}]
  %s2 = inlined_call_operand.vmem [shape: f32[48,1], index: 2, kind: input, shape index: {}]
  %s3 = inlined_call_operand.vmem [shape: f32[48,8], index: 3, kind: input, shape index: {}]
  %s4 = inlined_call_operand.vmem [shape: f32[48,8], index: 4, kind: input, shape index: {}]
  %s5 = inlined_call_operand.vmem [shape: f32[8,8], index: 5, kind: input, shape index: {}]
  %s6 = inlined_call_operand.vmem [shape: f32[8,32], index: 6, kind: input, shape index: {}]
  %s7 = inlined_call_operand.vmem [shape: f32[8,32], index: 7, kind: input, shape index: {}]
  %s8 = inlined_call_operand.vmem [shape: f32[4,32], index: 8, kind: input, shape index: {}]
  %s9 = inlined_call_operand.vmem [shape: f32[1,32], index: 9, kind: input, shape index: {}]
  %s10 = inlined_call_operand.vmem [shape: f32[32,96], index: 10, kind: input, shape index: {}]
  %s11 = inlined_call_operand.vmem [shape: f32[1,96], index: 11, kind: input, shape index: {}]
  %s12 = inlined_call_operand.vmem [shape: f32[32,96], index: 12, kind: input, shape index: {}]
  %s13 = inlined_call_operand.vmem [shape: f32[1,32], index: 13, kind: input, shape index: {}]
  %s14 = inlined_call_operand.vmem [shape: f32[32,32], index: 14, kind: input, shape index: {}]
  %s15 = inlined_call_operand.vmem [shape: f32[1,32], index: 15, kind: input, shape index: {}]
  %s16 = inlined_call_operand.vmem [shape: f32[32,16], index: 16, kind: input, shape index: {}]
  %s17 = inlined_call_operand.vmem [shape: f32[1,16], index: 17, kind: input, shape index: {}]
  %s18 = inlined_call_operand.vmem [shape: f32[32,32], index: 18, kind: input, shape index: {}]
  %s19 = inlined_call_operand.vmem [shape: f32[16,32], index: 19, kind: input, shape index: {}]
  %s20 = inlined_call_operand.vmem [shape: f32[1,32], index: 20, kind: input, shape index: {}]
  %s21 = inlined_call_operand.vmem [shape: f32[32,16], index: 21, kind: input, shape index: {}]
  %s22 = inlined_call_operand.vmem [shape: f32[1,16], index: 22, kind: input, shape index: {}]
  %s23 = inlined_call_operand.hbm [shape: f32[48,80], index: 23, kind: output, shape index: {}]
  %s24 = sld [smem:[#allocation0]]
  $region102: #{tpu_custom_call.1} parent=0
    _
  %s26 = ssub.s32 1, %s24
  %s27 = scalar_select 0, %s26, %s24
  $region1: #{tpu_custom_call.1} parent=0
    #allocation2 [shape = 'u8[24576]{0}', space=vmem, size = 0x6000, scoped, tag = 'output window, operand 0, single buffered']
    #allocation3 [shape = 's32[1]{0}', space=sflag, size = 0x4, scoped, tag = 'scoped memory for tpu_custom_call.1']
    %28 = vsyncpa [#allocation3], 0
    // Predicated region
    $region2: #{tpu_custom_call.1} parent=1 // pred_check
      _
    $region3: #{tpu_custom_call.1} parent=1 // pred_check_branch
      %30 = sbr.rel (0) target = $region5
    $region4: #{tpu_custom_call.1} parent=1 // pred_region
      _
    $region5: #{tpu_custom_call.1} parent=1 // pred_fallthru
      _
    // Predicated region
    $region6: #{tpu_custom_call.1} parent=1 // pred_check
      _
    $region7: #{tpu_custom_call.1} parent=1 // pred_check_branch
      %32 = sbr.rel (0) target = $region9
    $region8: #{tpu_custom_call.1} parent=1 // pred_region
      _
    $region9: #{tpu_custom_call.1} parent=1 // pred_fallthru
      _
    // Predicated region
    $region10: #{tpu_custom_call.1} parent=1 // pred_check
      _
    $region11: #{tpu_custom_call.1} parent=1 // pred_check_branch
      %34 = sbr.rel (0) target = $region13
    $region12: #{tpu_custom_call.1} parent=1 // pred_region
      _
    $region13: #{tpu_custom_call.1} parent=1 // pred_fallthru
      _
    // Predicated region
    $region14: #{tpu_custom_call.1} parent=1 // pred_check
      _
    $region15: #{tpu_custom_call.1} parent=1 // pred_check_branch
      %36 = sbr.rel (0) target = $region17
    $region16: #{tpu_custom_call.1} parent=1 // pred_region
      _
    $region17: #{tpu_custom_call.1} parent=1 // pred_fallthru
      _
    // Predicated region
    $region18: #{tpu_custom_call.1} parent=1 // pred_check
      _
    $region19: #{tpu_custom_call.1} parent=1 // pred_check_branch
      %38 = sbr.rel (0) target = $region21
    $region20: #{tpu_custom_call.1} parent=1 // pred_region
      _
    $region21: #{tpu_custom_call.1} parent=1 // pred_fallthru
      _
    // Predicated region
    $region22: #{tpu_custom_call.1} parent=1 // pred_check
      _
    $region23: #{tpu_custom_call.1} parent=1 // pred_check_branch
      %40 = sbr.rel (0) target = $region25
    $region24: #{tpu_custom_call.1} parent=1 // pred_region
      _
    $region25: #{tpu_custom_call.1} parent=1 // pred_fallthru
      _
    // Predicated region
    $region26: #{tpu_custom_call.1} parent=1 // pred_check
      _
    $region27: #{tpu_custom_call.1} parent=1 // pred_check_branch
      %42 = sbr.rel (0) target = $region29
    $region28: #{tpu_custom_call.1} parent=1 // pred_region
      _
    $region29: #{tpu_custom_call.1} parent=1 // pred_fallthru
      _
    // Predicated region
    $region30: #{tpu_custom_call.1} parent=1 // pred_check
      _
    $region31: #{tpu_custom_call.1} parent=1 // pred_check_branch
      %44 = sbr.rel (0) target = $region33
    $region32: #{tpu_custom_call.1} parent=1 // pred_region
      _
    $region33: #{tpu_custom_call.1} parent=1 // pred_fallthru
      _
    // Predicated region
    $region34: #{tpu_custom_call.1} parent=1 // pred_check
      _
    $region35: #{tpu_custom_call.1} parent=1 // pred_check_branch
      %46 = sbr.rel (0) target = $region37
    $region36: #{tpu_custom_call.1} parent=1 // pred_region
      _
    $region37: #{tpu_custom_call.1} parent=1 // pred_fallthru
      _
    // Predicated region
    $region38: #{tpu_custom_call.1} parent=1 // pred_check
      _
    $region39: #{tpu_custom_call.1} parent=1 // pred_check_branch
      %48 = sbr.rel (0) target = $region41
    $region40: #{tpu_custom_call.1} parent=1 // pred_region
      _
    $region41: #{tpu_custom_call.1} parent=1 // pred_fallthru
      _
    // Predicated region
    $region42: #{tpu_custom_call.1} parent=1 // pred_check
      _
    $region43: #{tpu_custom_call.1} parent=1 // pred_check_branch
      %50 = sbr.rel (0) target = $region45
    $region44: #{tpu_custom_call.1} parent=1 // pred_region
      _
    $region45: #{tpu_custom_call.1} parent=1 // pred_fallthru
      _
    // Predicated region
    $region46: #{tpu_custom_call.1} parent=1 // pred_check
      _
    $region47: #{tpu_custom_call.1} parent=1 // pred_check_branch
      %52 = sbr.rel (0) target = $region49
    $region48: #{tpu_custom_call.1} parent=1 // pred_region
      _
    $region49: #{tpu_custom_call.1} parent=1 // pred_fallthru
      _
    // Predicated region
    $region50: #{tpu_custom_call.1} parent=1 // pred_check
      _
    $region51: #{tpu_custom_call.1} parent=1 // pred_check_branch
      %54 = sbr.rel (0) target = $region53
    $region52: #{tpu_custom_call.1} parent=1 // pred_region
      _
    $region53: #{tpu_custom_call.1} parent=1 // pred_fallthru
      _
    // Predicated region
    $region54: #{tpu_custom_call.1} parent=1 // pred_check
      _
    $region55: #{tpu_custom_call.1} parent=1 // pred_check_branch
      %56 = sbr.rel (0) target = $region57
    $region56: #{tpu_custom_call.1} parent=1 // pred_region
      _
    $region57: #{tpu_custom_call.1} parent=1 // pred_fallthru
      _
    // Predicated region
    $region58: #{tpu_custom_call.1} parent=1 // pred_check
      _
    $region59: #{tpu_custom_call.1} parent=1 // pred_check_branch
      %58 = sbr.rel (0) target = $region61
    $region60: #{tpu_custom_call.1} parent=1 // pred_region
      _
    $region61: #{tpu_custom_call.1} parent=1 // pred_fallthru
      _
    // Predicated region
    $region62: #{tpu_custom_call.1} parent=1 // pred_check
      _
    $region63: #{tpu_custom_call.1} parent=1 // pred_check_branch
      %60 = sbr.rel (0) target = $region65
    $region64: #{tpu_custom_call.1} parent=1 // pred_region
      _
    $region65: #{tpu_custom_call.1} parent=1 // pred_fallthru
      _
    // Predicated region
    $region66: #{tpu_custom_call.1} parent=1 // pred_check
      _
    $region67: #{tpu_custom_call.1} parent=1 // pred_check_branch
      %62 = sbr.rel (0) target = $region69
    $region68: #{tpu_custom_call.1} parent=1 // pred_region
      _
    $region69: #{tpu_custom_call.1} parent=1 // pred_fallthru
      _
    // Predicated region
    $region70: #{tpu_custom_call.1} parent=1 // pred_check
      _
    $region71: #{tpu_custom_call.1} parent=1 // pred_check_branch
      %64 = sbr.rel (0) target = $region73
    $region72: #{tpu_custom_call.1} parent=1 // pred_region
      _
    $region73: #{tpu_custom_call.1} parent=1 // pred_fallthru
      _
    // Predicated region
    $region74: #{tpu_custom_call.1} parent=1 // pred_check
      _
    $region75: #{tpu_custom_call.1} parent=1 // pred_check_branch
      %66 = sbr.rel (0) target = $region77
    $region76: #{tpu_custom_call.1} parent=1 // pred_region
      _
    $region77: #{tpu_custom_call.1} parent=1 // pred_fallthru
      _
    // Predicated region
    $region78: #{tpu_custom_call.1} parent=1 // pred_check
      _
    $region79: #{tpu_custom_call.1} parent=1 // pred_check_branch
      %68 = sbr.rel (0) target = $region81
    $region80: #{tpu_custom_call.1} parent=1 // pred_region
      _
    $region81: #{tpu_custom_call.1} parent=1 // pred_fallthru
      _
    // Predicated region
    $region82: #{tpu_custom_call.1} parent=1 // pred_check
      _
    $region83: #{tpu_custom_call.1} parent=1 // pred_check_branch
      %70 = sbr.rel (0) target = $region85
    $region84: #{tpu_custom_call.1} parent=1 // pred_region
      _
    $region85: #{tpu_custom_call.1} parent=1 // pred_fallthru
      _
    // Predicated region
    $region86: #{tpu_custom_call.1} parent=1 // pred_check
      _
    $region87: #{tpu_custom_call.1} parent=1 // pred_check_branch
      %72 = sbr.rel (0) target = $region89
    $region88: #{tpu_custom_call.1} parent=1 // pred_region
      _
    $region89: #{tpu_custom_call.1} parent=1 // pred_fallthru
      _
    // Predicated region
    $region90: #{tpu_custom_call.1} parent=1 // pred_check
      _
    $region91: #{tpu_custom_call.1} parent=1 // pred_check_branch
      %74 = sbr.rel (0) target = $region93
    $region92: #{tpu_custom_call.1} parent=1 // pred_region
      _
    $region93: #{tpu_custom_call.1} parent=1 // pred_fallthru
      _
    %v75 = vld [vmem:[%s0] sm:$0xff]
    %v76 = vld [vmem:[%s0 + $0x8] sm:$0xff]
    %v77 = vld [vmem:[%s0 + $0x10] sm:$0xff]
    %v78 = vld [vmem:[%s0 + $0x18] sm:$0xff]
    %v79 = vld [vmem:[%s0 + $0x20] sm:$0xff]
    %v80 = vld [vmem:[%s0 + $0x28] sm:$0xff]
    %v81 = vld [vmem:[%s8] sm:$0xf]
    %v82 = vld [vmem:[%s9] sm:$0x1]
    %v84 = vlaneseq
    %v85 = vshrl.u32 %v84, 7
    %v86 = vsub.s32 0, %v85
    %v87 = vrot.slane %v82, %v86
    %vm89 = vcmask 31744
    %v91 = vsel %vm89, %v75, 0
    %v94 = vsel %vm89, %v76, 0
    %v97 = vsel %vm89, %v77, 0
    %v100 = vsel %vm89, %v78, 0
    %v103 = vsel %vm89, %v79, 0
    %v106 = vsel %vm89, %v80, 0
    %vm108 = vcmask 1043456
    %v110 = vsel %vm108, %v81, 0
    %112 = vmatprep.subr.mxu0 0.0
    %113 = vmatpush1.msra.mxu0 %v110
    %114 = vmatprep.subr.mxu0 0.0
    %115 = vmatpush1.msra.mxu0 0.0
    %116 = vmatprep.subr.mxu0 0.0
    %117 = vmatpush1.msra.mxu0 0.0
    %118 = vmatprep.subr.mxu0 0.0
    %119 = vmatpush1.msra.mxu0 0.0
    %120 = vmatprep.subr.mxu0 0.0
    %121 = vmatpush1.msra.mxu0 0.0
    %122 = vmatprep.subr.mxu0 0.0
    %123 = vmatpush1.msra.mxu0 0.0
    %124 = vmatprep.subr.mxu0 0.0
    %125 = vmatpush1.msra.mxu0 0.0
    %126 = vmatprep.subr.mxu0 0.0
    %127 = vmatpush1.msra.mxu0 0.0
    %128 = vmatprep.subr.mxu0 0.0
    %129 = vmatpush1.msra.mxu0 0.0
    %130 = vmatprep.subr.mxu0 0.0
    %131 = vmatpush1.msra.mxu0 0.0
    %132 = vmatprep.subr.mxu0 0.0
    %133 = vmatpush1.msra.mxu0 0.0
    %134 = vmatprep.subr.mxu0 0.0
    %135 = vmatpush1.msra.mxu0 0.0
    %136 = vmatprep.subr.mxu0 0.0
    %137 = vmatpush1.msra.mxu0 0.0
    %138 = vmatprep.subr.mxu0 0.0
    %139 = vmatpush1.msra.mxu0 0.0
    %140 = vmatprep.subr.mxu0 0.0
    %141 = vmatpush1.msra.mxu0 0.0
    %142 = vmatprep.subr.mxu0 0.0
    %143 = vmatpush1.msra.mxu0 0.0
    %144 = vmatprep.subr.mxu0 0.0
    %145 = vmatpush1.msra.mxu0 0.0
    %146 = vmatprep.subr.mxu0 0.0
    %147 = vmatpush1.msra.mxu0 0.0
    %148 = vmatprep.subr.mxu0 0.0
    %149 = vmatpush1.msra.mxu0 0.0
    %150 = vmatprep.subr.mxu0 0.0
    %151 = vmatpush1.msra.mxu0 0.0
    %152 = vmatprep.subr.mxu0 0.0
    %153 = vmatpush1.msra.mxu0 0.0
    %154 = vmatprep.subr.mxu0 0.0
    %155 = vmatpush1.msra.mxu0 0.0
    %156 = vmatprep.subr.mxu0 0.0
    %157 = vmatpush1.msra.mxu0 0.0
    %158 = vmatprep.subr.mxu0 0.0
    %159 = vmatpush1.msra.mxu0 0.0
    %160 = vmatprep.subr.mxu0 0.0
    %161 = vmatpush1.msra.mxu0 0.0
    %162 = vmatprep.subr.mxu0 0.0
    %163 = vmatpush1.msra.mxu0 0.0
    %164 = vmatprep.subr.mxu0 0.0
    %165 = vmatpush1.msra.mxu0 0.0
    %166 = vmatprep.subr.mxu0 0.0
    %167 = vmatpush1.msra.mxu0 0.0
    %168 = vmatprep.subr.mxu0 0.0
    %169 = vmatpush1.msra.mxu0 0.0
    %170 = vmatprep.subr.mxu0 0.0
    %171 = vmatpush1.msra.mxu0 0.0
    %172 = vmatprep.subr.mxu0 0.0
    %173 = vmatpush1.msra.mxu0 0.0
    %174 = vmatprep.subr.mxu0 0.0
    %175 = vmatpush1.msra.mxu0 0.0
    %176 = vmatprep.mubr.f32.mxu0 0.0
    %177 = vmatmul.mubr.f32.gmra.mrb[0].mxu0 %v91
    %v178 = vpop.f32.mrb[0].mxu0
    %v179 = vadd.f32 %v87, %v178
    %v180 = vpop.f32.mrb[0].mxu0
    %181 = vmatprep.mubr.f32.mxu0 0.0
    %182 = vmatmul.mubr.f32.gmra.mrb[0].mxu0 %v94
    %v183 = vpop.f32.mrb[0].mxu0
    %v184 = vadd.f32 %v87, %v183
    %v185 = vpop.f32.mrb[0].mxu0
    %186 = vmatprep.mubr.f32.mxu0 0.0
    %187 = vmatmul.mubr.f32.gmra.mrb[0].mxu0 %v97
    %v188 = vpop.f32.mrb[0].mxu0
    %v189 = vadd.f32 %v87, %v188
    %v190 = vpop.f32.mrb[0].mxu0
    %191 = vmatprep.mubr.f32.mxu0 0.0
    %192 = vmatmul.mubr.f32.gmra.mrb[0].mxu0 %v100
    %v193 = vpop.f32.mrb[0].mxu0
    %v194 = vadd.f32 %v87, %v193
    %v195 = vpop.f32.mrb[0].mxu0
    %196 = vmatprep.mubr.f32.mxu0 0.0
    %197 = vmatmul.mubr.f32.gmra.mrb[0].mxu0 %v103
    %v198 = vpop.f32.mrb[0].mxu0
    %v199 = vadd.f32 %v87, %v198
    %v200 = vpop.f32.mrb[0].mxu0
    %201 = vmatprep.mubr.f32.mxu0 0.0
    %202 = vmatmul.mubr.f32.gmra.mrb[0].mxu0 %v106
    %v203 = vpop.f32.mrb[0].mxu0
    %v204 = vadd.f32 %v87, %v203
    %v205 = vpop.f32.mrb[0].mxu0
    %206 = vdwg.mxu0
    %v207 = vld [vmem:[%s1] sm:$0xff]
    %v208 = vld [vmem:[%s1 + $0x8] sm:$0xff]
    %v209 = vld [vmem:[%s1 + $0x10] sm:$0xff]
    %v210 = vld [vmem:[%s1 + $0x18] sm:$0xff]
    %v211 = vld [vmem:[%s1 + $0x20] sm:$0xff]
    %v212 = vld [vmem:[%s1 + $0x28] sm:$0xff]
    %v213 = vld [vmem:[%s19] sm:$0xff]
    %v214 = vld [vmem:[%s19 + $0x8] sm:$0xff]
    %v215 = vld [vmem:[%s20] sm:$0x1]
    %v217 = vlaneseq
    %v218 = vshrl.u32 %v217, 7
    %v219 = vsub.s32 0, %v218
    %v220 = vrot.slane %v215, %v219
    %vm222 = vcmask 130048
    %v224 = vsel %vm222, %v207, 0
    %v227 = vsel %vm222, %v208, 0
    %v230 = vsel %vm222, %v209, 0
    %v233 = vsel %vm222, %v210, 0
    %v236 = vsel %vm222, %v211, 0
    %v239 = vsel %vm222, %v212, 0
    %241 = vmatprep.subr.mxu0 0.0
    %242 = vmatpush1.msra.mxu0 %v213
    %243 = vmatprep.subr.mxu0 0.0
    %244 = vmatpush1.msra.mxu0 %v214
    %245 = vmatprep.subr.mxu0 0.0
    %246 = vmatpush1.msra.mxu0 0.0
    %247 = vmatprep.subr.mxu0 0.0
    %248 = vmatpush1.msra.mxu0 0.0
    %249 = vmatprep.subr.mxu0 0.0
    %250 = vmatpush1.msra.mxu0 0.0
    %251 = vmatprep.subr.mxu0 0.0
    %252 = vmatpush1.msra.mxu0 0.0
    %253 = vmatprep.subr.mxu0 0.0
    %254 = vmatpush1.msra.mxu0 0.0
    %255 = vmatprep.subr.mxu0 0.0
    %256 = vmatpush1.msra.mxu0 0.0
    %257 = vmatprep.subr.mxu0 0.0
    %258 = vmatpush1.msra.mxu0 0.0
    %259 = vmatprep.subr.mxu0 0.0
    %260 = vmatpush1.msra.mxu0 0.0
    %261 = vmatprep.subr.mxu0 0.0
    %262 = vmatpush1.msra.mxu0 0.0
    %263 = vmatprep.subr.mxu0 0.0
    %264 = vmatpush1.msra.mxu0 0.0
    %265 = vmatprep.subr.mxu0 0.0
    %266 = vmatpush1.msra.mxu0 0.0
    %267 = vmatprep.subr.mxu0 0.0
    %268 = vmatpush1.msra.mxu0 0.0
    %269 = vmatprep.subr.mxu0 0.0
    %270 = vmatpush1.msra.mxu0 0.0
    %271 = vmatprep.subr.mxu0 0.0
    %272 = vmatpush1.msra.mxu0 0.0
    %273 = vmatprep.subr.mxu0 0.0
    %274 = vmatpush1.msra.mxu0 0.0
    %275 = vmatprep.subr.mxu0 0.0
    %276 = vmatpush1.msra.mxu0 0.0
    %277 = vmatprep.subr.mxu0 0.0
    %278 = vmatpush1.msra.mxu0 0.0
    %279 = vmatprep.subr.mxu0 0.0
    %280 = vmatpush1.msra.mxu0 0.0
    %281 = vmatprep.subr.mxu0 0.0
    %282 = vmatpush1.msra.mxu0 0.0
    %283 = vmatprep.subr.mxu0 0.0
    %284 = vmatpush1.msra.mxu0 0.0
    %285 = vmatprep.subr.mxu0 0.0
    %286 = vmatpush1.msra.mxu0 0.0
    %287 = vmatprep.subr.mxu0 0.0
    %288 = vmatpush1.msra.mxu0 0.0
    %289 = vmatprep.subr.mxu0 0.0
    %290 = vmatpush1.msra.mxu0 0.0
    %291 = vmatprep.subr.mxu0 0.0
    %292 = vmatpush1.msra.mxu0 0.0
    %293 = vmatprep.subr.mxu0 0.0
    %294 = vmatpush1.msra.mxu0 0.0
    %295 = vmatprep.subr.mxu0 0.0
    %296 = vmatpush1.msra.mxu0 0.0
    %297 = vmatprep.subr.mxu0 0.0
    %298 = vmatpush1.msra.mxu0 0.0
    %299 = vmatprep.subr.mxu0 0.0
    %300 = vmatpush1.msra.mxu0 0.0
    %301 = vmatprep.subr.mxu0 0.0
    %302 = vmatpush1.msra.mxu0 0.0
    %303 = vmatprep.subr.mxu0 0.0
    %304 = vmatpush1.msra.mxu0 0.0
    %305 = vmatprep.mubr.f32.mxu0 0.0
    %306 = vmatmul.mubr.f32.gmra.mrb[0].mxu0 %v224
    %v307 = vpop.f32.mrb[0].mxu0
    %v308 = vadd.f32 %v220, %v307
    %v309 = vpop.f32.mrb[0].mxu0
    %310 = vmatprep.mubr.f32.mxu0 0.0
    %311 = vmatmul.mubr.f32.gmra.mrb[0].mxu0 %v227
    %v312 = vpop.f32.mrb[0].mxu0
    %v313 = vadd.f32 %v220, %v312
    %v314 = vpop.f32.mrb[0].mxu0
    %315 = vmatprep.mubr.f32.mxu0 0.0
    %316 = vmatmul.mubr.f32.gmra.mrb[0].mxu0 %v230
    %v317 = vpop.f32.mrb[0].mxu0
    %v318 = vadd.f32 %v220, %v317
    %v319 = vpop.f32.mrb[0].mxu0
    %320 = vmatprep.mubr.f32.mxu0 0.0
    %321 = vmatmul.mubr.f32.gmra.mrb[0].mxu0 %v233
    %v322 = vpop.f32.mrb[0].mxu0
    %v323 = vadd.f32 %v220, %v322
    %v324 = vpop.f32.mrb[0].mxu0
    %325 = vmatprep.mubr.f32.mxu0 0.0
    %326 = vmatmul.mubr.f32.gmra.mrb[0].mxu0 %v236
    %v327 = vpop.f32.mrb[0].mxu0
    %v328 = vadd.f32 %v220, %v327
    %v329 = vpop.f32.mrb[0].mxu0
    %330 = vmatprep.mubr.f32.mxu0 0.0
    %331 = vmatmul.mubr.f32.gmra.mrb[0].mxu0 %v239
    %v332 = vpop.f32.mrb[0].mxu0
    %v333 = vadd.f32 %v220, %v332
    %v334 = vpop.f32.mrb[0].mxu0
    %335 = vdwg.mxu0
    %v336 = vld [vmem:[%s5] sm:$0xff]
    %v337 = vld [vmem:[%s6] sm:$0xff]
    %v338 = vld [vmem:[%s7] sm:$0xff]
    %vm339 = vcmask 64512
    %v341 = vsel %vm339, %v336, 0
    %343 = vmatprep.subr.mxu0 0.0
    %344 = vmatpush1.msra.mxu0 %v338
    %345 = vmatprep.subr.mxu0 0.0
    %346 = vmatpush1.msra.mxu0 0.0
    %347 = vmatprep.subr.mxu0 0.0
    %348 = vmatpush1.msra.mxu0 0.0
    %349 = vmatprep.subr.mxu0 0.0
    %350 = vmatpush1.msra.mxu0 0.0
    %351 = vmatprep.subr.mxu0 0.0
    %352 = vmatpush1.msra.mxu0 0.0
    %353 = vmatprep.subr.mxu0 0.0
    %354 = vmatpush1.msra.mxu0 0.0
    %355 = vmatprep.subr.mxu0 0.0
    %356 = vmatpush1.msra.mxu0 0.0
    %357 = vmatprep.subr.mxu0 0.0
    %358 = vmatpush1.msra.mxu0 0.0
    %359 = vmatprep.subr.mxu0 0.0
    %360 = vmatpush1.msra.mxu0 0.0
    %361 = vmatprep.subr.mxu0 0.0
    %362 = vmatpush1.msra.mxu0 0.0
    %363 = vmatprep.subr.mxu0 0.0
    %364 = vmatpush1.msra.mxu0 0.0
    %365 = vmatprep.subr.mxu0 0.0
    %366 = vmatpush1.msra.mxu0 0.0
    %367 = vmatprep.subr.mxu0 0.0
    %368 = vmatpush1.msra.mxu0 0.0
    %369 = vmatprep.subr.mxu0 0.0
    %370 = vmatpush1.msra.mxu0 0.0
    %371 = vmatprep.subr.mxu0 0.0
    %372 = vmatpush1.msra.mxu0 0.0
    %373 = vmatprep.subr.mxu0 0.0
    %374 = vmatpush1.msra.mxu0 0.0
    %375 = vmatprep.subr.mxu0 0.0
    %376 = vmatpush1.msra.mxu0 0.0
    %377 = vmatprep.subr.mxu0 0.0
    %378 = vmatpush1.msra.mxu0 0.0
    %379 = vmatprep.subr.mxu0 0.0
    %380 = vmatpush1.msra.mxu0 0.0
    %381 = vmatprep.subr.mxu0 0.0
    %382 = vmatpush1.msra.mxu0 0.0
    %383 = vmatprep.subr.mxu0 0.0
    %384 = vmatpush1.msra.mxu0 0.0
    %385 = vmatprep.subr.mxu0 0.0
    %386 = vmatpush1.msra.mxu0 0.0
    %387 = vmatprep.subr.mxu0 0.0
    %388 = vmatpush1.msra.mxu0 0.0
    %389 = vmatprep.subr.mxu0 0.0
    %390 = vmatpush1.msra.mxu0 0.0
    %391 = vmatprep.subr.mxu0 0.0
    %392 = vmatpush1.msra.mxu0 0.0
    %393 = vmatprep.subr.mxu0 0.0
    %394 = vmatpush1.msra.mxu0 0.0
    %395 = vmatprep.subr.mxu0 0.0
    %396 = vmatpush1.msra.mxu0 0.0
    %397 = vmatprep.subr.mxu0 0.0
    %398 = vmatpush1.msra.mxu0 0.0
    %399 = vmatprep.subr.mxu0 0.0
    %400 = vmatpush1.msra.mxu0 0.0
    %401 = vmatprep.subr.mxu0 0.0
    %402 = vmatpush1.msra.mxu0 0.0
    %403 = vmatprep.subr.mxu0 0.0
    %404 = vmatpush1.msra.mxu0 0.0
    %405 = vmatprep.subr.mxu0 0.0
    %406 = vmatpush1.msra.mxu0 0.0
    %407 = vmatprep.mubr.f32.mxu0 0.0
    %408 = vmatmul.mubr.f32.gmra.mrb[0].mxu0 %v341
    %v409 = vpop.f32.mrb[0].mxu0
    %v410 = vadd.f32 %v179, %v409
    %v411 = vpop.f32.mrb[0].mxu0
    %412 = vdwg.mxu0
    %v413 = vmax.f32 %v410, 0.0
    %v414 = vld [vmem:[%s10] sm:$0xff]
    %v415 = vld [vmem:[%s10 + $0x8] sm:$0xff]
    %v416 = vld [vmem:[%s10 + $0x10] sm:$0xff]
    %v417 = vld [vmem:[%s10 + $0x18] sm:$0xff]
    %v418 = vld [vmem:[%s11] sm:$0x1]
    %v420 = vlaneseq
    %v421 = vshrl.u32 %v420, 7
    %v422 = vsub.s32 0, %v421
    %v423 = vrot.slane %v418, %v422
    %vm425 = vcmask 261120
    %v427 = vsel %vm425, %v413, 0
    %429 = vmatprep.subr.mxu0 0.0
    %430 = vmatpush1.msra.mxu0 %v414
    %431 = vmatprep.subr.mxu0 0.0
    %432 = vmatpush1.msra.mxu0 %v415
    %433 = vmatprep.subr.mxu0 0.0
    %434 = vmatpush1.msra.mxu0 %v416
    %435 = vmatprep.subr.mxu0 0.0
    %436 = vmatpush1.msra.mxu0 %v417
    %437 = vmatprep.subr.mxu0 0.0
    %438 = vmatpush1.msra.mxu0 0.0
    %439 = vmatprep.subr.mxu0 0.0
    %440 = vmatpush1.msra.mxu0 0.0
    %441 = vmatprep.subr.mxu0 0.0
    %442 = vmatpush1.msra.mxu0 0.0
    %443 = vmatprep.subr.mxu0 0.0
    %444 = vmatpush1.msra.mxu0 0.0
    %445 = vmatprep.subr.mxu0 0.0
    %446 = vmatpush1.msra.mxu0 0.0
    %447 = vmatprep.subr.mxu0 0.0
    %448 = vmatpush1.msra.mxu0 0.0
    %449 = vmatprep.subr.mxu0 0.0
    %450 = vmatpush1.msra.mxu0 0.0
    %451 = vmatprep.subr.mxu0 0.0
    %452 = vmatpush1.msra.mxu0 0.0
    %453 = vmatprep.subr.mxu0 0.0
    %454 = vmatpush1.msra.mxu0 0.0
    %455 = vmatprep.subr.mxu0 0.0
    %456 = vmatpush1.msra.mxu0 0.0
    %457 = vmatprep.subr.mxu0 0.0
    %458 = vmatpush1.msra.mxu0 0.0
    %459 = vmatprep.subr.mxu0 0.0
    %460 = vmatpush1.msra.mxu0 0.0
    %461 = vmatprep.subr.mxu0 0.0
    %462 = vmatpush1.msra.mxu0 0.0
    %463 = vmatprep.subr.mxu0 0.0
    %464 = vmatpush1.msra.mxu0 0.0
    %465 = vmatprep.subr.mxu0 0.0
    %466 = vmatpush1.msra.mxu0 0.0
    %467 = vmatprep.subr.mxu0 0.0
    %468 = vmatpush1.msra.mxu0 0.0
    %469 = vmatprep.subr.mxu0 0.0
    %470 = vmatpush1.msra.mxu0 0.0
    %471 = vmatprep.subr.mxu0 0.0
    %472 = vmatpush1.msra.mxu0 0.0
    %473 = vmatprep.subr.mxu0 0.0
    %474 = vmatpush1.msra.mxu0 0.0
    %475 = vmatprep.subr.mxu0 0.0
    %476 = vmatpush1.msra.mxu0 0.0
    %477 = vmatprep.subr.mxu0 0.0
    %478 = vmatpush1.msra.mxu0 0.0
    %479 = vmatprep.subr.mxu0 0.0
    %480 = vmatpush1.msra.mxu0 0.0
    %481 = vmatprep.subr.mxu0 0.0
    %482 = vmatpush1.msra.mxu0 0.0
    %483 = vmatprep.subr.mxu0 0.0
    %484 = vmatpush1.msra.mxu0 0.0
    %485 = vmatprep.subr.mxu0 0.0
    %486 = vmatpush1.msra.mxu0 0.0
    %487 = vmatprep.subr.mxu0 0.0
    %488 = vmatpush1.msra.mxu0 0.0
    %489 = vmatprep.subr.mxu0 0.0
    %490 = vmatpush1.msra.mxu0 0.0
    %491 = vmatprep.subr.mxu0 0.0
    %492 = vmatpush1.msra.mxu0 0.0
    %493 = vmatprep.mubr.f32.mxu0 0.0
    %494 = vmatmul.mubr.f32.gmra.mrb[0].mxu0 %v427
    %v495 = vpop.f32.mrb[0].mxu0
    %v496 = vadd.f32 %v423, %v495
    %v497 = vpop.f32.mrb[0].mxu0
    %498 = vdwg.mxu0
    %v499 = vld [vmem:[%s12] sm:$0xff]
    %v500 = vld [vmem:[%s12 + $0x8] sm:$0xff]
    %v501 = vld [vmem:[%s12 + $0x10] sm:$0xff]
    %v502 = vld [vmem:[%s12 + $0x18] sm:$0xff]
    %v504 = vsel %vm425, %v337, 0
    %506 = vmatprep.subr.mxu0 0.0
    %507 = vmatpush1.msra.mxu0 %v499
    %508 = vmatprep.subr.mxu0 0.0
    %509 = vmatpush1.msra.mxu0 %v500
    %510 = vmatprep.subr.mxu0 0.0
    %511 = vmatpush1.msra.mxu0 %v501
    %512 = vmatprep.subr.mxu0 0.0
    %513 = vmatpush1.msra.mxu0 %v502
    %514 = vmatprep.subr.mxu0 0.0
    %515 = vmatpush1.msra.mxu0 0.0
    %516 = vmatprep.subr.mxu0 0.0
    %517 = vmatpush1.msra.mxu0 0.0
    %518 = vmatprep.subr.mxu0 0.0
    %519 = vmatpush1.msra.mxu0 0.0
    %520 = vmatprep.subr.mxu0 0.0
    %521 = vmatpush1.msra.mxu0 0.0
    %522 = vmatprep.subr.mxu0 0.0
    %523 = vmatpush1.msra.mxu0 0.0
    %524 = vmatprep.subr.mxu0 0.0
    %525 = vmatpush1.msra.mxu0 0.0
    %526 = vmatprep.subr.mxu0 0.0
    %527 = vmatpush1.msra.mxu0 0.0
    %528 = vmatprep.subr.mxu0 0.0
    %529 = vmatpush1.msra.mxu0 0.0
    %530 = vmatprep.subr.mxu0 0.0
    %531 = vmatpush1.msra.mxu0 0.0
    %532 = vmatprep.subr.mxu0 0.0
    %533 = vmatpush1.msra.mxu0 0.0
    %534 = vmatprep.subr.mxu0 0.0
    %535 = vmatpush1.msra.mxu0 0.0
    %536 = vmatprep.subr.mxu0 0.0
    %537 = vmatpush1.msra.mxu0 0.0
    %538 = vmatprep.subr.mxu0 0.0
    %539 = vmatpush1.msra.mxu0 0.0
    %540 = vmatprep.subr.mxu0 0.0
    %541 = vmatpush1.msra.mxu0 0.0
    %542 = vmatprep.subr.mxu0 0.0
    %543 = vmatpush1.msra.mxu0 0.0
    %544 = vmatprep.subr.mxu0 0.0
    %545 = vmatpush1.msra.mxu0 0.0
    %546 = vmatprep.subr.mxu0 0.0
    %547 = vmatpush1.msra.mxu0 0.0
    %548 = vmatprep.subr.mxu0 0.0
    %549 = vmatpush1.msra.mxu0 0.0
    %550 = vmatprep.subr.mxu0 0.0
    %551 = vmatpush1.msra.mxu0 0.0
    %552 = vmatprep.subr.mxu0 0.0
    %553 = vmatpush1.msra.mxu0 0.0
    %554 = vmatprep.subr.mxu0 0.0
    %555 = vmatpush1.msra.mxu0 0.0
    %556 = vmatprep.subr.mxu0 0.0
    %557 = vmatpush1.msra.mxu0 0.0
    %558 = vmatprep.subr.mxu0 0.0
    %559 = vmatpush1.msra.mxu0 0.0
    %560 = vmatprep.subr.mxu0 0.0
    %561 = vmatpush1.msra.mxu0 0.0
    %562 = vmatprep.subr.mxu0 0.0
    %563 = vmatpush1.msra.mxu0 0.0
    %564 = vmatprep.subr.mxu0 0.0
    %565 = vmatpush1.msra.mxu0 0.0
    %566 = vmatprep.subr.mxu0 0.0
    %567 = vmatpush1.msra.mxu0 0.0
    %568 = vmatprep.subr.mxu0 0.0
    %569 = vmatpush1.msra.mxu0 0.0
    %570 = vmatprep.mubr.f32.mxu0 0.0
    %571 = vmatmul.mubr.f32.gmra.mrb[0].mxu0 %v504
    %v572 = vpop.f32.mrb[0].mxu0
    %v573 = vadd.f32 0.0, %v572
    %v574 = vpop.f32.mrb[0].mxu0
    %575 = vdwg.mxu0
    %v576 = vadd.f32 %v496, %v573
    %v577 = vxor.u32 %v576, 2147483648
    %v578 = vmul.f32 %v577, 1.442695
    %v579 = vpow.pop %v578
    %v580 = vadd.f32 %v579, 1.0
    %v581 = vrcp.pop %v580
    %v582 = vmul.f32 1.0, %v581
    %v583 = vld [vmem:[%s13] sm:$0x1]
    %v585 = vlaneseq
    %v586 = vshrl.u32 %v585, 7
    %v587 = vsub.s32 0, %v586
    %v588 = vrot.slane %v583, %v587
    %589 = vrot.lane.b32.xlu0 %v588, 64
    %v590 = vpop.permute.xlu0 %589
    %v592 = vadd.f32 %v573, %v590
    %594 = vrot.lane.b32.xlu0 %v592, 64
    %v595 = vpop.permute.xlu0 %594
    %v597 = vmul.f32 %v582, %v595
    %599 = vrot.lane.b32.xlu0 %v597, 64
    %v600 = vpop.permute.xlu0 %599
    %v602 = vadd.f32 %v496, %v600
    %v603 = vtanh.pop %v602
    %v604 = vsub.f32 1.0, %v582
    %606 = vrot.lane.b32.xlu0 %v603, 96
    %v607 = vpop.permute.xlu0 %606
    %v609 = vmul.f32 %v604, %v607
    %610 = vrot.lane.b32.xlu0 %v337, 32
    %v611 = vpop.permute.xlu0 %610
    %v613 = vmul.f32 %v582, %v611
    %v614 = vadd.f32 %v609, %v613
    %v615 = vld [vmem:[%s18] sm:$0xff]
    %v616 = vld [vmem:[%s18 + $0x8] sm:$0xff]
    %v617 = vld [vmem:[%s18 + $0x10] sm:$0xff]
    %v618 = vld [vmem:[%s18 + $0x18] sm:$0xff]
    %620 = vrot.lane.b32.xlu0 %v614, 96
    %v621 = vpop.permute.xlu0 %620
    %v622 = vsel %vm425, %v621, 0
    %624 = vmatprep.subr.mxu0 0.0
    %625 = vmatpush1.msra.mxu0 %v615
    %626 = vmatprep.subr.mxu0 0.0
    %627 = vmatpush1.msra.mxu0 %v616
    %628 = vmatprep.subr.mxu0 0.0
    %629 = vmatpush1.msra.mxu0 %v617
    %630 = vmatprep.subr.mxu0 0.0
    %631 = vmatpush1.msra.mxu0 %v618
    %632 = vmatprep.subr.mxu0 0.0
    %633 = vmatpush1.msra.mxu0 0.0
    %634 = vmatprep.subr.mxu0 0.0
    %635 = vmatpush1.msra.mxu0 0.0
    %636 = vmatprep.subr.mxu0 0.0
    %637 = vmatpush1.msra.mxu0 0.0
    %638 = vmatprep.subr.mxu0 0.0
    %639 = vmatpush1.msra.mxu0 0.0
    %640 = vmatprep.subr.mxu0 0.0
    %641 = vmatpush1.msra.mxu0 0.0
    %642 = vmatprep.subr.mxu0 0.0
    %643 = vmatpush1.msra.mxu0 0.0
    %644 = vmatprep.subr.mxu0 0.0
    %645 = vmatpush1.msra.mxu0 0.0
    %646 = vmatprep.subr.mxu0 0.0
    %647 = vmatpush1.msra.mxu0 0.0
    %648 = vmatprep.subr.mxu0 0.0
    %649 = vmatpush1.msra.mxu0 0.0
    %650 = vmatprep.subr.mxu0 0.0
    %651 = vmatpush1.msra.mxu0 0.0
    %652 = vmatprep.subr.mxu0 0.0
    %653 = vmatpush1.msra.mxu0 0.0
    %654 = vmatprep.subr.mxu0 0.0
    %655 = vmatpush1.msra.mxu0 0.0
    %656 = vmatprep.subr.mxu0 0.0
    %657 = vmatpush1.msra.mxu0 0.0
    %658 = vmatprep.subr.mxu0 0.0
    %659 = vmatpush1.msra.mxu0 0.0
    %660 = vmatprep.subr.mxu0 0.0
    %661 = vmatpush1.msra.mxu0 0.0
    %662 = vmatprep.subr.mxu0 0.0
    %663 = vmatpush1.msra.mxu0 0.0
    %664 = vmatprep.subr.mxu0 0.0
    %665 = vmatpush1.msra.mxu0 0.0
    %666 = vmatprep.subr.mxu0 0.0
    %667 = vmatpush1.msra.mxu0 0.0
    %668 = vmatprep.subr.mxu0 0.0
    %669 = vmatpush1.msra.mxu0 0.0
    %670 = vmatprep.subr.mxu0 0.0
    %671 = vmatpush1.msra.mxu0 0.0
    %672 = vmatprep.subr.mxu0 0.0
    %673 = vmatpush1.msra.mxu0 0.0
    %674 = vmatprep.subr.mxu0 0.0
    %675 = vmatpush1.msra.mxu0 0.0
    %676 = vmatprep.subr.mxu0 0.0
    %677 = vmatpush1.msra.mxu0 0.0
    %678 = vmatprep.subr.mxu0 0.0
    %679 = vmatpush1.msra.mxu0 0.0
    %680 = vmatprep.subr.mxu0 0.0
    %681 = vmatpush1.msra.mxu0 0.0
    %682 = vmatprep.subr.mxu0 0.0
    %683 = vmatpush1.msra.mxu0 0.0
    %684 = vmatprep.subr.mxu0 0.0
    %685 = vmatpush1.msra.mxu0 0.0
    %686 = vmatprep.subr.mxu0 0.0
    %687 = vmatpush1.msra.mxu0 0.0
    %688 = vmatprep.mubr.f32.mxu0 0.0
    %689 = vmatmul.mubr.f32.gmra.mrb[0].mxu0 %v622
    %v690 = vpop.f32.mrb[0].mxu0
    %v691 = vadd.f32 %v308, %v690
    %v692 = vpop.f32.mrb[0].mxu0
    %693 = vdwg.mxu0
    %v694 = vmax.f32 %v691, 0.0
    %v695 = vld [vmem:[%s21] sm:$0xff]
    %v696 = vld [vmem:[%s21 + $0x8] sm:$0xff]
    %v697 = vld [vmem:[%s21 + $0x10] sm:$0xff]
    %v698 = vld [vmem:[%s21 + $0x18] sm:$0xff]
    %v699 = vld [vmem:[%s22] sm:$0x1]
    %v701 = vlaneseq
    %v702 = vshrl.u32 %v701, 7
    %v703 = vsub.s32 0, %v702
    %v704 = vrot.slane %v699, %v703
    %v707 = vsel %vm425, %v694, 0
    %709 = vmatprep.subr.mxu0 0.0
    %710 = vmatpush1.msra.mxu0 %v695
    %711 = vmatprep.subr.mxu0 0.0
    %712 = vmatpush1.msra.mxu0 %v696
    %713 = vmatprep.subr.mxu0 0.0
    %714 = vmatpush1.msra.mxu0 %v697
    %715 = vmatprep.subr.mxu0 0.0
    %716 = vmatpush1.msra.mxu0 %v698
    %717 = vmatprep.subr.mxu0 0.0
    %718 = vmatpush1.msra.mxu0 0.0
    %719 = vmatprep.subr.mxu0 0.0
    %720 = vmatpush1.msra.mxu0 0.0
    %721 = vmatprep.subr.mxu0 0.0
    %722 = vmatpush1.msra.mxu0 0.0
    %723 = vmatprep.subr.mxu0 0.0
    %724 = vmatpush1.msra.mxu0 0.0
    %725 = vmatprep.subr.mxu0 0.0
    %726 = vmatpush1.msra.mxu0 0.0
    %727 = vmatprep.subr.mxu0 0.0
    %728 = vmatpush1.msra.mxu0 0.0
    %729 = vmatprep.subr.mxu0 0.0
    %730 = vmatpush1.msra.mxu0 0.0
    %731 = vmatprep.subr.mxu0 0.0
    %732 = vmatpush1.msra.mxu0 0.0
    %733 = vmatprep.subr.mxu0 0.0
    %734 = vmatpush1.msra.mxu0 0.0
    %735 = vmatprep.subr.mxu0 0.0
    %736 = vmatpush1.msra.mxu0 0.0
    %737 = vmatprep.subr.mxu0 0.0
    %738 = vmatpush1.msra.mxu0 0.0
    %739 = vmatprep.subr.mxu0 0.0
    %740 = vmatpush1.msra.mxu0 0.0
    %741 = vmatprep.subr.mxu0 0.0
    %742 = vmatpush1.msra.mxu0 0.0
    %743 = vmatprep.subr.mxu0 0.0
    %744 = vmatpush1.msra.mxu0 0.0
    %745 = vmatprep.subr.mxu0 0.0
    %746 = vmatpush1.msra.mxu0 0.0
    %747 = vmatprep.subr.mxu0 0.0
    %748 = vmatpush1.msra.mxu0 0.0
    %749 = vmatprep.subr.mxu0 0.0
    %750 = vmatpush1.msra.mxu0 0.0
    %751 = vmatprep.subr.mxu0 0.0
    %752 = vmatpush1.msra.mxu0 0.0
    %753 = vmatprep.subr.mxu0 0.0
    %754 = vmatpush1.msra.mxu0 0.0
    %755 = vmatprep.subr.mxu0 0.0
    %756 = vmatpush1.msra.mxu0 0.0
    %757 = vmatprep.subr.mxu0 0.0
    %758 = vmatpush1.msra.mxu0 0.0
    %759 = vmatprep.subr.mxu0 0.0
    %760 = vmatpush1.msra.mxu0 0.0
    %761 = vmatprep.subr.mxu0 0.0
    %762 = vmatpush1.msra.mxu0 0.0
    %763 = vmatprep.subr.mxu0 0.0
    %764 = vmatpush1.msra.mxu0 0.0
    %765 = vmatprep.subr.mxu0 0.0
    %766 = vmatpush1.msra.mxu0 0.0
    %767 = vmatprep.subr.mxu0 0.0
    %768 = vmatpush1.msra.mxu0 0.0
    %769 = vmatprep.subr.mxu0 0.0
    %770 = vmatpush1.msra.mxu0 0.0
    %771 = vmatprep.subr.mxu0 0.0
    %772 = vmatpush1.msra.mxu0 0.0
    %773 = vmatprep.mubr.f32.mxu0 0.0
    %774 = vmatmul.mubr.f32.gmra.mrb[0].mxu0 %v707
    %v775 = vpop.f32.mrb[0].mxu0
    %v776 = vadd.f32 %v704, %v775
    %v777 = vpop.f32.mrb[0].mxu0
    %778 = vdwg.mxu0
    %vm779 = vcmp.gt.f32.partialorder %v776, 20.0
    %v780 = vmul.f32 %v776, 1.442695
    %v781 = vpow.pop %v780
    %v782 = vadd.f32 %v781, 1.0
    %v783 = vlog2.pop %v782
    %v784 = vmul.f32 %v783, 0.6931472
    %v785 = vmul.f32 -0.5, %v781
    %v786 = vadd.f32 %v785, 1.0
    %v787 = vmul.f32 %v786, %v781
    %v788 = vand.u32 2147483647, %v781
    %vm789 = vcmp.lt.f32.partialorder %v788, 0.0004427343
    %v790 = vsel %vm789, %v787, %v784
    %v791 = vsel %vm779, %v776, %v790
    %v792 = vadd.f32 %v791, 0.1
    %v793 = vld [vmem:[%s4] sm:$0xff]
    %795 = vrot.lane.b32.xlu0 %v793, 8
    %v796 = vpop.permute.xlu0 %795
    %v798 = vmul.f32 %v792, %v796
    %800 = vrot.lane.b32.xlu0 %v798, 120
    %v801 = vpop.permute.xlu0 %800
    %v803 = vadd.f32 %v776, %v801
    %v804 = vld [vmem:[%s2] sm:$0xff]
    %806 = vset.pattern.permute.xlu0 0
    %807 = vperm.xlu0 %806, %v804
    %v808 = vpop.permute.xlu0 %807
    %v810 = vmul.f32 %v803, %v808
    %v811 = vmul.f32 %v614, %v808
    %v813 = vsel %vm339, %v810, 0
    %815 = vmatprep.subr.mxu0 0.0
    %816 = vmatpush1.msra.mxu0 %v338
    %817 = vmatprep.subr.mxu0 0.0
    %818 = vmatpush1.msra.mxu0 0.0
    %819 = vmatprep.subr.mxu0 0.0
    %820 = vmatpush1.msra.mxu0 0.0
    %821 = vmatprep.subr.mxu0 0.0
    %822 = vmatpush1.msra.mxu0 0.0
    %823 = vmatprep.subr.mxu0 0.0
    %824 = vmatpush1.msra.mxu0 0.0
    %825 = vmatprep.subr.mxu0 0.0
    %826 = vmatpush1.msra.mxu0 0.0
    %827 = vmatprep.subr.mxu0 0.0
    %828 = vmatpush1.msra.mxu0 0.0
    %829 = vmatprep.subr.mxu0 0.0
    %830 = vmatpush1.msra.mxu0 0.0
    %831 = vmatprep.subr.mxu0 0.0
    %832 = vmatpush1.msra.mxu0 0.0
    %833 = vmatprep.subr.mxu0 0.0
    %834 = vmatpush1.msra.mxu0 0.0
    %835 = vmatprep.subr.mxu0 0.0
    %836 = vmatpush1.msra.mxu0 0.0
    %837 = vmatprep.subr.mxu0 0.0
    %838 = vmatpush1.msra.mxu0 0.0
    %839 = vmatprep.subr.mxu0 0.0
    %840 = vmatpush1.msra.mxu0 0.0
    %841 = vmatprep.subr.mxu0 0.0
    %842 = vmatpush1.msra.mxu0 0.0
    %843 = vmatprep.subr.mxu0 0.0
    %844 = vmatpush1.msra.mxu0 0.0
    %845 = vmatprep.subr.mxu0 0.0
    %846 = vmatpush1.msra.mxu0 0.0
    %847 = vmatprep.subr.mxu0 0.0
    %848 = vmatpush1.msra.mxu0 0.0
    %849 = vmatprep.subr.mxu0 0.0
    %850 = vmatpush1.msra.mxu0 0.0
    %851 = vmatprep.subr.mxu0 0.0
    %852 = vmatpush1.msra.mxu0 0.0
    %853 = vmatprep.subr.mxu0 0.0
    %854 = vmatpush1.msra.mxu0 0.0
    %855 = vmatprep.subr.mxu0 0.0
    %856 = vmatpush1.msra.mxu0 0.0
    %857 = vmatprep.subr.mxu0 0.0
    %858 = vmatpush1.msra.mxu0 0.0
    %859 = vmatprep.subr.mxu0 0.0
    %860 = vmatpush1.msra.mxu0 0.0
    %861 = vmatprep.subr.mxu0 0.0
    %862 = vmatpush1.msra.mxu0 0.0
    %863 = vmatprep.subr.mxu0 0.0
    %864 = vmatpush1.msra.mxu0 0.0
    %865 = vmatprep.subr.mxu0 0.0
    %866 = vmatpush1.msra.mxu0 0.0
    %867 = vmatprep.subr.mxu0 0.0
    %868 = vmatpush1.msra.mxu0 0.0
    %869 = vmatprep.subr.mxu0 0.0
    %870 = vmatpush1.msra.mxu0 0.0
    %871 = vmatprep.subr.mxu0 0.0
    %872 = vmatpush1.msra.mxu0 0.0
    %873 = vmatprep.subr.mxu0 0.0
    %874 = vmatpush1.msra.mxu0 0.0
    %875 = vmatprep.subr.mxu0 0.0
    %876 = vmatpush1.msra.mxu0 0.0
    %877 = vmatprep.subr.mxu0 0.0
    %878 = vmatpush1.msra.mxu0 0.0
    %879 = vmatprep.mubr.f32.mxu0 0.0
    %880 = vmatmul.mubr.f32.gmra.mrb[0].mxu0 %v813
    %v881 = vpop.f32.mrb[0].mxu0
    %v882 = vadd.f32 %v184, %v881
    %v883 = vpop.f32.mrb[0].mxu0
    %884 = vdwg.mxu0
    %v885 = vmax.f32 %v882, 0.0
    %v887 = vsel %vm425, %v885, 0
    %889 = vmatprep.subr.mxu0 0.0
    %890 = vmatpush1.msra.mxu0 %v414
    %891 = vmatprep.subr.mxu0 0.0
    %892 = vmatpush1.msra.mxu0 %v415
    %893 = vmatprep.subr.mxu0 0.0
    %894 = vmatpush1.msra.mxu0 %v416
    %895 = vmatprep.subr.mxu0 0.0
    %896 = vmatpush1.msra.mxu0 %v417
    %897 = vmatprep.subr.mxu0 0.0
    %898 = vmatpush1.msra.mxu0 0.0
    %899 = vmatprep.subr.mxu0 0.0
    %900 = vmatpush1.msra.mxu0 0.0
    %901 = vmatprep.subr.mxu0 0.0
    %902 = vmatpush1.msra.mxu0 0.0
    %903 = vmatprep.subr.mxu0 0.0
    %904 = vmatpush1.msra.mxu0 0.0
    %905 = vmatprep.subr.mxu0 0.0
    %906 = vmatpush1.msra.mxu0 0.0
    %907 = vmatprep.subr.mxu0 0.0
    %908 = vmatpush1.msra.mxu0 0.0
    %909 = vmatprep.subr.mxu0 0.0
    %910 = vmatpush1.msra.mxu0 0.0
    %911 = vmatprep.subr.mxu0 0.0
    %912 = vmatpush1.msra.mxu0 0.0
    %913 = vmatprep.subr.mxu0 0.0
    %914 = vmatpush1.msra.mxu0 0.0
    %915 = vmatprep.subr.mxu0 0.0
    %916 = vmatpush1.msra.mxu0 0.0
    %917 = vmatprep.subr.mxu0 0.0
    %918 = vmatpush1.msra.mxu0 0.0
    %919 = vmatprep.subr.mxu0 0.0
    %920 = vmatpush1.msra.mxu0 0.0
    %921 = vmatprep.subr.mxu0 0.0
    %922 = vmatpush1.msra.mxu0 0.0
    %923 = vmatprep.subr.mxu0 0.0
    %924 = vmatpush1.msra.mxu0 0.0
    %925 = vmatprep.subr.mxu0 0.0
    %926 = vmatpush1.msra.mxu0 0.0
    %927 = vmatprep.subr.mxu0 0.0
    %928 = vmatpush1.msra.mxu0 0.0
    %929 = vmatprep.subr.mxu0 0.0
    %930 = vmatpush1.msra.mxu0 0.0
    %931 = vmatprep.subr.mxu0 0.0
    %932 = vmatpush1.msra.mxu0 0.0
    %933 = vmatprep.subr.mxu0 0.0
    %934 = vmatpush1.msra.mxu0 0.0
    %935 = vmatprep.subr.mxu0 0.0
    %936 = vmatpush1.msra.mxu0 0.0
    %937 = vmatprep.subr.mxu0 0.0
    %938 = vmatpush1.msra.mxu0 0.0
    %939 = vmatprep.subr.mxu0 0.0
    %940 = vmatpush1.msra.mxu0 0.0
    %941 = vmatprep.subr.mxu0 0.0
    %942 = vmatpush1.msra.mxu0 0.0
    %943 = vmatprep.subr.mxu0 0.0
    %944 = vmatpush1.msra.mxu0 0.0
    %945 = vmatprep.subr.mxu0 0.0
    %946 = vmatpush1.msra.mxu0 0.0
    %947 = vmatprep.subr.mxu0 0.0
    %948 = vmatpush1.msra.mxu0 0.0
    %949 = vmatprep.subr.mxu0 0.0
    %950 = vmatpush1.msra.mxu0 0.0
    %951 = vmatprep.subr.mxu0 0.0
    %952 = vmatpush1.msra.mxu0 0.0
    %953 = vmatprep.mubr.f32.mxu0 0.0
    %954 = vmatmul.mubr.f32.gmra.mrb[0].mxu0 %v887
    %v955 = vpop.f32.mrb[0].mxu0
    %v956 = vadd.f32 %v423, %v955
    %v957 = vpop.f32.mrb[0].mxu0
    %958 = vdwg.mxu0
    %960 = vrot.lane.b32.xlu0 %v811, 96
    %v961 = vpop.permute.xlu0 %960
    %v962 = vsel %vm425, %v961, 0
    %964 = vmatprep.subr.mxu0 0.0
    %965 = vmatpush1.msra.mxu0 %v499
    %966 = vmatprep.subr.mxu0 0.0
    %967 = vmatpush1.msra.mxu0 %v500
    %968 = vmatprep.subr.mxu0 0.0
    %969 = vmatpush1.msra.mxu0 %v501
    %970 = vmatprep.subr.mxu0 0.0
    %971 = vmatpush1.msra.mxu0 %v502
    %972 = vmatprep.subr.mxu0 0.0
    %973 = vmatpush1.msra.mxu0 0.0
    %974 = vmatprep.subr.mxu0 0.0
    %975 = vmatpush1.msra.mxu0 0.0
    %976 = vmatprep.subr.mxu0 0.0
    %977 = vmatpush1.msra.mxu0 0.0
    %978 = vmatprep.subr.mxu0 0.0
    %979 = vmatpush1.msra.mxu0 0.0
    %980 = vmatprep.subr.mxu0 0.0
    %981 = vmatpush1.msra.mxu0 0.0
    %982 = vmatprep.subr.mxu0 0.0
    %983 = vmatpush1.msra.mxu0 0.0
    %984 = vmatprep.subr.mxu0 0.0
    %985 = vmatpush1.msra.mxu0 0.0
    %986 = vmatprep.subr.mxu0 0.0
    %987 = vmatpush1.msra.mxu0 0.0
    %988 = vmatprep.subr.mxu0 0.0
    %989 = vmatpush1.msra.mxu0 0.0
    %990 = vmatprep.subr.mxu0 0.0
    %991 = vmatpush1.msra.mxu0 0.0
    %992 = vmatprep.subr.mxu0 0.0
    %993 = vmatpush1.msra.mxu0 0.0
    %994 = vmatprep.subr.mxu0 0.0
    %995 = vmatpush1.msra.mxu0 0.0
    %996 = vmatprep.subr.mxu0 0.0
    %997 = vmatpush1.msra.mxu0 0.0
    %998 = vmatprep.subr.mxu0 0.0
    %999 = vmatpush1.msra.mxu0 0.0
    %1000 = vmatprep.subr.mxu0 0.0
    %1001 = vmatpush1.msra.mxu0 0.0
    %1002 = vmatprep.subr.mxu0 0.0
    %1003 = vmatpush1.msra.mxu0 0.0
    %1004 = vmatprep.subr.mxu0 0.0
    %1005 = vmatpush1.msra.mxu0 0.0
    %1006 = vmatprep.subr.mxu0 0.0
    %1007 = vmatpush1.msra.mxu0 0.0
    %1008 = vmatprep.subr.mxu0 0.0
    %1009 = vmatpush1.msra.mxu0 0.0
    %1010 = vmatprep.subr.mxu0 0.0
    %1011 = vmatpush1.msra.mxu0 0.0
    %1012 = vmatprep.subr.mxu0 0.0
    %1013 = vmatpush1.msra.mxu0 0.0
    %1014 = vmatprep.subr.mxu0 0.0
    %1015 = vmatpush1.msra.mxu0 0.0
    %1016 = vmatprep.subr.mxu0 0.0
    %1017 = vmatpush1.msra.mxu0 0.0
    %1018 = vmatprep.subr.mxu0 0.0
    %1019 = vmatpush1.msra.mxu0 0.0
    %1020 = vmatprep.subr.mxu0 0.0
    %1021 = vmatpush1.msra.mxu0 0.0
    %1022 = vmatprep.subr.mxu0 0.0
    %1023 = vmatpush1.msra.mxu0 0.0
    %1024 = vmatprep.subr.mxu0 0.0
    %1025 = vmatpush1.msra.mxu0 0.0
    %1026 = vmatprep.subr.mxu0 0.0
    %1027 = vmatpush1.msra.mxu0 0.0
    %1028 = vmatprep.mubr.f32.mxu0 0.0
    %1029 = vmatmul.mubr.f32.gmra.mrb[0].mxu0 %v962
    %v1030 = vpop.f32.mrb[0].mxu0
    %v1031 = vadd.f32 0.0, %v1030
    %v1032 = vpop.f32.mrb[0].mxu0
    %1033 = vdwg.mxu0
    %v1034 = vadd.f32 %v956, %v1031
    %v1035 = vxor.u32 %v1034, 2147483648
    %v1036 = vmul.f32 %v1035, 1.442695
    %v1037 = vpow.pop %v1036
    %v1038 = vadd.f32 %v1037, 1.0
    %v1039 = vrcp.pop %v1038
    %v1040 = vmul.f32 1.0, %v1039
    %v1041 = vadd.f32 %v1031, %v590
    %1043 = vrot.lane.b32.xlu0 %v1041, 64
    %v1044 = vpop.permute.xlu0 %1043
    %v1046 = vmul.f32 %v1040, %v1044
    %1048 = vrot.lane.b32.xlu0 %v1046, 64
    %v1049 = vpop.permute.xlu0 %1048
    %v1051 = vadd.f32 %v956, %v1049
    %v1052 = vtanh.pop %v1051
    %v1053 = vsub.f32 1.0, %v1040
    %1055 = vrot.lane.b32.xlu0 %v1052, 96
    %v1056 = vpop.permute.xlu0 %1055
    %v1058 = vmul.f32 %v1053, %v1056
    %v1059 = vmul.f32 %v1040, %v811
    %v1060 = vadd.f32 %v1058, %v1059
    %1062 = vrot.lane.b32.xlu0 %v1060, 96
    %v1063 = vpop.permute.xlu0 %1062
    %v1064 = vsel %vm425, %v1063, 0
    %1066 = vmatprep.subr.mxu0 0.0
    %1067 = vmatpush1.msra.mxu0 %v615
    %1068 = vmatprep.subr.mxu0 0.0
    %1069 = vmatpush1.msra.mxu0 %v616
    %1070 = vmatprep.subr.mxu0 0.0
    %1071 = vmatpush1.msra.mxu0 %v617
    %1072 = vmatprep.subr.mxu0 0.0
    %1073 = vmatpush1.msra.mxu0 %v618
    %1074 = vmatprep.subr.mxu0 0.0
    %1075 = vmatpush1.msra.mxu0 0.0
    %1076 = vmatprep.subr.mxu0 0.0
    %1077 = vmatpush1.msra.mxu0 0.0
    %1078 = vmatprep.subr.mxu0 0.0
    %1079 = vmatpush1.msra.mxu0 0.0
    %1080 = vmatprep.subr.mxu0 0.0
    %1081 = vmatpush1.msra.mxu0 0.0
    %1082 = vmatprep.subr.mxu0 0.0
    %1083 = vmatpush1.msra.mxu0 0.0
    %1084 = vmatprep.subr.mxu0 0.0
    %1085 = vmatpush1.msra.mxu0 0.0
    %1086 = vmatprep.subr.mxu0 0.0
    %1087 = vmatpush1.msra.mxu0 0.0
    %1088 = vmatprep.subr.mxu0 0.0
    %1089 = vmatpush1.msra.mxu0 0.0
    %1090 = vmatprep.subr.mxu0 0.0
    %1091 = vmatpush1.msra.mxu0 0.0
    %1092 = vmatprep.subr.mxu0 0.0
    %1093 = vmatpush1.msra.mxu0 0.0
    %1094 = vmatprep.subr.mxu0 0.0
    %1095 = vmatpush1.msra.mxu0 0.0
    %1096 = vmatprep.subr.mxu0 0.0
    %1097 = vmatpush1.msra.mxu0 0.0
    %1098 = vmatprep.subr.mxu0 0.0
    %1099 = vmatpush1.msra.mxu0 0.0
    %1100 = vmatprep.subr.mxu0 0.0
    %1101 = vmatpush1.msra.mxu0 0.0
    %1102 = vmatprep.subr.mxu0 0.0
    %1103 = vmatpush1.msra.mxu0 0.0
    %1104 = vmatprep.subr.mxu0 0.0
    %1105 = vmatpush1.msra.mxu0 0.0
    %1106 = vmatprep.subr.mxu0 0.0
    %1107 = vmatpush1.msra.mxu0 0.0
    %1108 = vmatprep.subr.mxu0 0.0
    %1109 = vmatpush1.msra.mxu0 0.0
    %1110 = vmatprep.subr.mxu0 0.0
    %1111 = vmatpush1.msra.mxu0 0.0
    %1112 = vmatprep.subr.mxu0 0.0
    %1113 = vmatpush1.msra.mxu0 0.0
    %1114 = vmatprep.subr.mxu0 0.0
    %1115 = vmatpush1.msra.mxu0 0.0
    %1116 = vmatprep.subr.mxu0 0.0
    %1117 = vmatpush1.msra.mxu0 0.0
    %1118 = vmatprep.subr.mxu0 0.0
    %1119 = vmatpush1.msra.mxu0 0.0
    %1120 = vmatprep.subr.mxu0 0.0
    %1121 = vmatpush1.msra.mxu0 0.0
    %1122 = vmatprep.subr.mxu0 0.0
    %1123 = vmatpush1.msra.mxu0 0.0
    %1124 = vmatprep.subr.mxu0 0.0
    %1125 = vmatpush1.msra.mxu0 0.0
    %1126 = vmatprep.subr.mxu0 0.0
    %1127 = vmatpush1.msra.mxu0 0.0
    %1128 = vmatprep.subr.mxu0 0.0
    %1129 = vmatpush1.msra.mxu0 0.0
    %1130 = vmatprep.mubr.f32.mxu0 0.0
    %1131 = vmatmul.mubr.f32.gmra.mrb[0].mxu0 %v1064
    %v1132 = vpop.f32.mrb[0].mxu0
    %v1133 = vadd.f32 %v313, %v1132
    %v1134 = vpop.f32.mrb[0].mxu0
    %1135 = vdwg.mxu0
    %v1136 = vmax.f32 %v1133, 0.0
    %v1138 = vsel %vm425, %v1136, 0
    %1140 = vmatprep.subr.mxu0 0.0
    %1141 = vmatpush1.msra.mxu0 %v695
    %1142 = vmatprep.subr.mxu0 0.0
    %1143 = vmatpush1.msra.mxu0 %v696
    %1144 = vmatprep.subr.mxu0 0.0
    %1145 = vmatpush1.msra.mxu0 %v697
    %1146 = vmatprep.subr.mxu0 0.0
    %1147 = vmatpush1.msra.mxu0 %v698
    %1148 = vmatprep.subr.mxu0 0.0
    %1149 = vmatpush1.msra.mxu0 0.0
    %1150 = vmatprep.subr.mxu0 0.0
    %1151 = vmatpush1.msra.mxu0 0.0
    %1152 = vmatprep.subr.mxu0 0.0
    %1153 = vmatpush1.msra.mxu0 0.0
    %1154 = vmatprep.subr.mxu0 0.0
    %1155 = vmatpush1.msra.mxu0 0.0
    %1156 = vmatprep.subr.mxu0 0.0
    %1157 = vmatpush1.msra.mxu0 0.0
    %1158 = vmatprep.subr.mxu0 0.0
    %1159 = vmatpush1.msra.mxu0 0.0
    %1160 = vmatprep.subr.mxu0 0.0
    %1161 = vmatpush1.msra.mxu0 0.0
    %1162 = vmatprep.subr.mxu0 0.0
    %1163 = vmatpush1.msra.mxu0 0.0
    %1164 = vmatprep.subr.mxu0 0.0
    %1165 = vmatpush1.msra.mxu0 0.0
    %1166 = vmatprep.subr.mxu0 0.0
    %1167 = vmatpush1.msra.mxu0 0.0
    %1168 = vmatprep.subr.mxu0 0.0
    %1169 = vmatpush1.msra.mxu0 0.0
    %1170 = vmatprep.subr.mxu0 0.0
    %1171 = vmatpush1.msra.mxu0 0.0
    %1172 = vmatprep.subr.mxu0 0.0
    %1173 = vmatpush1.msra.mxu0 0.0
    %1174 = vmatprep.subr.mxu0 0.0
    %1175 = vmatpush1.msra.mxu0 0.0
    %1176 = vmatprep.subr.mxu0 0.0
    %1177 = vmatpush1.msra.mxu0 0.0
    %1178 = vmatprep.subr.mxu0 0.0
    %1179 = vmatpush1.msra.mxu0 0.0
    %1180 = vmatprep.subr.mxu0 0.0
    %1181 = vmatpush1.msra.mxu0 0.0
    %1182 = vmatprep.subr.mxu0 0.0
    %1183 = vmatpush1.msra.mxu0 0.0
    %1184 = vmatprep.subr.mxu0 0.0
    %1185 = vmatpush1.msra.mxu0 0.0
    %1186 = vmatprep.subr.mxu0 0.0
    %1187 = vmatpush1.msra.mxu0 0.0
    %1188 = vmatprep.subr.mxu0 0.0
    %1189 = vmatpush1.msra.mxu0 0.0
    %1190 = vmatprep.subr.mxu0 0.0
    %1191 = vmatpush1.msra.mxu0 0.0
    %1192 = vmatprep.subr.mxu0 0.0
    %1193 = vmatpush1.msra.mxu0 0.0
    %1194 = vmatprep.subr.mxu0 0.0
    %1195 = vmatpush1.msra.mxu0 0.0
    %1196 = vmatprep.subr.mxu0 0.0
    %1197 = vmatpush1.msra.mxu0 0.0
    %1198 = vmatprep.subr.mxu0 0.0
    %1199 = vmatpush1.msra.mxu0 0.0
    %1200 = vmatprep.subr.mxu0 0.0
    %1201 = vmatpush1.msra.mxu0 0.0
    %1202 = vmatprep.subr.mxu0 0.0
    %1203 = vmatpush1.msra.mxu0 0.0
    %1204 = vmatprep.mubr.f32.mxu0 0.0
    %1205 = vmatmul.mubr.f32.gmra.mrb[0].mxu0 %v1138
    %v1206 = vpop.f32.mrb[0].mxu0
    %v1207 = vadd.f32 %v704, %v1206
    %v1208 = vpop.f32.mrb[0].mxu0
    %1209 = vdwg.mxu0
    %vm1210 = vcmp.gt.f32.partialorder %v1207, 20.0
    %v1211 = vmul.f32 %v1207, 1.442695
    %v1212 = vpow.pop %v1211
    %v1213 = vadd.f32 %v1212, 1.0
    %v1214 = vlog2.pop %v1213
    %v1215 = vmul.f32 %v1214, 0.6931472
    %v1216 = vmul.f32 -0.5, %v1212
    %v1217 = vadd.f32 %v1216, 1.0
    %v1218 = vmul.f32 %v1217, %v1212
    %v1219 = vand.u32 2147483647, %v1212
    %vm1220 = vcmp.lt.f32.partialorder %v1219, 0.0004427343
    %v1221 = vsel %vm1220, %v1218, %v1215
    %v1222 = vsel %vm1210, %v1207, %v1221
    %v1223 = vadd.f32 %v1222, 0.1
    %v1224 = vld [vmem:[%s4 + $0x8] sm:$0xff]
    %1226 = vrot.lane.b32.xlu0 %v1224, 8
    %v1227 = vpop.permute.xlu0 %1226
    %v1229 = vmul.f32 %v1223, %v1227
    %1231 = vrot.lane.b32.xlu0 %v1229, 120
    %v1232 = vpop.permute.xlu0 %1231
    %v1234 = vadd.f32 %v1207, %v1232
    %v1235 = vld [vmem:[%s2 + $0x8] sm:$0xff]
    %1237 = vset.pattern.permute.xlu0 0
    %1238 = vperm.xlu0 %1237, %v1235
    %v1239 = vpop.permute.xlu0 %1238
    %v1241 = vmul.f32 %v1234, %v1239
    %v1242 = vmul.f32 %v1060, %v1239
    %v1244 = vsel %vm339, %v1241, 0
    %1246 = vmatprep.subr.mxu0 0.0
    %1247 = vmatpush1.msra.mxu0 %v338
    %1248 = vmatprep.subr.mxu0 0.0
    %1249 = vmatpush1.msra.mxu0 0.0
    %1250 = vmatprep.subr.mxu0 0.0
    %1251 = vmatpush1.msra.mxu0 0.0
    %1252 = vmatprep.subr.mxu0 0.0
    %1253 = vmatpush1.msra.mxu0 0.0
    %1254 = vmatprep.subr.mxu0 0.0
    %1255 = vmatpush1.msra.mxu0 0.0
    %1256 = vmatprep.subr.mxu0 0.0
    %1257 = vmatpush1.msra.mxu0 0.0
    %1258 = vmatprep.subr.mxu0 0.0
    %1259 = vmatpush1.msra.mxu0 0.0
    %1260 = vmatprep.subr.mxu0 0.0
    %1261 = vmatpush1.msra.mxu0 0.0
    %1262 = vmatprep.subr.mxu0 0.0
    %1263 = vmatpush1.msra.mxu0 0.0
    %1264 = vmatprep.subr.mxu0 0.0
    %1265 = vmatpush1.msra.mxu0 0.0
    %1266 = vmatprep.subr.mxu0 0.0
    %1267 = vmatpush1.msra.mxu0 0.0
    %1268 = vmatprep.subr.mxu0 0.0
    %1269 = vmatpush1.msra.mxu0 0.0
    %1270 = vmatprep.subr.mxu0 0.0
    %1271 = vmatpush1.msra.mxu0 0.0
    %1272 = vmatprep.subr.mxu0 0.0
    %1273 = vmatpush1.msra.mxu0 0.0
    %1274 = vmatprep.subr.mxu0 0.0
    %1275 = vmatpush1.msra.mxu0 0.0
    %1276 = vmatprep.subr.mxu0 0.0
    %1277 = vmatpush1.msra.mxu0 0.0
    %1278 = vmatprep.subr.mxu0 0.0
    %1279 = vmatpush1.msra.mxu0 0.0
    %1280 = vmatprep.subr.mxu0 0.0
    %1281 = vmatpush1.msra.mxu0 0.0
    %1282 = vmatprep.subr.mxu0 0.0
    %1283 = vmatpush1.msra.mxu0 0.0
    %1284 = vmatprep.subr.mxu0 0.0
    %1285 = vmatpush1.msra.mxu0 0.0
    %1286 = vmatprep.subr.mxu0 0.0
    %1287 = vmatpush1.msra.mxu0 0.0
    %1288 = vmatprep.subr.mxu0 0.0
    %1289 = vmatpush1.msra.mxu0 0.0
    %1290 = vmatprep.subr.mxu0 0.0
    %1291 = vmatpush1.msra.mxu0 0.0
    %1292 = vmatprep.subr.mxu0 0.0
    %1293 = vmatpush1.msra.mxu0 0.0
    %1294 = vmatprep.subr.mxu0 0.0
    %1295 = vmatpush1.msra.mxu0 0.0
    %1296 = vmatprep.subr.mxu0 0.0
    %1297 = vmatpush1.msra.mxu0 0.0
    %1298 = vmatprep.subr.mxu0 0.0
    %1299 = vmatpush1.msra.mxu0 0.0
    %1300 = vmatprep.subr.mxu0 0.0
    %1301 = vmatpush1.msra.mxu0 0.0
    %1302 = vmatprep.subr.mxu0 0.0
    %1303 = vmatpush1.msra.mxu0 0.0
    %1304 = vmatprep.subr.mxu0 0.0
    %1305 = vmatpush1.msra.mxu0 0.0
    %1306 = vmatprep.subr.mxu0 0.0
    %1307 = vmatpush1.msra.mxu0 0.0
    %1308 = vmatprep.subr.mxu0 0.0
    %1309 = vmatpush1.msra.mxu0 0.0
    %1310 = vmatprep.mubr.f32.mxu0 0.0
    %1311 = vmatmul.mubr.f32.gmra.mrb[0].mxu0 %v1244
    %v1312 = vpop.f32.mrb[0].mxu0
    %v1313 = vadd.f32 %v189, %v1312
    %v1314 = vpop.f32.mrb[0].mxu0
    %1315 = vdwg.mxu0
    %v1316 = vmax.f32 %v1313, 0.0
    %v1318 = vsel %vm425, %v1316, 0
    %1320 = vmatprep.subr.mxu0 0.0
    %1321 = vmatpush1.msra.mxu0 %v414
    %1322 = vmatprep.subr.mxu0 0.0
    %1323 = vmatpush1.msra.mxu0 %v415
    %1324 = vmatprep.subr.mxu0 0.0
    %1325 = vmatpush1.msra.mxu0 %v416
    %1326 = vmatprep.subr.mxu0 0.0
    %1327 = vmatpush1.msra.mxu0 %v417
    %1328 = vmatprep.subr.mxu0 0.0
    %1329 = vmatpush1.msra.mxu0 0.0
    %1330 = vmatprep.subr.mxu0 0.0
    %1331 = vmatpush1.msra.mxu0 0.0
    %1332 = vmatprep.subr.mxu0 0.0
    %1333 = vmatpush1.msra.mxu0 0.0
    %1334 = vmatprep.subr.mxu0 0.0
    %1335 = vmatpush1.msra.mxu0 0.0
    %1336 = vmatprep.subr.mxu0 0.0
    %1337 = vmatpush1.msra.mxu0 0.0
    %1338 = vmatprep.subr.mxu0 0.0
    %1339 = vmatpush1.msra.mxu0 0.0
    %1340 = vmatprep.subr.mxu0 0.0
    %1341 = vmatpush1.msra.mxu0 0.0
    %1342 = vmatprep.subr.mxu0 0.0
    %1343 = vmatpush1.msra.mxu0 0.0
    %1344 = vmatprep.subr.mxu0 0.0
    %1345 = vmatpush1.msra.mxu0 0.0
    %1346 = vmatprep.subr.mxu0 0.0
    %1347 = vmatpush1.msra.mxu0 0.0
    %1348 = vmatprep.subr.mxu0 0.0
    %1349 = vmatpush1.msra.mxu0 0.0
    %1350 = vmatprep.subr.mxu0 0.0
    %1351 = vmatpush1.msra.mxu0 0.0
    %1352 = vmatprep.subr.mxu0 0.0
    %1353 = vmatpush1.msra.mxu0 0.0
    %1354 = vmatprep.subr.mxu0 0.0
    %1355 = vmatpush1.msra.mxu0 0.0
    %1356 = vmatprep.subr.mxu0 0.0
    %1357 = vmatpush1.msra.mxu0 0.0
    %1358 = vmatprep.subr.mxu0 0.0
    %1359 = vmatpush1.msra.mxu0 0.0
    %1360 = vmatprep.subr.mxu0 0.0
    %1361 = vmatpush1.msra.mxu0 0.0
    %1362 = vmatprep.subr.mxu0 0.0
    %1363 = vmatpush1.msra.mxu0 0.0
    %1364 = vmatprep.subr.mxu0 0.0
    %1365 = vmatpush1.msra.mxu0 0.0
    %1366 = vmatprep.subr.mxu0 0.0
    %1367 = vmatpush1.msra.mxu0 0.0
    %1368 = vmatprep.subr.mxu0 0.0
    %1369 = vmatpush1.msra.mxu0 0.0
    %1370 = vmatprep.subr.mxu0 0.0
    %1371 = vmatpush1.msra.mxu0 0.0
    %1372 = vmatprep.subr.mxu0 0.0
    %1373 = vmatpush1.msra.mxu0 0.0
    %1374 = vmatprep.subr.mxu0 0.0
    %1375 = vmatpush1.msra.mxu0 0.0
    %1376 = vmatprep.subr.mxu0 0.0
    %1377 = vmatpush1.msra.mxu0 0.0
    %1378 = vmatprep.subr.mxu0 0.0
    %1379 = vmatpush1.msra.mxu0 0.0
    %1380 = vmatprep.subr.mxu0 0.0
    %1381 = vmatpush1.msra.mxu0 0.0
    %1382 = vmatprep.subr.mxu0 0.0
    %1383 = vmatpush1.msra.mxu0 0.0
    %1384 = vmatprep.mubr.f32.mxu0 0.0
    %1385 = vmatmul.mubr.f32.gmra.mrb[0].mxu0 %v1318
    %v1386 = vpop.f32.mrb[0].mxu0
    %v1387 = vadd.f32 %v423, %v1386
    %v1388 = vpop.f32.mrb[0].mxu0
    %1389 = vdwg.mxu0
    %1391 = vrot.lane.b32.xlu0 %v1242, 96
    %v1392 = vpop.permute.xlu0 %1391
    %v1393 = vsel %vm425, %v1392, 0
    %1395 = vmatprep.subr.mxu0 0.0
    %1396 = vmatpush1.msra.mxu0 %v499
    %1397 = vmatprep.subr.mxu0 0.0
    %1398 = vmatpush1.msra.mxu0 %v500
    %1399 = vmatprep.subr.mxu0 0.0
    %1400 = vmatpush1.msra.mxu0 %v501
    %1401 = vmatprep.subr.mxu0 0.0
    %1402 = vmatpush1.msra.mxu0 %v502
    %1403 = vmatprep.subr.mxu0 0.0
    %1404 = vmatpush1.msra.mxu0 0.0
    %1405 = vmatprep.subr.mxu0 0.0
    %1406 = vmatpush1.msra.mxu0 0.0
    %1407 = vmatprep.subr.mxu0 0.0
    %1408 = vmatpush1.msra.mxu0 0.0
    %1409 = vmatprep.subr.mxu0 0.0
    %1410 = vmatpush1.msra.mxu0 0.0
    %1411 = vmatprep.subr.mxu0 0.0
    %1412 = vmatpush1.msra.mxu0 0.0
    %1413 = vmatprep.subr.mxu0 0.0
    %1414 = vmatpush1.msra.mxu0 0.0
    %1415 = vmatprep.subr.mxu0 0.0
    %1416 = vmatpush1.msra.mxu0 0.0
    %1417 = vmatprep.subr.mxu0 0.0
    %1418 = vmatpush1.msra.mxu0 0.0
    %1419 = vmatprep.subr.mxu0 0.0
    %1420 = vmatpush1.msra.mxu0 0.0
    %1421 = vmatprep.subr.mxu0 0.0
    %1422 = vmatpush1.msra.mxu0 0.0
    %1423 = vmatprep.subr.mxu0 0.0
    %1424 = vmatpush1.msra.mxu0 0.0
    %1425 = vmatprep.subr.mxu0 0.0
    %1426 = vmatpush1.msra.mxu0 0.0
    %1427 = vmatprep.subr.mxu0 0.0
    %1428 = vmatpush1.msra.mxu0 0.0
    %1429 = vmatprep.subr.mxu0 0.0
    %1430 = vmatpush1.msra.mxu0 0.0
    %1431 = vmatprep.subr.mxu0 0.0
    %1432 = vmatpush1.msra.mxu0 0.0
    %1433 = vmatprep.subr.mxu0 0.0
    %1434 = vmatpush1.msra.mxu0 0.0
    %1435 = vmatprep.subr.mxu0 0.0
    %1436 = vmatpush1.msra.mxu0 0.0
    %1437 = vmatprep.subr.mxu0 0.0
    %1438 = vmatpush1.msra.mxu0 0.0
    %1439 = vmatprep.subr.mxu0 0.0
    %1440 = vmatpush1.msra.mxu0 0.0
    %1441 = vmatprep.subr.mxu0 0.0
    %1442 = vmatpush1.msra.mxu0 0.0
    %1443 = vmatprep.subr.mxu0 0.0
    %1444 = vmatpush1.msra.mxu0 0.0
    %1445 = vmatprep.subr.mxu0 0.0
    %1446 = vmatpush1.msra.mxu0 0.0
    %1447 = vmatprep.subr.mxu0 0.0
    %1448 = vmatpush1.msra.mxu0 0.0
    %1449 = vmatprep.subr.mxu0 0.0
    %1450 = vmatpush1.msra.mxu0 0.0
    %1451 = vmatprep.subr.mxu0 0.0
    %1452 = vmatpush1.msra.mxu0 0.0
    %1453 = vmatprep.subr.mxu0 0.0
    %1454 = vmatpush1.msra.mxu0 0.0
    %1455 = vmatprep.subr.mxu0 0.0
    %1456 = vmatpush1.msra.mxu0 0.0
    %1457 = vmatprep.subr.mxu0 0.0
    %1458 = vmatpush1.msra.mxu0 0.0
    %1459 = vmatprep.mubr.f32.mxu0 0.0
    %1460 = vmatmul.mubr.f32.gmra.mrb[0].mxu0 %v1393
    %v1461 = vpop.f32.mrb[0].mxu0
    %v1462 = vadd.f32 0.0, %v1461
    %v1463 = vpop.f32.mrb[0].mxu0
    %1464 = vdwg.mxu0
    %v1465 = vadd.f32 %v1387, %v1462
    %v1466 = vxor.u32 %v1465, 2147483648
    %v1467 = vmul.f32 %v1466, 1.442695
    %v1468 = vpow.pop %v1467
    %v1469 = vadd.f32 %v1468, 1.0
    %v1470 = vrcp.pop %v1469
    %v1471 = vmul.f32 1.0, %v1470
    %v1472 = vadd.f32 %v1462, %v590
    %1474 = vrot.lane.b32.xlu0 %v1472, 64
    %v1475 = vpop.permute.xlu0 %1474
    %v1477 = vmul.f32 %v1471, %v1475
    %1479 = vrot.lane.b32.xlu0 %v1477, 64
    %v1480 = vpop.permute.xlu0 %1479
    %v1482 = vadd.f32 %v1387, %v1480
    %v1483 = vtanh.pop %v1482
    %v1484 = vsub.f32 1.0, %v1471
    %1486 = vrot.lane.b32.xlu0 %v1483, 96
    %v1487 = vpop.permute.xlu0 %1486
    %v1489 = vmul.f32 %v1484, %v1487
    %v1490 = vmul.f32 %v1471, %v1242
    %v1491 = vadd.f32 %v1489, %v1490
    %1493 = vrot.lane.b32.xlu0 %v1491, 96
    %v1494 = vpop.permute.xlu0 %1493
    %v1495 = vsel %vm425, %v1494, 0
    %1497 = vmatprep.subr.mxu0 0.0
    %1498 = vmatpush1.msra.mxu0 %v615
    %1499 = vmatprep.subr.mxu0 0.0
    %1500 = vmatpush1.msra.mxu0 %v616
    %1501 = vmatprep.subr.mxu0 0.0
    %1502 = vmatpush1.msra.mxu0 %v617
    %1503 = vmatprep.subr.mxu0 0.0
    %1504 = vmatpush1.msra.mxu0 %v618
    %1505 = vmatprep.subr.mxu0 0.0
    %1506 = vmatpush1.msra.mxu0 0.0
    %1507 = vmatprep.subr.mxu0 0.0
    %1508 = vmatpush1.msra.mxu0 0.0
    %1509 = vmatprep.subr.mxu0 0.0
    %1510 = vmatpush1.msra.mxu0 0.0
    %1511 = vmatprep.subr.mxu0 0.0
    %1512 = vmatpush1.msra.mxu0 0.0
    %1513 = vmatprep.subr.mxu0 0.0
    %1514 = vmatpush1.msra.mxu0 0.0
    %1515 = vmatprep.subr.mxu0 0.0
    %1516 = vmatpush1.msra.mxu0 0.0
    %1517 = vmatprep.subr.mxu0 0.0
    %1518 = vmatpush1.msra.mxu0 0.0
    %1519 = vmatprep.subr.mxu0 0.0
    %1520 = vmatpush1.msra.mxu0 0.0
    %1521 = vmatprep.subr.mxu0 0.0
    %1522 = vmatpush1.msra.mxu0 0.0
    %1523 = vmatprep.subr.mxu0 0.0
    %1524 = vmatpush1.msra.mxu0 0.0
    %1525 = vmatprep.subr.mxu0 0.0
    %1526 = vmatpush1.msra.mxu0 0.0
    %1527 = vmatprep.subr.mxu0 0.0
    %1528 = vmatpush1.msra.mxu0 0.0
    %1529 = vmatprep.subr.mxu0 0.0
    %1530 = vmatpush1.msra.mxu0 0.0
    %1531 = vmatprep.subr.mxu0 0.0
    %1532 = vmatpush1.msra.mxu0 0.0
    %1533 = vmatprep.subr.mxu0 0.0
    %1534 = vmatpush1.msra.mxu0 0.0
    %1535 = vmatprep.subr.mxu0 0.0
    %1536 = vmatpush1.msra.mxu0 0.0
    %1537 = vmatprep.subr.mxu0 0.0
    %1538 = vmatpush1.msra.mxu0 0.0
    %1539 = vmatprep.subr.mxu0 0.0
    %1540 = vmatpush1.msra.mxu0 0.0
    %1541 = vmatprep.subr.mxu0 0.0
    %1542 = vmatpush1.msra.mxu0 0.0
    %1543 = vmatprep.subr.mxu0 0.0
    %1544 = vmatpush1.msra.mxu0 0.0
    %1545 = vmatprep.subr.mxu0 0.0
    %1546 = vmatpush1.msra.mxu0 0.0
    %1547 = vmatprep.subr.mxu0 0.0
    %1548 = vmatpush1.msra.mxu0 0.0
    %1549 = vmatprep.subr.mxu0 0.0
    %1550 = vmatpush1.msra.mxu0 0.0
    %1551 = vmatprep.subr.mxu0 0.0
    %1552 = vmatpush1.msra.mxu0 0.0
    %1553 = vmatprep.subr.mxu0 0.0
    %1554 = vmatpush1.msra.mxu0 0.0
    %1555 = vmatprep.subr.mxu0 0.0
    %1556 = vmatpush1.msra.mxu0 0.0
    %1557 = vmatprep.subr.mxu0 0.0
    %1558 = vmatpush1.msra.mxu0 0.0
    %1559 = vmatprep.subr.mxu0 0.0
    %1560 = vmatpush1.msra.mxu0 0.0
    %1561 = vmatprep.mubr.f32.mxu0 0.0
    %1562 = vmatmul.mubr.f32.gmra.mrb[0].mxu0 %v1495
    %v1563 = vpop.f32.mrb[0].mxu0
    %v1564 = vadd.f32 %v318, %v1563
    %v1565 = vpop.f32.mrb[0].mxu0
    %1566 = vdwg.mxu0
    %v1567 = vmax.f32 %v1564, 0.0
    %v1569 = vsel %vm425, %v1567, 0
    %1571 = vmatprep.subr.mxu0 0.0
    %1572 = vmatpush1.msra.mxu0 %v695
    %1573 = vmatprep.subr.mxu0 0.0
    %1574 = vmatpush1.msra.mxu0 %v696
    %1575 = vmatprep.subr.mxu0 0.0
    %1576 = vmatpush1.msra.mxu0 %v697
    %1577 = vmatprep.subr.mxu0 0.0
    %1578 = vmatpush1.msra.mxu0 %v698
    %1579 = vmatprep.subr.mxu0 0.0
    %1580 = vmatpush1.msra.mxu0 0.0
    %1581 = vmatprep.subr.mxu0 0.0
    %1582 = vmatpush1.msra.mxu0 0.0
    %1583 = vmatprep.subr.mxu0 0.0
    %1584 = vmatpush1.msra.mxu0 0.0
    %1585 = vmatprep.subr.mxu0 0.0
    %1586 = vmatpush1.msra.mxu0 0.0
    %1587 = vmatprep.subr.mxu0 0.0
    %1588 = vmatpush1.msra.mxu0 0.0
    %1589 = vmatprep.subr.mxu0 0.0
    %1590 = vmatpush1.msra.mxu0 0.0
    %1591 = vmatprep.subr.mxu0 0.0
    %1592 = vmatpush1.msra.mxu0 0.0
    %1593 = vmatprep.subr.mxu0 0.0
    %1594 = vmatpush1.msra.mxu0 0.0
    %1595 = vmatprep.subr.mxu0 0.0
    %1596 = vmatpush1.msra.mxu0 0.0
    %1597 = vmatprep.subr.mxu0 0.0
    %1598 = vmatpush1.msra.mxu0 0.0
    %1599 = vmatprep.subr.mxu0 0.0
    %1600 = vmatpush1.msra.mxu0 0.0
    %1601 = vmatprep.subr.mxu0 0.0
    %1602 = vmatpush1.msra.mxu0 0.0
    %1603 = vmatprep.subr.mxu0 0.0
    %1604 = vmatpush1.msra.mxu0 0.0
    %1605 = vmatprep.subr.mxu0 0.0
    %1606 = vmatpush1.msra.mxu0 0.0
    %1607 = vmatprep.subr.mxu0 0.0
    %1608 = vmatpush1.msra.mxu0 0.0
    %1609 = vmatprep.subr.mxu0 0.0
    %1610 = vmatpush1.msra.mxu0 0.0
    %1611 = vmatprep.subr.mxu0 0.0
    %1612 = vmatpush1.msra.mxu0 0.0
    %1613 = vmatprep.subr.mxu0 0.0
    %1614 = vmatpush1.msra.mxu0 0.0
    %1615 = vmatprep.subr.mxu0 0.0
    %1616 = vmatpush1.msra.mxu0 0.0
    %1617 = vmatprep.subr.mxu0 0.0
    %1618 = vmatpush1.msra.mxu0 0.0
    %1619 = vmatprep.subr.mxu0 0.0
    %1620 = vmatpush1.msra.mxu0 0.0
    %1621 = vmatprep.subr.mxu0 0.0
    %1622 = vmatpush1.msra.mxu0 0.0
    %1623 = vmatprep.subr.mxu0 0.0
    %1624 = vmatpush1.msra.mxu0 0.0
    %1625 = vmatprep.subr.mxu0 0.0
    %1626 = vmatpush1.msra.mxu0 0.0
    %1627 = vmatprep.subr.mxu0 0.0
    %1628 = vmatpush1.msra.mxu0 0.0
    %1629 = vmatprep.subr.mxu0 0.0
    %1630 = vmatpush1.msra.mxu0 0.0
    %1631 = vmatprep.subr.mxu0 0.0
    %1632 = vmatpush1.msra.mxu0 0.0
    %1633 = vmatprep.subr.mxu0 0.0
    %1634 = vmatpush1.msra.mxu0 0.0
    %1635 = vmatprep.mubr.f32.mxu0 0.0
    %1636 = vmatmul.mubr.f32.gmra.mrb[0].mxu0 %v1569
    %v1637 = vpop.f32.mrb[0].mxu0
    %v1638 = vadd.f32 %v704, %v1637
    %v1639 = vpop.f32.mrb[0].mxu0
    %1640 = vdwg.mxu0
    %vm1641 = vcmp.gt.f32.partialorder %v1638, 20.0
    %v1642 = vmul.f32 %v1638, 1.442695
    %v1643 = vpow.pop %v1642
    %v1644 = vadd.f32 %v1643, 1.0
    %v1645 = vlog2.pop %v1644
    %v1646 = vmul.f32 %v1645, 0.6931472
    %v1647 = vmul.f32 -0.5, %v1643
    %v1648 = vadd.f32 %v1647, 1.0
    %v1649 = vmul.f32 %v1648, %v1643
    %v1650 = vand.u32 2147483647, %v1643
    %vm1651 = vcmp.lt.f32.partialorder %v1650, 0.0004427343
    %v1652 = vsel %vm1651, %v1649, %v1646
    %v1653 = vsel %vm1641, %v1638, %v1652
    %v1654 = vadd.f32 %v1653, 0.1
    %v1655 = vld [vmem:[%s4 + $0x10] sm:$0xff]
    %1657 = vrot.lane.b32.xlu0 %v1655, 8
    %v1658 = vpop.permute.xlu0 %1657
    %v1660 = vmul.f32 %v1654, %v1658
    %1662 = vrot.lane.b32.xlu0 %v1660, 120
    %v1663 = vpop.permute.xlu0 %1662
    %v1665 = vadd.f32 %v1638, %v1663
    %v1666 = vld [vmem:[%s2 + $0x10] sm:$0xff]
    %1668 = vset.pattern.permute.xlu0 0
    %1669 = vperm.xlu0 %1668, %v1666
    %v1670 = vpop.permute.xlu0 %1669
    %v1672 = vmul.f32 %v1665, %v1670
    %v1673 = vmul.f32 %v1491, %v1670
    %v1675 = vsel %vm339, %v1672, 0
    %1677 = vmatprep.subr.mxu0 0.0
    %1678 = vmatpush1.msra.mxu0 %v338
    %1679 = vmatprep.subr.mxu0 0.0
    %1680 = vmatpush1.msra.mxu0 0.0
    %1681 = vmatprep.subr.mxu0 0.0
    %1682 = vmatpush1.msra.mxu0 0.0
    %1683 = vmatprep.subr.mxu0 0.0
    %1684 = vmatpush1.msra.mxu0 0.0
    %1685 = vmatprep.subr.mxu0 0.0
    %1686 = vmatpush1.msra.mxu0 0.0
    %1687 = vmatprep.subr.mxu0 0.0
    %1688 = vmatpush1.msra.mxu0 0.0
    %1689 = vmatprep.subr.mxu0 0.0
    %1690 = vmatpush1.msra.mxu0 0.0
    %1691 = vmatprep.subr.mxu0 0.0
    %1692 = vmatpush1.msra.mxu0 0.0
    %1693 = vmatprep.subr.mxu0 0.0
    %1694 = vmatpush1.msra.mxu0 0.0
    %1695 = vmatprep.subr.mxu0 0.0
    %1696 = vmatpush1.msra.mxu0 0.0
    %1697 = vmatprep.subr.mxu0 0.0
    %1698 = vmatpush1.msra.mxu0 0.0
    %1699 = vmatprep.subr.mxu0 0.0
    %1700 = vmatpush1.msra.mxu0 0.0
    %1701 = vmatprep.subr.mxu0 0.0
    %1702 = vmatpush1.msra.mxu0 0.0
    %1703 = vmatprep.subr.mxu0 0.0
    %1704 = vmatpush1.msra.mxu0 0.0
    %1705 = vmatprep.subr.mxu0 0.0
    %1706 = vmatpush1.msra.mxu0 0.0
    %1707 = vmatprep.subr.mxu0 0.0
    %1708 = vmatpush1.msra.mxu0 0.0
    %1709 = vmatprep.subr.mxu0 0.0
    %1710 = vmatpush1.msra.mxu0 0.0
    %1711 = vmatprep.subr.mxu0 0.0
    %1712 = vmatpush1.msra.mxu0 0.0
    %1713 = vmatprep.subr.mxu0 0.0
    %1714 = vmatpush1.msra.mxu0 0.0
    %1715 = vmatprep.subr.mxu0 0.0
    %1716 = vmatpush1.msra.mxu0 0.0
    %1717 = vmatprep.subr.mxu0 0.0
    %1718 = vmatpush1.msra.mxu0 0.0
    %1719 = vmatprep.subr.mxu0 0.0
    %1720 = vmatpush1.msra.mxu0 0.0
    %1721 = vmatprep.subr.mxu0 0.0
    %1722 = vmatpush1.msra.mxu0 0.0
    %1723 = vmatprep.subr.mxu0 0.0
    %1724 = vmatpush1.msra.mxu0 0.0
    %1725 = vmatprep.subr.mxu0 0.0
    %1726 = vmatpush1.msra.mxu0 0.0
    %1727 = vmatprep.subr.mxu0 0.0
    %1728 = vmatpush1.msra.mxu0 0.0
    %1729 = vmatprep.subr.mxu0 0.0
    %1730 = vmatpush1.msra.mxu0 0.0
    %1731 = vmatprep.subr.mxu0 0.0
    %1732 = vmatpush1.msra.mxu0 0.0
    %1733 = vmatprep.subr.mxu0 0.0
    %1734 = vmatpush1.msra.mxu0 0.0
    %1735 = vmatprep.subr.mxu0 0.0
    %1736 = vmatpush1.msra.mxu0 0.0
    %1737 = vmatprep.subr.mxu0 0.0
    %1738 = vmatpush1.msra.mxu0 0.0
    %1739 = vmatprep.subr.mxu0 0.0
    %1740 = vmatpush1.msra.mxu0 0.0
    %1741 = vmatprep.mubr.f32.mxu0 0.0
    %1742 = vmatmul.mubr.f32.gmra.mrb[0].mxu0 %v1675
    %v1743 = vpop.f32.mrb[0].mxu0
    %v1744 = vadd.f32 %v194, %v1743
    %v1745 = vpop.f32.mrb[0].mxu0
    %1746 = vdwg.mxu0
    %v1747 = vmax.f32 %v1744, 0.0
    %v1749 = vsel %vm425, %v1747, 0
    %1751 = vmatprep.subr.mxu0 0.0
    %1752 = vmatpush1.msra.mxu0 %v414
    %1753 = vmatprep.subr.mxu0 0.0
    %1754 = vmatpush1.msra.mxu0 %v415
    %1755 = vmatprep.subr.mxu0 0.0
    %1756 = vmatpush1.msra.mxu0 %v416
    %1757 = vmatprep.subr.mxu0 0.0
    %1758 = vmatpush1.msra.mxu0 %v417
    %1759 = vmatprep.subr.mxu0 0.0
    %1760 = vmatpush1.msra.mxu0 0.0
    %1761 = vmatprep.subr.mxu0 0.0
    %1762 = vmatpush1.msra.mxu0 0.0
    %1763 = vmatprep.subr.mxu0 0.0
    %1764 = vmatpush1.msra.mxu0 0.0
    %1765 = vmatprep.subr.mxu0 0.0
    %1766 = vmatpush1.msra.mxu0 0.0
    %1767 = vmatprep.subr.mxu0 0.0
    %1768 = vmatpush1.msra.mxu0 0.0
    %1769 = vmatprep.subr.mxu0 0.0
    %1770 = vmatpush1.msra.mxu0 0.0
    %1771 = vmatprep.subr.mxu0 0.0
    %1772 = vmatpush1.msra.mxu0 0.0
    %1773 = vmatprep.subr.mxu0 0.0
    %1774 = vmatpush1.msra.mxu0 0.0
    %1775 = vmatprep.subr.mxu0 0.0
    %1776 = vmatpush1.msra.mxu0 0.0
    %1777 = vmatprep.subr.mxu0 0.0
    %1778 = vmatpush1.msra.mxu0 0.0
    %1779 = vmatprep.subr.mxu0 0.0
    %1780 = vmatpush1.msra.mxu0 0.0
    %1781 = vmatprep.subr.mxu0 0.0
    %1782 = vmatpush1.msra.mxu0 0.0
    %1783 = vmatprep.subr.mxu0 0.0
    %1784 = vmatpush1.msra.mxu0 0.0
    %1785 = vmatprep.subr.mxu0 0.0
    %1786 = vmatpush1.msra.mxu0 0.0
    %1787 = vmatprep.subr.mxu0 0.0
    %1788 = vmatpush1.msra.mxu0 0.0
    %1789 = vmatprep.subr.mxu0 0.0
    %1790 = vmatpush1.msra.mxu0 0.0
    %1791 = vmatprep.subr.mxu0 0.0
    %1792 = vmatpush1.msra.mxu0 0.0
    %1793 = vmatprep.subr.mxu0 0.0
    %1794 = vmatpush1.msra.mxu0 0.0
    %1795 = vmatprep.subr.mxu0 0.0
    %1796 = vmatpush1.msra.mxu0 0.0
    %1797 = vmatprep.subr.mxu0 0.0
    %1798 = vmatpush1.msra.mxu0 0.0
    %1799 = vmatprep.subr.mxu0 0.0
    %1800 = vmatpush1.msra.mxu0 0.0
    %1801 = vmatprep.subr.mxu0 0.0
    %1802 = vmatpush1.msra.mxu0 0.0
    %1803 = vmatprep.subr.mxu0 0.0
    %1804 = vmatpush1.msra.mxu0 0.0
    %1805 = vmatprep.subr.mxu0 0.0
    %1806 = vmatpush1.msra.mxu0 0.0
    %1807 = vmatprep.subr.mxu0 0.0
    %1808 = vmatpush1.msra.mxu0 0.0
    %1809 = vmatprep.subr.mxu0 0.0
    %1810 = vmatpush1.msra.mxu0 0.0
    %1811 = vmatprep.subr.mxu0 0.0
    %1812 = vmatpush1.msra.mxu0 0.0
    %1813 = vmatprep.subr.mxu0 0.0
    %1814 = vmatpush1.msra.mxu0 0.0
    %1815 = vmatprep.mubr.f32.mxu0 0.0
    %1816 = vmatmul.mubr.f32.gmra.mrb[0].mxu0 %v1749
    %v1817 = vpop.f32.mrb[0].mxu0
    %v1818 = vadd.f32 %v423, %v1817
    %v1819 = vpop.f32.mrb[0].mxu0
    %1820 = vdwg.mxu0
    %1822 = vrot.lane.b32.xlu0 %v1673, 96
    %v1823 = vpop.permute.xlu0 %1822
    %v1824 = vsel %vm425, %v1823, 0
    %1826 = vmatprep.subr.mxu0 0.0
    %1827 = vmatpush1.msra.mxu0 %v499
    %1828 = vmatprep.subr.mxu0 0.0
    %1829 = vmatpush1.msra.mxu0 %v500
    %1830 = vmatprep.subr.mxu0 0.0
    %1831 = vmatpush1.msra.mxu0 %v501
    %1832 = vmatprep.subr.mxu0 0.0
    %1833 = vmatpush1.msra.mxu0 %v502
    %1834 = vmatprep.subr.mxu0 0.0
    %1835 = vmatpush1.msra.mxu0 0.0
    %1836 = vmatprep.subr.mxu0 0.0
    %1837 = vmatpush1.msra.mxu0 0.0
    %1838 = vmatprep.subr.mxu0 0.0
    %1839 = vmatpush1.msra.mxu0 0.0
    %1840 = vmatprep.subr.mxu0 0.0
    %1841 = vmatpush1.msra.mxu0 0.0
    %1842 = vmatprep.subr.mxu0 0.0
    %1843 = vmatpush1.msra.mxu0 0.0
    %1844 = vmatprep.subr.mxu0 0.0
    %1845 = vmatpush1.msra.mxu0 0.0
    %1846 = vmatprep.subr.mxu0 0.0
    %1847 = vmatpush1.msra.mxu0 0.0
    %1848 = vmatprep.subr.mxu0 0.0
    %1849 = vmatpush1.msra.mxu0 0.0
    %1850 = vmatprep.subr.mxu0 0.0
    %1851 = vmatpush1.msra.mxu0 0.0
    %1852 = vmatprep.subr.mxu0 0.0
    %1853 = vmatpush1.msra.mxu0 0.0
    %1854 = vmatprep.subr.mxu0 0.0
    %1855 = vmatpush1.msra.mxu0 0.0
    %1856 = vmatprep.subr.mxu0 0.0
    %1857 = vmatpush1.msra.mxu0 0.0
    %1858 = vmatprep.subr.mxu0 0.0
    %1859 = vmatpush1.msra.mxu0 0.0
    %1860 = vmatprep.subr.mxu0 0.0
    %1861 = vmatpush1.msra.mxu0 0.0
    %1862 = vmatprep.subr.mxu0 0.0
    %1863 = vmatpush1.msra.mxu0 0.0
    %1864 = vmatprep.subr.mxu0 0.0
    %1865 = vmatpush1.msra.mxu0 0.0
    %1866 = vmatprep.subr.mxu0 0.0
    %1867 = vmatpush1.msra.mxu0 0.0
    %1868 = vmatprep.subr.mxu0 0.0
    %1869 = vmatpush1.msra.mxu0 0.0
    %1870 = vmatprep.subr.mxu0 0.0
    %1871 = vmatpush1.msra.mxu0 0.0
    %1872 = vmatprep.subr.mxu0 0.0
    %1873 = vmatpush1.msra.mxu0 0.0
    %1874 = vmatprep.subr.mxu0 0.0
    %1875 = vmatpush1.msra.mxu0 0.0
    %1876 = vmatprep.subr.mxu0 0.0
    %1877 = vmatpush1.msra.mxu0 0.0
    %1878 = vmatprep.subr.mxu0 0.0
    %1879 = vmatpush1.msra.mxu0 0.0
    %1880 = vmatprep.subr.mxu0 0.0
    %1881 = vmatpush1.msra.mxu0 0.0
    %1882 = vmatprep.subr.mxu0 0.0
    %1883 = vmatpush1.msra.mxu0 0.0
    %1884 = vmatprep.subr.mxu0 0.0
    %1885 = vmatpush1.msra.mxu0 0.0
    %1886 = vmatprep.subr.mxu0 0.0
    %1887 = vmatpush1.msra.mxu0 0.0
    %1888 = vmatprep.subr.mxu0 0.0
    %1889 = vmatpush1.msra.mxu0 0.0
    %1890 = vmatprep.mubr.f32.mxu0 0.0
    %1891 = vmatmul.mubr.f32.gmra.mrb[0].mxu0 %v1824
    %v1892 = vpop.f32.mrb[0].mxu0
    %v1893 = vadd.f32 0.0, %v1892
    %v1894 = vpop.f32.mrb[0].mxu0
    %1895 = vdwg.mxu0
    %v1896 = vadd.f32 %v1818, %v1893
    %v1897 = vxor.u32 %v1896, 2147483648
    %v1898 = vmul.f32 %v1897, 1.442695
    %v1899 = vpow.pop %v1898
    %v1900 = vadd.f32 %v1899, 1.0
    %v1901 = vrcp.pop %v1900
    %v1902 = vmul.f32 1.0, %v1901
    %v1903 = vadd.f32 %v1893, %v590
    %1905 = vrot.lane.b32.xlu0 %v1903, 64
    %v1906 = vpop.permute.xlu0 %1905
    %v1908 = vmul.f32 %v1902, %v1906
    %1910 = vrot.lane.b32.xlu0 %v1908, 64
    %v1911 = vpop.permute.xlu0 %1910
    %v1913 = vadd.f32 %v1818, %v1911
    %v1914 = vtanh.pop %v1913
    %v1915 = vsub.f32 1.0, %v1902
    %1917 = vrot.lane.b32.xlu0 %v1914, 96
    %v1918 = vpop.permute.xlu0 %1917
    %v1920 = vmul.f32 %v1915, %v1918
    %v1921 = vmul.f32 %v1902, %v1673
    %v1922 = vadd.f32 %v1920, %v1921
    %1924 = vrot.lane.b32.xlu0 %v1922, 96
    %v1925 = vpop.permute.xlu0 %1924
    %v1926 = vsel %vm425, %v1925, 0
    %1928 = vmatprep.subr.mxu0 0.0
    %1929 = vmatpush1.msra.mxu0 %v615
    %1930 = vmatprep.subr.mxu0 0.0
    %1931 = vmatpush1.msra.mxu0 %v616
    %1932 = vmatprep.subr.mxu0 0.0
    %1933 = vmatpush1.msra.mxu0 %v617
    %1934 = vmatprep.subr.mxu0 0.0
    %1935 = vmatpush1.msra.mxu0 %v618
    %1936 = vmatprep.subr.mxu0 0.0
    %1937 = vmatpush1.msra.mxu0 0.0
    %1938 = vmatprep.subr.mxu0 0.0
    %1939 = vmatpush1.msra.mxu0 0.0
    %1940 = vmatprep.subr.mxu0 0.0
    %1941 = vmatpush1.msra.mxu0 0.0
    %1942 = vmatprep.subr.mxu0 0.0
    %1943 = vmatpush1.msra.mxu0 0.0
    %1944 = vmatprep.subr.mxu0 0.0
    %1945 = vmatpush1.msra.mxu0 0.0
    %1946 = vmatprep.subr.mxu0 0.0
    %1947 = vmatpush1.msra.mxu0 0.0
    %1948 = vmatprep.subr.mxu0 0.0
    %1949 = vmatpush1.msra.mxu0 0.0
    %1950 = vmatprep.subr.mxu0 0.0
    %1951 = vmatpush1.msra.mxu0 0.0
    %1952 = vmatprep.subr.mxu0 0.0
    %1953 = vmatpush1.msra.mxu0 0.0
    %1954 = vmatprep.subr.mxu0 0.0
    %1955 = vmatpush1.msra.mxu0 0.0
    %1956 = vmatprep.subr.mxu0 0.0
    %1957 = vmatpush1.msra.mxu0 0.0
    %1958 = vmatprep.subr.mxu0 0.0
    %1959 = vmatpush1.msra.mxu0 0.0
    %1960 = vmatprep.subr.mxu0 0.0
    %1961 = vmatpush1.msra.mxu0 0.0
    %1962 = vmatprep.subr.mxu0 0.0
    %1963 = vmatpush1.msra.mxu0 0.0
    %1964 = vmatprep.subr.mxu0 0.0
    %1965 = vmatpush1.msra.mxu0 0.0
    %1966 = vmatprep.subr.mxu0 0.0
    %1967 = vmatpush1.msra.mxu0 0.0
    %1968 = vmatprep.subr.mxu0 0.0
    %1969 = vmatpush1.msra.mxu0 0.0
    %1970 = vmatprep.subr.mxu0 0.0
    %1971 = vmatpush1.msra.mxu0 0.0
    %1972 = vmatprep.subr.mxu0 0.0
    %1973 = vmatpush1.msra.mxu0 0.0
    %1974 = vmatprep.subr.mxu0 0.0
    %1975 = vmatpush1.msra.mxu0 0.0
    %1976 = vmatprep.subr.mxu0 0.0
    %1977 = vmatpush1.msra.mxu0 0.0
    %1978 = vmatprep.subr.mxu0 0.0
    %1979 = vmatpush1.msra.mxu0 0.0
    %1980 = vmatprep.subr.mxu0 0.0
    %1981 = vmatpush1.msra.mxu0 0.0
    %1982 = vmatprep.subr.mxu0 0.0
    %1983 = vmatpush1.msra.mxu0 0.0
    %1984 = vmatprep.subr.mxu0 0.0
    %1985 = vmatpush1.msra.mxu0 0.0
    %1986 = vmatprep.subr.mxu0 0.0
    %1987 = vmatpush1.msra.mxu0 0.0
    %1988 = vmatprep.subr.mxu0 0.0
    %1989 = vmatpush1.msra.mxu0 0.0
    %1990 = vmatprep.subr.mxu0 0.0
    %1991 = vmatpush1.msra.mxu0 0.0
    %1992 = vmatprep.mubr.f32.mxu0 0.0
    %1993 = vmatmul.mubr.f32.gmra.mrb[0].mxu0 %v1926
    %v1994 = vpop.f32.mrb[0].mxu0
    %v1995 = vadd.f32 %v323, %v1994
    %v1996 = vpop.f32.mrb[0].mxu0
    %1997 = vdwg.mxu0
    %v1998 = vmax.f32 %v1995, 0.0
    %v2000 = vsel %vm425, %v1998, 0
    %2002 = vmatprep.subr.mxu0 0.0
    %2003 = vmatpush1.msra.mxu0 %v695
    %2004 = vmatprep.subr.mxu0 0.0
    %2005 = vmatpush1.msra.mxu0 %v696
    %2006 = vmatprep.subr.mxu0 0.0
    %2007 = vmatpush1.msra.mxu0 %v697
    %2008 = vmatprep.subr.mxu0 0.0
    %2009 = vmatpush1.msra.mxu0 %v698
    %2010 = vmatprep.subr.mxu0 0.0
    %2011 = vmatpush1.msra.mxu0 0.0
    %2012 = vmatprep.subr.mxu0 0.0
    %2013 = vmatpush1.msra.mxu0 0.0
    %2014 = vmatprep.subr.mxu0 0.0
    %2015 = vmatpush1.msra.mxu0 0.0
    %2016 = vmatprep.subr.mxu0 0.0
    %2017 = vmatpush1.msra.mxu0 0.0
    %2018 = vmatprep.subr.mxu0 0.0
    %2019 = vmatpush1.msra.mxu0 0.0
    %2020 = vmatprep.subr.mxu0 0.0
    %2021 = vmatpush1.msra.mxu0 0.0
    %2022 = vmatprep.subr.mxu0 0.0
    %2023 = vmatpush1.msra.mxu0 0.0
    %2024 = vmatprep.subr.mxu0 0.0
    %2025 = vmatpush1.msra.mxu0 0.0
    %2026 = vmatprep.subr.mxu0 0.0
    %2027 = vmatpush1.msra.mxu0 0.0
    %2028 = vmatprep.subr.mxu0 0.0
    %2029 = vmatpush1.msra.mxu0 0.0
    %2030 = vmatprep.subr.mxu0 0.0
    %2031 = vmatpush1.msra.mxu0 0.0
    %2032 = vmatprep.subr.mxu0 0.0
    %2033 = vmatpush1.msra.mxu0 0.0
    %2034 = vmatprep.subr.mxu0 0.0
    %2035 = vmatpush1.msra.mxu0 0.0
    %2036 = vmatprep.subr.mxu0 0.0
    %2037 = vmatpush1.msra.mxu0 0.0
    %2038 = vmatprep.subr.mxu0 0.0
    %2039 = vmatpush1.msra.mxu0 0.0
    %2040 = vmatprep.subr.mxu0 0.0
    %2041 = vmatpush1.msra.mxu0 0.0
    %2042 = vmatprep.subr.mxu0 0.0
    %2043 = vmatpush1.msra.mxu0 0.0
    %2044 = vmatprep.subr.mxu0 0.0
    %2045 = vmatpush1.msra.mxu0 0.0
    %2046 = vmatprep.subr.mxu0 0.0
    %2047 = vmatpush1.msra.mxu0 0.0
    %2048 = vmatprep.subr.mxu0 0.0
    %2049 = vmatpush1.msra.mxu0 0.0
    %2050 = vmatprep.subr.mxu0 0.0
    %2051 = vmatpush1.msra.mxu0 0.0
    %2052 = vmatprep.subr.mxu0 0.0
    %2053 = vmatpush1.msra.mxu0 0.0
    %2054 = vmatprep.subr.mxu0 0.0
    %2055 = vmatpush1.msra.mxu0 0.0
    %2056 = vmatprep.subr.mxu0 0.0
    %2057 = vmatpush1.msra.mxu0 0.0
    %2058 = vmatprep.subr.mxu0 0.0
    %2059 = vmatpush1.msra.mxu0 0.0
    %2060 = vmatprep.subr.mxu0 0.0
    %2061 = vmatpush1.msra.mxu0 0.0
    %2062 = vmatprep.subr.mxu0 0.0
    %2063 = vmatpush1.msra.mxu0 0.0
    %2064 = vmatprep.subr.mxu0 0.0
    %2065 = vmatpush1.msra.mxu0 0.0
    %2066 = vmatprep.mubr.f32.mxu0 0.0
    %2067 = vmatmul.mubr.f32.gmra.mrb[0].mxu0 %v2000
    %v2068 = vpop.f32.mrb[0].mxu0
    %v2069 = vadd.f32 %v704, %v2068
    %v2070 = vpop.f32.mrb[0].mxu0
    %2071 = vdwg.mxu0
    %vm2072 = vcmp.gt.f32.partialorder %v2069, 20.0
    %v2073 = vmul.f32 %v2069, 1.442695
    %v2074 = vpow.pop %v2073
    %v2075 = vadd.f32 %v2074, 1.0
    %v2076 = vlog2.pop %v2075
    %v2077 = vmul.f32 %v2076, 0.6931472
    %v2078 = vmul.f32 -0.5, %v2074
    %v2079 = vadd.f32 %v2078, 1.0
    %v2080 = vmul.f32 %v2079, %v2074
    %v2081 = vand.u32 2147483647, %v2074
    %vm2082 = vcmp.lt.f32.partialorder %v2081, 0.0004427343
    %v2083 = vsel %vm2082, %v2080, %v2077
    %v2084 = vsel %vm2072, %v2069, %v2083
    %v2085 = vadd.f32 %v2084, 0.1
    %v2086 = vld [vmem:[%s4 + $0x18] sm:$0xff]
    %2088 = vrot.lane.b32.xlu0 %v2086, 8
    %v2089 = vpop.permute.xlu0 %2088
    %v2091 = vmul.f32 %v2085, %v2089
    %2093 = vrot.lane.b32.xlu0 %v2091, 120
    %v2094 = vpop.permute.xlu0 %2093
    %v2096 = vadd.f32 %v2069, %v2094
    %v2097 = vld [vmem:[%s2 + $0x18] sm:$0xff]
    %2099 = vset.pattern.permute.xlu0 0
    %2100 = vperm.xlu0 %2099, %v2097
    %v2101 = vpop.permute.xlu0 %2100
    %v2103 = vmul.f32 %v2096, %v2101
    %v2104 = vmul.f32 %v1922, %v2101
    %v2106 = vsel %vm339, %v2103, 0
    %2108 = vmatprep.subr.mxu0 0.0
    %2109 = vmatpush1.msra.mxu0 %v338
    %2110 = vmatprep.subr.mxu0 0.0
    %2111 = vmatpush1.msra.mxu0 0.0
    %2112 = vmatprep.subr.mxu0 0.0
    %2113 = vmatpush1.msra.mxu0 0.0
    %2114 = vmatprep.subr.mxu0 0.0
    %2115 = vmatpush1.msra.mxu0 0.0
    %2116 = vmatprep.subr.mxu0 0.0
    %2117 = vmatpush1.msra.mxu0 0.0
    %2118 = vmatprep.subr.mxu0 0.0
    %2119 = vmatpush1.msra.mxu0 0.0
    %2120 = vmatprep.subr.mxu0 0.0
    %2121 = vmatpush1.msra.mxu0 0.0
    %2122 = vmatprep.subr.mxu0 0.0
    %2123 = vmatpush1.msra.mxu0 0.0
    %2124 = vmatprep.subr.mxu0 0.0
    %2125 = vmatpush1.msra.mxu0 0.0
    %2126 = vmatprep.subr.mxu0 0.0
    %2127 = vmatpush1.msra.mxu0 0.0
    %2128 = vmatprep.subr.mxu0 0.0
    %2129 = vmatpush1.msra.mxu0 0.0
    %2130 = vmatprep.subr.mxu0 0.0
    %2131 = vmatpush1.msra.mxu0 0.0
    %2132 = vmatprep.subr.mxu0 0.0
    %2133 = vmatpush1.msra.mxu0 0.0
    %2134 = vmatprep.subr.mxu0 0.0
    %2135 = vmatpush1.msra.mxu0 0.0
    %2136 = vmatprep.subr.mxu0 0.0
    %2137 = vmatpush1.msra.mxu0 0.0
    %2138 = vmatprep.subr.mxu0 0.0
    %2139 = vmatpush1.msra.mxu0 0.0
    %2140 = vmatprep.subr.mxu0 0.0
    %2141 = vmatpush1.msra.mxu0 0.0
    %2142 = vmatprep.subr.mxu0 0.0
    %2143 = vmatpush1.msra.mxu0 0.0
    %2144 = vmatprep.subr.mxu0 0.0
    %2145 = vmatpush1.msra.mxu0 0.0
    %2146 = vmatprep.subr.mxu0 0.0
    %2147 = vmatpush1.msra.mxu0 0.0
    %2148 = vmatprep.subr.mxu0 0.0
    %2149 = vmatpush1.msra.mxu0 0.0
    %2150 = vmatprep.subr.mxu0 0.0
    %2151 = vmatpush1.msra.mxu0 0.0
    %2152 = vmatprep.subr.mxu0 0.0
    %2153 = vmatpush1.msra.mxu0 0.0
    %2154 = vmatprep.subr.mxu0 0.0
    %2155 = vmatpush1.msra.mxu0 0.0
    %2156 = vmatprep.subr.mxu0 0.0
    %2157 = vmatpush1.msra.mxu0 0.0
    %2158 = vmatprep.subr.mxu0 0.0
    %2159 = vmatpush1.msra.mxu0 0.0
    %2160 = vmatprep.subr.mxu0 0.0
    %2161 = vmatpush1.msra.mxu0 0.0
    %2162 = vmatprep.subr.mxu0 0.0
    %2163 = vmatpush1.msra.mxu0 0.0
    %2164 = vmatprep.subr.mxu0 0.0
    %2165 = vmatpush1.msra.mxu0 0.0
    %2166 = vmatprep.subr.mxu0 0.0
    %2167 = vmatpush1.msra.mxu0 0.0
    %2168 = vmatprep.subr.mxu0 0.0
    %2169 = vmatpush1.msra.mxu0 0.0
    %2170 = vmatprep.subr.mxu0 0.0
    %2171 = vmatpush1.msra.mxu0 0.0
    %2172 = vmatprep.mubr.f32.mxu0 0.0
    %2173 = vmatmul.mubr.f32.gmra.mrb[0].mxu0 %v2106
    %v2174 = vpop.f32.mrb[0].mxu0
    %v2175 = vadd.f32 %v199, %v2174
    %v2176 = vpop.f32.mrb[0].mxu0
    %2177 = vdwg.mxu0
    %v2178 = vmax.f32 %v2175, 0.0
    %v2180 = vsel %vm425, %v2178, 0
    %2182 = vmatprep.subr.mxu0 0.0
    %2183 = vmatpush1.msra.mxu0 %v414
    %2184 = vmatprep.subr.mxu0 0.0
    %2185 = vmatpush1.msra.mxu0 %v415
    %2186 = vmatprep.subr.mxu0 0.0
    %2187 = vmatpush1.msra.mxu0 %v416
    %2188 = vmatprep.subr.mxu0 0.0
    %2189 = vmatpush1.msra.mxu0 %v417
    %2190 = vmatprep.subr.mxu0 0.0
    %2191 = vmatpush1.msra.mxu0 0.0
    %2192 = vmatprep.subr.mxu0 0.0
    %2193 = vmatpush1.msra.mxu0 0.0
    %2194 = vmatprep.subr.mxu0 0.0
    %2195 = vmatpush1.msra.mxu0 0.0
    %2196 = vmatprep.subr.mxu0 0.0
    %2197 = vmatpush1.msra.mxu0 0.0
    %2198 = vmatprep.subr.mxu0 0.0
    %2199 = vmatpush1.msra.mxu0 0.0
    %2200 = vmatprep.subr.mxu0 0.0
    %2201 = vmatpush1.msra.mxu0 0.0
    %2202 = vmatprep.subr.mxu0 0.0
    %2203 = vmatpush1.msra.mxu0 0.0
    %2204 = vmatprep.subr.mxu0 0.0
    %2205 = vmatpush1.msra.mxu0 0.0
    %2206 = vmatprep.subr.mxu0 0.0
    %2207 = vmatpush1.msra.mxu0 0.0
    %2208 = vmatprep.subr.mxu0 0.0
    %2209 = vmatpush1.msra.mxu0 0.0
    %2210 = vmatprep.subr.mxu0 0.0
    %2211 = vmatpush1.msra.mxu0 0.0
    %2212 = vmatprep.subr.mxu0 0.0
    %2213 = vmatpush1.msra.mxu0 0.0
    %2214 = vmatprep.subr.mxu0 0.0
    %2215 = vmatpush1.msra.mxu0 0.0
    %2216 = vmatprep.subr.mxu0 0.0
    %2217 = vmatpush1.msra.mxu0 0.0
    %2218 = vmatprep.subr.mxu0 0.0
    %2219 = vmatpush1.msra.mxu0 0.0
    %2220 = vmatprep.subr.mxu0 0.0
    %2221 = vmatpush1.msra.mxu0 0.0
    %2222 = vmatprep.subr.mxu0 0.0
    %2223 = vmatpush1.msra.mxu0 0.0
    %2224 = vmatprep.subr.mxu0 0.0
    %2225 = vmatpush1.msra.mxu0 0.0
    %2226 = vmatprep.subr.mxu0 0.0
    %2227 = vmatpush1.msra.mxu0 0.0
    %2228 = vmatprep.subr.mxu0 0.0
    %2229 = vmatpush1.msra.mxu0 0.0
    %2230 = vmatprep.subr.mxu0 0.0
    %2231 = vmatpush1.msra.mxu0 0.0
    %2232 = vmatprep.subr.mxu0 0.0
    %2233 = vmatpush1.msra.mxu0 0.0
    %2234 = vmatprep.subr.mxu0 0.0
    %2235 = vmatpush1.msra.mxu0 0.0
    %2236 = vmatprep.subr.mxu0 0.0
    %2237 = vmatpush1.msra.mxu0 0.0
    %2238 = vmatprep.subr.mxu0 0.0
    %2239 = vmatpush1.msra.mxu0 0.0
    %2240 = vmatprep.subr.mxu0 0.0
    %2241 = vmatpush1.msra.mxu0 0.0
    %2242 = vmatprep.subr.mxu0 0.0
    %2243 = vmatpush1.msra.mxu0 0.0
    %2244 = vmatprep.subr.mxu0 0.0
    %2245 = vmatpush1.msra.mxu0 0.0
    %2246 = vmatprep.mubr.f32.mxu0 0.0
    %2247 = vmatmul.mubr.f32.gmra.mrb[0].mxu0 %v2180
    %v2248 = vpop.f32.mrb[0].mxu0
    %v2249 = vadd.f32 %v423, %v2248
    %v2250 = vpop.f32.mrb[0].mxu0
    %2251 = vdwg.mxu0
    %2253 = vrot.lane.b32.xlu0 %v2104, 96
    %v2254 = vpop.permute.xlu0 %2253
    %v2255 = vsel %vm425, %v2254, 0
    %2257 = vmatprep.subr.mxu0 0.0
    %2258 = vmatpush1.msra.mxu0 %v499
    %2259 = vmatprep.subr.mxu0 0.0
    %2260 = vmatpush1.msra.mxu0 %v500
    %2261 = vmatprep.subr.mxu0 0.0
    %2262 = vmatpush1.msra.mxu0 %v501
    %2263 = vmatprep.subr.mxu0 0.0
    %2264 = vmatpush1.msra.mxu0 %v502
    %2265 = vmatprep.subr.mxu0 0.0
    %2266 = vmatpush1.msra.mxu0 0.0
    %2267 = vmatprep.subr.mxu0 0.0
    %2268 = vmatpush1.msra.mxu0 0.0
    %2269 = vmatprep.subr.mxu0 0.0
    %2270 = vmatpush1.msra.mxu0 0.0
    %2271 = vmatprep.subr.mxu0 0.0
    %2272 = vmatpush1.msra.mxu0 0.0
    %2273 = vmatprep.subr.mxu0 0.0
    %2274 = vmatpush1.msra.mxu0 0.0
    %2275 = vmatprep.subr.mxu0 0.0
    %2276 = vmatpush1.msra.mxu0 0.0
    %2277 = vmatprep.subr.mxu0 0.0
    %2278 = vmatpush1.msra.mxu0 0.0
    %2279 = vmatprep.subr.mxu0 0.0
    %2280 = vmatpush1.msra.mxu0 0.0
    %2281 = vmatprep.subr.mxu0 0.0
    %2282 = vmatpush1.msra.mxu0 0.0
    %2283 = vmatprep.subr.mxu0 0.0
    %2284 = vmatpush1.msra.mxu0 0.0
    %2285 = vmatprep.subr.mxu0 0.0
    %2286 = vmatpush1.msra.mxu0 0.0
    %2287 = vmatprep.subr.mxu0 0.0
    %2288 = vmatpush1.msra.mxu0 0.0
    %2289 = vmatprep.subr.mxu0 0.0
    %2290 = vmatpush1.msra.mxu0 0.0
    %2291 = vmatprep.subr.mxu0 0.0
    %2292 = vmatpush1.msra.mxu0 0.0
    %2293 = vmatprep.subr.mxu0 0.0
    %2294 = vmatpush1.msra.mxu0 0.0
    %2295 = vmatprep.subr.mxu0 0.0
    %2296 = vmatpush1.msra.mxu0 0.0
    %2297 = vmatprep.subr.mxu0 0.0
    %2298 = vmatpush1.msra.mxu0 0.0
    %2299 = vmatprep.subr.mxu0 0.0
    %2300 = vmatpush1.msra.mxu0 0.0
    %2301 = vmatprep.subr.mxu0 0.0
    %2302 = vmatpush1.msra.mxu0 0.0
    %2303 = vmatprep.subr.mxu0 0.0
    %2304 = vmatpush1.msra.mxu0 0.0
    %2305 = vmatprep.subr.mxu0 0.0
    %2306 = vmatpush1.msra.mxu0 0.0
    %2307 = vmatprep.subr.mxu0 0.0
    %2308 = vmatpush1.msra.mxu0 0.0
    %2309 = vmatprep.subr.mxu0 0.0
    %2310 = vmatpush1.msra.mxu0 0.0
    %2311 = vmatprep.subr.mxu0 0.0
    %2312 = vmatpush1.msra.mxu0 0.0
    %2313 = vmatprep.subr.mxu0 0.0
    %2314 = vmatpush1.msra.mxu0 0.0
    %2315 = vmatprep.subr.mxu0 0.0
    %2316 = vmatpush1.msra.mxu0 0.0
    %2317 = vmatprep.subr.mxu0 0.0
    %2318 = vmatpush1.msra.mxu0 0.0
    %2319 = vmatprep.subr.mxu0 0.0
    %2320 = vmatpush1.msra.mxu0 0.0
    %2321 = vmatprep.mubr.f32.mxu0 0.0
    %2322 = vmatmul.mubr.f32.gmra.mrb[0].mxu0 %v2255
    %v2323 = vpop.f32.mrb[0].mxu0
    %v2324 = vadd.f32 0.0, %v2323
    %v2325 = vpop.f32.mrb[0].mxu0
    %2326 = vdwg.mxu0
    %v2327 = vadd.f32 %v2249, %v2324
    %v2328 = vxor.u32 %v2327, 2147483648
    %v2329 = vmul.f32 %v2328, 1.442695
    %v2330 = vpow.pop %v2329
    %v2331 = vadd.f32 %v2330, 1.0
    %v2332 = vrcp.pop %v2331
    %v2333 = vmul.f32 1.0, %v2332
    %v2334 = vadd.f32 %v2324, %v590
    %2336 = vrot.lane.b32.xlu0 %v2334, 64
    %v2337 = vpop.permute.xlu0 %2336
    %v2339 = vmul.f32 %v2333, %v2337
    %2341 = vrot.lane.b32.xlu0 %v2339, 64
    %v2342 = vpop.permute.xlu0 %2341
    %v2344 = vadd.f32 %v2249, %v2342
    %v2345 = vtanh.pop %v2344
    %v2346 = vsub.f32 1.0, %v2333
    %2348 = vrot.lane.b32.xlu0 %v2345, 96
    %v2349 = vpop.permute.xlu0 %2348
    %v2351 = vmul.f32 %v2346, %v2349
    %v2352 = vmul.f32 %v2333, %v2104
    %v2353 = vadd.f32 %v2351, %v2352
    %2355 = vrot.lane.b32.xlu0 %v2353, 96
    %v2356 = vpop.permute.xlu0 %2355
    %v2357 = vsel %vm425, %v2356, 0
    %2359 = vmatprep.subr.mxu0 0.0
    %2360 = vmatpush1.msra.mxu0 %v615
    %2361 = vmatprep.subr.mxu0 0.0
    %2362 = vmatpush1.msra.mxu0 %v616
    %2363 = vmatprep.subr.mxu0 0.0
    %2364 = vmatpush1.msra.mxu0 %v617
    %2365 = vmatprep.subr.mxu0 0.0
    %2366 = vmatpush1.msra.mxu0 %v618
    %2367 = vmatprep.subr.mxu0 0.0
    %2368 = vmatpush1.msra.mxu0 0.0
    %2369 = vmatprep.subr.mxu0 0.0
    %2370 = vmatpush1.msra.mxu0 0.0
    %2371 = vmatprep.subr.mxu0 0.0
    %2372 = vmatpush1.msra.mxu0 0.0
    %2373 = vmatprep.subr.mxu0 0.0
    %2374 = vmatpush1.msra.mxu0 0.0
    %2375 = vmatprep.subr.mxu0 0.0
    %2376 = vmatpush1.msra.mxu0 0.0
    %2377 = vmatprep.subr.mxu0 0.0
    %2378 = vmatpush1.msra.mxu0 0.0
    %2379 = vmatprep.subr.mxu0 0.0
    %2380 = vmatpush1.msra.mxu0 0.0
    %2381 = vmatprep.subr.mxu0 0.0
    %2382 = vmatpush1.msra.mxu0 0.0
    %2383 = vmatprep.subr.mxu0 0.0
    %2384 = vmatpush1.msra.mxu0 0.0
    %2385 = vmatprep.subr.mxu0 0.0
    %2386 = vmatpush1.msra.mxu0 0.0
    %2387 = vmatprep.subr.mxu0 0.0
    %2388 = vmatpush1.msra.mxu0 0.0
    %2389 = vmatprep.subr.mxu0 0.0
    %2390 = vmatpush1.msra.mxu0 0.0
    %2391 = vmatprep.subr.mxu0 0.0
    %2392 = vmatpush1.msra.mxu0 0.0
    %2393 = vmatprep.subr.mxu0 0.0
    %2394 = vmatpush1.msra.mxu0 0.0
    %2395 = vmatprep.subr.mxu0 0.0
    %2396 = vmatpush1.msra.mxu0 0.0
    %2397 = vmatprep.subr.mxu0 0.0
    %2398 = vmatpush1.msra.mxu0 0.0
    %2399 = vmatprep.subr.mxu0 0.0
    %2400 = vmatpush1.msra.mxu0 0.0
    %2401 = vmatprep.subr.mxu0 0.0
    %2402 = vmatpush1.msra.mxu0 0.0
    %2403 = vmatprep.subr.mxu0 0.0
    %2404 = vmatpush1.msra.mxu0 0.0
    %2405 = vmatprep.subr.mxu0 0.0
    %2406 = vmatpush1.msra.mxu0 0.0
    %2407 = vmatprep.subr.mxu0 0.0
    %2408 = vmatpush1.msra.mxu0 0.0
    %2409 = vmatprep.subr.mxu0 0.0
    %2410 = vmatpush1.msra.mxu0 0.0
    %2411 = vmatprep.subr.mxu0 0.0
    %2412 = vmatpush1.msra.mxu0 0.0
    %2413 = vmatprep.subr.mxu0 0.0
    %2414 = vmatpush1.msra.mxu0 0.0
    %2415 = vmatprep.subr.mxu0 0.0
    %2416 = vmatpush1.msra.mxu0 0.0
    %2417 = vmatprep.subr.mxu0 0.0
    %2418 = vmatpush1.msra.mxu0 0.0
    %2419 = vmatprep.subr.mxu0 0.0
    %2420 = vmatpush1.msra.mxu0 0.0
    %2421 = vmatprep.subr.mxu0 0.0
    %2422 = vmatpush1.msra.mxu0 0.0
    %2423 = vmatprep.mubr.f32.mxu0 0.0
    %2424 = vmatmul.mubr.f32.gmra.mrb[0].mxu0 %v2357
    %v2425 = vpop.f32.mrb[0].mxu0
    %v2426 = vadd.f32 %v328, %v2425
    %v2427 = vpop.f32.mrb[0].mxu0
    %2428 = vdwg.mxu0
    %v2429 = vmax.f32 %v2426, 0.0
    %v2431 = vsel %vm425, %v2429, 0
    %2433 = vmatprep.subr.mxu0 0.0
    %2434 = vmatpush1.msra.mxu0 %v695
    %2435 = vmatprep.subr.mxu0 0.0
    %2436 = vmatpush1.msra.mxu0 %v696
    %2437 = vmatprep.subr.mxu0 0.0
    %2438 = vmatpush1.msra.mxu0 %v697
    %2439 = vmatprep.subr.mxu0 0.0
    %2440 = vmatpush1.msra.mxu0 %v698
    %2441 = vmatprep.subr.mxu0 0.0
    %2442 = vmatpush1.msra.mxu0 0.0
    %2443 = vmatprep.subr.mxu0 0.0
    %2444 = vmatpush1.msra.mxu0 0.0
    %2445 = vmatprep.subr.mxu0 0.0
    %2446 = vmatpush1.msra.mxu0 0.0
    %2447 = vmatprep.subr.mxu0 0.0
    %2448 = vmatpush1.msra.mxu0 0.0
    %2449 = vmatprep.subr.mxu0 0.0
    %2450 = vmatpush1.msra.mxu0 0.0
    %2451 = vmatprep.subr.mxu0 0.0
    %2452 = vmatpush1.msra.mxu0 0.0
    %2453 = vmatprep.subr.mxu0 0.0
    %2454 = vmatpush1.msra.mxu0 0.0
    %2455 = vmatprep.subr.mxu0 0.0
    %2456 = vmatpush1.msra.mxu0 0.0
    %2457 = vmatprep.subr.mxu0 0.0
    %2458 = vmatpush1.msra.mxu0 0.0
    %2459 = vmatprep.subr.mxu0 0.0
    %2460 = vmatpush1.msra.mxu0 0.0
    %2461 = vmatprep.subr.mxu0 0.0
    %2462 = vmatpush1.msra.mxu0 0.0
    %2463 = vmatprep.subr.mxu0 0.0
    %2464 = vmatpush1.msra.mxu0 0.0
    %2465 = vmatprep.subr.mxu0 0.0
    %2466 = vmatpush1.msra.mxu0 0.0
    %2467 = vmatprep.subr.mxu0 0.0
    %2468 = vmatpush1.msra.mxu0 0.0
    %2469 = vmatprep.subr.mxu0 0.0
    %2470 = vmatpush1.msra.mxu0 0.0
    %2471 = vmatprep.subr.mxu0 0.0
    %2472 = vmatpush1.msra.mxu0 0.0
    %2473 = vmatprep.subr.mxu0 0.0
    %2474 = vmatpush1.msra.mxu0 0.0
    %2475 = vmatprep.subr.mxu0 0.0
    %2476 = vmatpush1.msra.mxu0 0.0
    %2477 = vmatprep.subr.mxu0 0.0
    %2478 = vmatpush1.msra.mxu0 0.0
    %2479 = vmatprep.subr.mxu0 0.0
    %2480 = vmatpush1.msra.mxu0 0.0
    %2481 = vmatprep.subr.mxu0 0.0
    %2482 = vmatpush1.msra.mxu0 0.0
    %2483 = vmatprep.subr.mxu0 0.0
    %2484 = vmatpush1.msra.mxu0 0.0
    %2485 = vmatprep.subr.mxu0 0.0
    %2486 = vmatpush1.msra.mxu0 0.0
    %2487 = vmatprep.subr.mxu0 0.0
    %2488 = vmatpush1.msra.mxu0 0.0
    %2489 = vmatprep.subr.mxu0 0.0
    %2490 = vmatpush1.msra.mxu0 0.0
    %2491 = vmatprep.subr.mxu0 0.0
    %2492 = vmatpush1.msra.mxu0 0.0
    %2493 = vmatprep.subr.mxu0 0.0
    %2494 = vmatpush1.msra.mxu0 0.0
    %2495 = vmatprep.subr.mxu0 0.0
    %2496 = vmatpush1.msra.mxu0 0.0
    %2497 = vmatprep.mubr.f32.mxu0 0.0
    %2498 = vmatmul.mubr.f32.gmra.mrb[0].mxu0 %v2431
    %v2499 = vpop.f32.mrb[0].mxu0
    %v2500 = vadd.f32 %v704, %v2499
    %v2501 = vpop.f32.mrb[0].mxu0
    %2502 = vdwg.mxu0
    %vm2503 = vcmp.gt.f32.partialorder %v2500, 20.0
    %v2504 = vmul.f32 %v2500, 1.442695
    %v2505 = vpow.pop %v2504
    %v2506 = vadd.f32 %v2505, 1.0
    %v2507 = vlog2.pop %v2506
    %v2508 = vmul.f32 %v2507, 0.6931472
    %v2509 = vmul.f32 -0.5, %v2505
    %v2510 = vadd.f32 %v2509, 1.0
    %v2511 = vmul.f32 %v2510, %v2505
    %v2512 = vand.u32 2147483647, %v2505
    %vm2513 = vcmp.lt.f32.partialorder %v2512, 0.0004427343
    %v2514 = vsel %vm2513, %v2511, %v2508
    %v2515 = vsel %vm2503, %v2500, %v2514
    %v2516 = vadd.f32 %v2515, 0.1
    %v2517 = vld [vmem:[%s4 + $0x20] sm:$0xff]
    %2519 = vrot.lane.b32.xlu0 %v2517, 8
    %v2520 = vpop.permute.xlu0 %2519
    %v2522 = vmul.f32 %v2516, %v2520
    %2524 = vrot.lane.b32.xlu0 %v2522, 120
    %v2525 = vpop.permute.xlu0 %2524
    %v2527 = vadd.f32 %v2500, %v2525
    %v2528 = vld [vmem:[%s2 + $0x20] sm:$0xff]
    %2530 = vset.pattern.permute.xlu0 0
    %2531 = vperm.xlu0 %2530, %v2528
    %v2532 = vpop.permute.xlu0 %2531
    %v2534 = vmul.f32 %v2527, %v2532
    %v2535 = vmul.f32 %v2353, %v2532
    %v2537 = vsel %vm339, %v2534, 0
    %2539 = vmatprep.subr.mxu0 0.0
    %2540 = vmatpush1.msra.mxu0 %v338
    %2541 = vmatprep.subr.mxu0 0.0
    %2542 = vmatpush1.msra.mxu0 0.0
    %2543 = vmatprep.subr.mxu0 0.0
    %2544 = vmatpush1.msra.mxu0 0.0
    %2545 = vmatprep.subr.mxu0 0.0
    %2546 = vmatpush1.msra.mxu0 0.0
    %2547 = vmatprep.subr.mxu0 0.0
    %2548 = vmatpush1.msra.mxu0 0.0
    %2549 = vmatprep.subr.mxu0 0.0
    %2550 = vmatpush1.msra.mxu0 0.0
    %2551 = vmatprep.subr.mxu0 0.0
    %2552 = vmatpush1.msra.mxu0 0.0
    %2553 = vmatprep.subr.mxu0 0.0
    %2554 = vmatpush1.msra.mxu0 0.0
    %2555 = vmatprep.subr.mxu0 0.0
    %2556 = vmatpush1.msra.mxu0 0.0
    %2557 = vmatprep.subr.mxu0 0.0
    %2558 = vmatpush1.msra.mxu0 0.0
    %2559 = vmatprep.subr.mxu0 0.0
    %2560 = vmatpush1.msra.mxu0 0.0
    %2561 = vmatprep.subr.mxu0 0.0
    %2562 = vmatpush1.msra.mxu0 0.0
    %2563 = vmatprep.subr.mxu0 0.0
    %2564 = vmatpush1.msra.mxu0 0.0
    %2565 = vmatprep.subr.mxu0 0.0
    %2566 = vmatpush1.msra.mxu0 0.0
    %2567 = vmatprep.subr.mxu0 0.0
    %2568 = vmatpush1.msra.mxu0 0.0
    %2569 = vmatprep.subr.mxu0 0.0
    %2570 = vmatpush1.msra.mxu0 0.0
    %2571 = vmatprep.subr.mxu0 0.0
    %2572 = vmatpush1.msra.mxu0 0.0
    %2573 = vmatprep.subr.mxu0 0.0
    %2574 = vmatpush1.msra.mxu0 0.0
    %2575 = vmatprep.subr.mxu0 0.0
    %2576 = vmatpush1.msra.mxu0 0.0
    %2577 = vmatprep.subr.mxu0 0.0
    %2578 = vmatpush1.msra.mxu0 0.0
    %2579 = vmatprep.subr.mxu0 0.0
    %2580 = vmatpush1.msra.mxu0 0.0
    %2581 = vmatprep.subr.mxu0 0.0
    %2582 = vmatpush1.msra.mxu0 0.0
    %2583 = vmatprep.subr.mxu0 0.0
    %2584 = vmatpush1.msra.mxu0 0.0
    %2585 = vmatprep.subr.mxu0 0.0
    %2586 = vmatpush1.msra.mxu0 0.0
    %2587 = vmatprep.subr.mxu0 0.0
    %2588 = vmatpush1.msra.mxu0 0.0
    %2589 = vmatprep.subr.mxu0 0.0
    %2590 = vmatpush1.msra.mxu0 0.0
    %2591 = vmatprep.subr.mxu0 0.0
    %2592 = vmatpush1.msra.mxu0 0.0
    %2593 = vmatprep.subr.mxu0 0.0
    %2594 = vmatpush1.msra.mxu0 0.0
    %2595 = vmatprep.subr.mxu0 0.0
    %2596 = vmatpush1.msra.mxu0 0.0
    %2597 = vmatprep.subr.mxu0 0.0
    %2598 = vmatpush1.msra.mxu0 0.0
    %2599 = vmatprep.subr.mxu0 0.0
    %2600 = vmatpush1.msra.mxu0 0.0
    %2601 = vmatprep.subr.mxu0 0.0
    %2602 = vmatpush1.msra.mxu0 0.0
    %2603 = vmatprep.mubr.f32.mxu0 0.0
    %2604 = vmatmul.mubr.f32.gmra.mrb[0].mxu0 %v2537
    %v2605 = vpop.f32.mrb[0].mxu0
    %v2606 = vadd.f32 %v204, %v2605
    %v2607 = vpop.f32.mrb[0].mxu0
    %2608 = vdwg.mxu0
    %v2609 = vmax.f32 %v2606, 0.0
    %v2611 = vsel %vm425, %v2609, 0
    %2613 = vmatprep.subr.mxu0 0.0
    %2614 = vmatpush1.msra.mxu0 %v414
    %2615 = vmatprep.subr.mxu0 0.0
    %2616 = vmatpush1.msra.mxu0 %v415
    %2617 = vmatprep.subr.mxu0 0.0
    %2618 = vmatpush1.msra.mxu0 %v416
    %2619 = vmatprep.subr.mxu0 0.0
    %2620 = vmatpush1.msra.mxu0 %v417
    %2621 = vmatprep.subr.mxu0 0.0
    %2622 = vmatpush1.msra.mxu0 0.0
    %2623 = vmatprep.subr.mxu0 0.0
    %2624 = vmatpush1.msra.mxu0 0.0
    %2625 = vmatprep.subr.mxu0 0.0
    %2626 = vmatpush1.msra.mxu0 0.0
    %2627 = vmatprep.subr.mxu0 0.0
    %2628 = vmatpush1.msra.mxu0 0.0
    %2629 = vmatprep.subr.mxu0 0.0
    %2630 = vmatpush1.msra.mxu0 0.0
    %2631 = vmatprep.subr.mxu0 0.0
    %2632 = vmatpush1.msra.mxu0 0.0
    %2633 = vmatprep.subr.mxu0 0.0
    %2634 = vmatpush1.msra.mxu0 0.0
    %2635 = vmatprep.subr.mxu0 0.0
    %2636 = vmatpush1.msra.mxu0 0.0
    %2637 = vmatprep.subr.mxu0 0.0
    %2638 = vmatpush1.msra.mxu0 0.0
    %2639 = vmatprep.subr.mxu0 0.0
    %2640 = vmatpush1.msra.mxu0 0.0
    %2641 = vmatprep.subr.mxu0 0.0
    %2642 = vmatpush1.msra.mxu0 0.0
    %2643 = vmatprep.subr.mxu0 0.0
    %2644 = vmatpush1.msra.mxu0 0.0
    %2645 = vmatprep.subr.mxu0 0.0
    %2646 = vmatpush1.msra.mxu0 0.0
    %2647 = vmatprep.subr.mxu0 0.0
    %2648 = vmatpush1.msra.mxu0 0.0
    %2649 = vmatprep.subr.mxu0 0.0
    %2650 = vmatpush1.msra.mxu0 0.0
    %2651 = vmatprep.subr.mxu0 0.0
    %2652 = vmatpush1.msra.mxu0 0.0
    %2653 = vmatprep.subr.mxu0 0.0
    %2654 = vmatpush1.msra.mxu0 0.0
    %2655 = vmatprep.subr.mxu0 0.0
    %2656 = vmatpush1.msra.mxu0 0.0
    %2657 = vmatprep.subr.mxu0 0.0
    %2658 = vmatpush1.msra.mxu0 0.0
    %2659 = vmatprep.subr.mxu0 0.0
    %2660 = vmatpush1.msra.mxu0 0.0
    %2661 = vmatprep.subr.mxu0 0.0
    %2662 = vmatpush1.msra.mxu0 0.0
    %2663 = vmatprep.subr.mxu0 0.0
    %2664 = vmatpush1.msra.mxu0 0.0
    %2665 = vmatprep.subr.mxu0 0.0
    %2666 = vmatpush1.msra.mxu0 0.0
    %2667 = vmatprep.subr.mxu0 0.0
    %2668 = vmatpush1.msra.mxu0 0.0
    %2669 = vmatprep.subr.mxu0 0.0
    %2670 = vmatpush1.msra.mxu0 0.0
    %2671 = vmatprep.subr.mxu0 0.0
    %2672 = vmatpush1.msra.mxu0 0.0
    %2673 = vmatprep.subr.mxu0 0.0
    %2674 = vmatpush1.msra.mxu0 0.0
    %2675 = vmatprep.subr.mxu0 0.0
    %2676 = vmatpush1.msra.mxu0 0.0
    %2677 = vmatprep.mubr.f32.mxu0 0.0
    %2678 = vmatmul.mubr.f32.gmra.mrb[0].mxu0 %v2611
    %v2679 = vpop.f32.mrb[0].mxu0
    %v2680 = vadd.f32 %v423, %v2679
    %v2681 = vpop.f32.mrb[0].mxu0
    %2682 = vdwg.mxu0
    %2684 = vrot.lane.b32.xlu0 %v2535, 96
    %v2685 = vpop.permute.xlu0 %2684
    %v2686 = vsel %vm425, %v2685, 0
    %2688 = vmatprep.subr.mxu0 0.0
    %2689 = vmatpush1.msra.mxu0 %v499
    %2690 = vmatprep.subr.mxu0 0.0
    %2691 = vmatpush1.msra.mxu0 %v500
    %2692 = vmatprep.subr.mxu0 0.0
    %2693 = vmatpush1.msra.mxu0 %v501
    %2694 = vmatprep.subr.mxu0 0.0
    %2695 = vmatpush1.msra.mxu0 %v502
    %2696 = vmatprep.subr.mxu0 0.0
    %2697 = vmatpush1.msra.mxu0 0.0
    %2698 = vmatprep.subr.mxu0 0.0
    %2699 = vmatpush1.msra.mxu0 0.0
    %2700 = vmatprep.subr.mxu0 0.0
    %2701 = vmatpush1.msra.mxu0 0.0
    %2702 = vmatprep.subr.mxu0 0.0
    %2703 = vmatpush1.msra.mxu0 0.0
    %2704 = vmatprep.subr.mxu0 0.0
    %2705 = vmatpush1.msra.mxu0 0.0
    %2706 = vmatprep.subr.mxu0 0.0
    %2707 = vmatpush1.msra.mxu0 0.0
    %2708 = vmatprep.subr.mxu0 0.0
    %2709 = vmatpush1.msra.mxu0 0.0
    %2710 = vmatprep.subr.mxu0 0.0
    %2711 = vmatpush1.msra.mxu0 0.0
    %2712 = vmatprep.subr.mxu0 0.0
    %2713 = vmatpush1.msra.mxu0 0.0
    %2714 = vmatprep.subr.mxu0 0.0
    %2715 = vmatpush1.msra.mxu0 0.0
    %2716 = vmatprep.subr.mxu0 0.0
    %2717 = vmatpush1.msra.mxu0 0.0
    %2718 = vmatprep.subr.mxu0 0.0
    %2719 = vmatpush1.msra.mxu0 0.0
    %2720 = vmatprep.subr.mxu0 0.0
    %2721 = vmatpush1.msra.mxu0 0.0
    %2722 = vmatprep.subr.mxu0 0.0
    %2723 = vmatpush1.msra.mxu0 0.0
    %2724 = vmatprep.subr.mxu0 0.0
    %2725 = vmatpush1.msra.mxu0 0.0
    %2726 = vmatprep.subr.mxu0 0.0
    %2727 = vmatpush1.msra.mxu0 0.0
    %2728 = vmatprep.subr.mxu0 0.0
    %2729 = vmatpush1.msra.mxu0 0.0
    %2730 = vmatprep.subr.mxu0 0.0
    %2731 = vmatpush1.msra.mxu0 0.0
    %2732 = vmatprep.subr.mxu0 0.0
    %2733 = vmatpush1.msra.mxu0 0.0
    %2734 = vmatprep.subr.mxu0 0.0
    %2735 = vmatpush1.msra.mxu0 0.0
    %2736 = vmatprep.subr.mxu0 0.0
    %2737 = vmatpush1.msra.mxu0 0.0
    %2738 = vmatprep.subr.mxu0 0.0
    %2739 = vmatpush1.msra.mxu0 0.0
    %2740 = vmatprep.subr.mxu0 0.0
    %2741 = vmatpush1.msra.mxu0 0.0
    %2742 = vmatprep.subr.mxu0 0.0
    %2743 = vmatpush1.msra.mxu0 0.0
    %2744 = vmatprep.subr.mxu0 0.0
    %2745 = vmatpush1.msra.mxu0 0.0
    %2746 = vmatprep.subr.mxu0 0.0
    %2747 = vmatpush1.msra.mxu0 0.0
    %2748 = vmatprep.subr.mxu0 0.0
    %2749 = vmatpush1.msra.mxu0 0.0
    %2750 = vmatprep.subr.mxu0 0.0
    %2751 = vmatpush1.msra.mxu0 0.0
    %2752 = vmatprep.mubr.f32.mxu0 0.0
    %2753 = vmatmul.mubr.f32.gmra.mrb[0].mxu0 %v2686
    %v2754 = vpop.f32.mrb[0].mxu0
    %v2755 = vadd.f32 0.0, %v2754
    %v2756 = vpop.f32.mrb[0].mxu0
    %2757 = vdwg.mxu0
    %v2758 = vadd.f32 %v2680, %v2755
    %v2759 = vxor.u32 %v2758, 2147483648
    %v2760 = vmul.f32 %v2759, 1.442695
    %v2761 = vpow.pop %v2760
    %v2762 = vadd.f32 %v2761, 1.0
    %v2763 = vrcp.pop %v2762
    %v2764 = vmul.f32 1.0, %v2763
    %v2765 = vadd.f32 %v2755, %v590
    %2767 = vrot.lane.b32.xlu0 %v2765, 64
    %v2768 = vpop.permute.xlu0 %2767
    %v2770 = vmul.f32 %v2764, %v2768
    %2772 = vrot.lane.b32.xlu0 %v2770, 64
    %v2773 = vpop.permute.xlu0 %2772
    %v2775 = vadd.f32 %v2680, %v2773
    %v2776 = vtanh.pop %v2775
    %v2777 = vsub.f32 1.0, %v2764
    %2779 = vrot.lane.b32.xlu0 %v2776, 96
    %v2780 = vpop.permute.xlu0 %2779
    %v2782 = vmul.f32 %v2777, %v2780
    %v2783 = vmul.f32 %v2764, %v2535
    %v2784 = vadd.f32 %v2782, %v2783
    %2786 = vrot.lane.b32.xlu0 %v2784, 96
    %v2787 = vpop.permute.xlu0 %2786
    %v2788 = vsel %vm425, %v2787, 0
    %2790 = vmatprep.subr.mxu0 0.0
    %2791 = vmatpush1.msra.mxu0 %v615
    %2792 = vmatprep.subr.mxu0 0.0
    %2793 = vmatpush1.msra.mxu0 %v616
    %2794 = vmatprep.subr.mxu0 0.0
    %2795 = vmatpush1.msra.mxu0 %v617
    %2796 = vmatprep.subr.mxu0 0.0
    %2797 = vmatpush1.msra.mxu0 %v618
    %2798 = vmatprep.subr.mxu0 0.0
    %2799 = vmatpush1.msra.mxu0 0.0
    %2800 = vmatprep.subr.mxu0 0.0
    %2801 = vmatpush1.msra.mxu0 0.0
    %2802 = vmatprep.subr.mxu0 0.0
    %2803 = vmatpush1.msra.mxu0 0.0
    %2804 = vmatprep.subr.mxu0 0.0
    %2805 = vmatpush1.msra.mxu0 0.0
    %2806 = vmatprep.subr.mxu0 0.0
    %2807 = vmatpush1.msra.mxu0 0.0
    %2808 = vmatprep.subr.mxu0 0.0
    %2809 = vmatpush1.msra.mxu0 0.0
    %2810 = vmatprep.subr.mxu0 0.0
    %2811 = vmatpush1.msra.mxu0 0.0
    %2812 = vmatprep.subr.mxu0 0.0
    %2813 = vmatpush1.msra.mxu0 0.0
    %2814 = vmatprep.subr.mxu0 0.0
    %2815 = vmatpush1.msra.mxu0 0.0
    %2816 = vmatprep.subr.mxu0 0.0
    %2817 = vmatpush1.msra.mxu0 0.0
    %2818 = vmatprep.subr.mxu0 0.0
    %2819 = vmatpush1.msra.mxu0 0.0
    %2820 = vmatprep.subr.mxu0 0.0
    %2821 = vmatpush1.msra.mxu0 0.0
    %2822 = vmatprep.subr.mxu0 0.0
    %2823 = vmatpush1.msra.mxu0 0.0
    %2824 = vmatprep.subr.mxu0 0.0
    %2825 = vmatpush1.msra.mxu0 0.0
    %2826 = vmatprep.subr.mxu0 0.0
    %2827 = vmatpush1.msra.mxu0 0.0
    %2828 = vmatprep.subr.mxu0 0.0
    %2829 = vmatpush1.msra.mxu0 0.0
    %2830 = vmatprep.subr.mxu0 0.0
    %2831 = vmatpush1.msra.mxu0 0.0
    %2832 = vmatprep.subr.mxu0 0.0
    %2833 = vmatpush1.msra.mxu0 0.0
    %2834 = vmatprep.subr.mxu0 0.0
    %2835 = vmatpush1.msra.mxu0 0.0
    %2836 = vmatprep.subr.mxu0 0.0
    %2837 = vmatpush1.msra.mxu0 0.0
    %2838 = vmatprep.subr.mxu0 0.0
    %2839 = vmatpush1.msra.mxu0 0.0
    %2840 = vmatprep.subr.mxu0 0.0
    %2841 = vmatpush1.msra.mxu0 0.0
    %2842 = vmatprep.subr.mxu0 0.0
    %2843 = vmatpush1.msra.mxu0 0.0
    %2844 = vmatprep.subr.mxu0 0.0
    %2845 = vmatpush1.msra.mxu0 0.0
    %2846 = vmatprep.subr.mxu0 0.0
    %2847 = vmatpush1.msra.mxu0 0.0
    %2848 = vmatprep.subr.mxu0 0.0
    %2849 = vmatpush1.msra.mxu0 0.0
    %2850 = vmatprep.subr.mxu0 0.0
    %2851 = vmatpush1.msra.mxu0 0.0
    %2852 = vmatprep.subr.mxu0 0.0
    %2853 = vmatpush1.msra.mxu0 0.0
    %2854 = vmatprep.mubr.f32.mxu0 0.0
    %2855 = vmatmul.mubr.f32.gmra.mrb[0].mxu0 %v2788
    %v2856 = vpop.f32.mrb[0].mxu0
    %v2857 = vadd.f32 %v333, %v2856
    %v2858 = vpop.f32.mrb[0].mxu0
    %2859 = vdwg.mxu0
    %v2860 = vmax.f32 %v2857, 0.0
    %v2862 = vsel %vm425, %v2860, 0
    %2864 = vmatprep.subr.mxu0 0.0
    %2865 = vmatpush1.msra.mxu0 %v695
    %2866 = vmatprep.subr.mxu0 0.0
    %2867 = vmatpush1.msra.mxu0 %v696
    %2868 = vmatprep.subr.mxu0 0.0
    %2869 = vmatpush1.msra.mxu0 %v697
    %2870 = vmatprep.subr.mxu0 0.0
    %2871 = vmatpush1.msra.mxu0 %v698
    %2872 = vmatprep.subr.mxu0 0.0
    %2873 = vmatpush1.msra.mxu0 0.0
    %2874 = vmatprep.subr.mxu0 0.0
    %2875 = vmatpush1.msra.mxu0 0.0
    %2876 = vmatprep.subr.mxu0 0.0
    %2877 = vmatpush1.msra.mxu0 0.0
    %2878 = vmatprep.subr.mxu0 0.0
    %2879 = vmatpush1.msra.mxu0 0.0
    %2880 = vmatprep.subr.mxu0 0.0
    %2881 = vmatpush1.msra.mxu0 0.0
    %2882 = vmatprep.subr.mxu0 0.0
    %2883 = vmatpush1.msra.mxu0 0.0
    %2884 = vmatprep.subr.mxu0 0.0
    %2885 = vmatpush1.msra.mxu0 0.0
    %2886 = vmatprep.subr.mxu0 0.0
    %2887 = vmatpush1.msra.mxu0 0.0
    %2888 = vmatprep.subr.mxu0 0.0
    %2889 = vmatpush1.msra.mxu0 0.0
    %2890 = vmatprep.subr.mxu0 0.0
    %2891 = vmatpush1.msra.mxu0 0.0
    %2892 = vmatprep.subr.mxu0 0.0
    %2893 = vmatpush1.msra.mxu0 0.0
    %2894 = vmatprep.subr.mxu0 0.0
    %2895 = vmatpush1.msra.mxu0 0.0
    %2896 = vmatprep.subr.mxu0 0.0
    %2897 = vmatpush1.msra.mxu0 0.0
    %2898 = vmatprep.subr.mxu0 0.0
    %2899 = vmatpush1.msra.mxu0 0.0
    %2900 = vmatprep.subr.mxu0 0.0
    %2901 = vmatpush1.msra.mxu0 0.0
    %2902 = vmatprep.subr.mxu0 0.0
    %2903 = vmatpush1.msra.mxu0 0.0
    %2904 = vmatprep.subr.mxu0 0.0
    %2905 = vmatpush1.msra.mxu0 0.0
    %2906 = vmatprep.subr.mxu0 0.0
    %2907 = vmatpush1.msra.mxu0 0.0
    %2908 = vmatprep.subr.mxu0 0.0
    %2909 = vmatpush1.msra.mxu0 0.0
    %2910 = vmatprep.subr.mxu0 0.0
    %2911 = vmatpush1.msra.mxu0 0.0
    %2912 = vmatprep.subr.mxu0 0.0
    %2913 = vmatpush1.msra.mxu0 0.0
    %2914 = vmatprep.subr.mxu0 0.0
    %2915 = vmatpush1.msra.mxu0 0.0
    %2916 = vmatprep.subr.mxu0 0.0
    %2917 = vmatpush1.msra.mxu0 0.0
    %2918 = vmatprep.subr.mxu0 0.0
    %2919 = vmatpush1.msra.mxu0 0.0
    %2920 = vmatprep.subr.mxu0 0.0
    %2921 = vmatpush1.msra.mxu0 0.0
    %2922 = vmatprep.subr.mxu0 0.0
    %2923 = vmatpush1.msra.mxu0 0.0
    %2924 = vmatprep.subr.mxu0 0.0
    %2925 = vmatpush1.msra.mxu0 0.0
    %2926 = vmatprep.subr.mxu0 0.0
    %2927 = vmatpush1.msra.mxu0 0.0
    %2928 = vmatprep.mubr.f32.mxu0 0.0
    %2929 = vmatmul.mubr.f32.gmra.mrb[0].mxu0 %v2862
    %v2930 = vpop.f32.mrb[0].mxu0
    %v2931 = vadd.f32 %v704, %v2930
    %v2932 = vpop.f32.mrb[0].mxu0
    %2933 = vdwg.mxu0
    %vm2934 = vcmp.gt.f32.partialorder %v2931, 20.0
    %v2935 = vmul.f32 %v2931, 1.442695
    %v2936 = vpow.pop %v2935
    %v2937 = vadd.f32 %v2936, 1.0
    %v2938 = vlog2.pop %v2937
    %v2939 = vmul.f32 %v2938, 0.6931472
    %v2940 = vmul.f32 -0.5, %v2936
    %v2941 = vadd.f32 %v2940, 1.0
    %v2942 = vmul.f32 %v2941, %v2936
    %v2943 = vand.u32 2147483647, %v2936
    %vm2944 = vcmp.lt.f32.partialorder %v2943, 0.0004427343
    %v2945 = vsel %vm2944, %v2942, %v2939
    %v2946 = vsel %vm2934, %v2931, %v2945
    %v2947 = vadd.f32 %v2946, 0.1
    %v2948 = vld [vmem:[%s4 + $0x28] sm:$0xff]
    %2950 = vrot.lane.b32.xlu0 %v2948, 8
    %v2951 = vpop.permute.xlu0 %2950
    %v2953 = vmul.f32 %v2947, %v2951
    %2955 = vrot.lane.b32.xlu0 %v2953, 120
    %v2956 = vpop.permute.xlu0 %2955
    %v2958 = vadd.f32 %v2931, %v2956
    %v2959 = vld [vmem:[%s14] sm:$0xff]
    %v2960 = vld [vmem:[%s14 + $0x8] sm:$0xff]
    %v2961 = vld [vmem:[%s14 + $0x10] sm:$0xff]
    %v2962 = vld [vmem:[%s14 + $0x18] sm:$0xff]
    %v2963 = vld [vmem:[%s15] sm:$0x1]
    %v2965 = vlaneseq
    %v2966 = vshrl.u32 %v2965, 7
    %v2967 = vsub.s32 0, %v2966
    %v2968 = vrot.slane %v2963, %v2967
    %2970 = vmatprep.subr.mxu0 0.0
    %2971 = vmatpush1.msra.mxu0 %v2959
    %2972 = vmatprep.subr.mxu0 0.0
    %2973 = vmatpush1.msra.mxu0 %v2960
    %2974 = vmatprep.subr.mxu0 0.0
    %2975 = vmatpush1.msra.mxu0 %v2961
    %2976 = vmatprep.subr.mxu0 0.0
    %2977 = vmatpush1.msra.mxu0 %v2962
    %2978 = vmatprep.subr.mxu0 0.0
    %2979 = vmatpush1.msra.mxu0 0.0
    %2980 = vmatprep.subr.mxu0 0.0
    %2981 = vmatpush1.msra.mxu0 0.0
    %2982 = vmatprep.subr.mxu0 0.0
    %2983 = vmatpush1.msra.mxu0 0.0
    %2984 = vmatprep.subr.mxu0 0.0
    %2985 = vmatpush1.msra.mxu0 0.0
    %2986 = vmatprep.subr.mxu0 0.0
    %2987 = vmatpush1.msra.mxu0 0.0
    %2988 = vmatprep.subr.mxu0 0.0
    %2989 = vmatpush1.msra.mxu0 0.0
    %2990 = vmatprep.subr.mxu0 0.0
    %2991 = vmatpush1.msra.mxu0 0.0
    %2992 = vmatprep.subr.mxu0 0.0
    %2993 = vmatpush1.msra.mxu0 0.0
    %2994 = vmatprep.subr.mxu0 0.0
    %2995 = vmatpush1.msra.mxu0 0.0
    %2996 = vmatprep.subr.mxu0 0.0
    %2997 = vmatpush1.msra.mxu0 0.0
    %2998 = vmatprep.subr.mxu0 0.0
    %2999 = vmatpush1.msra.mxu0 0.0
    %3000 = vmatprep.subr.mxu0 0.0
    %3001 = vmatpush1.msra.mxu0 0.0
    %3002 = vmatprep.subr.mxu0 0.0
    %3003 = vmatpush1.msra.mxu0 0.0
    %3004 = vmatprep.subr.mxu0 0.0
    %3005 = vmatpush1.msra.mxu0 0.0
    %3006 = vmatprep.subr.mxu0 0.0
    %3007 = vmatpush1.msra.mxu0 0.0
    %3008 = vmatprep.subr.mxu0 0.0
    %3009 = vmatpush1.msra.mxu0 0.0
    %3010 = vmatprep.subr.mxu0 0.0
    %3011 = vmatpush1.msra.mxu0 0.0
    %3012 = vmatprep.subr.mxu0 0.0
    %3013 = vmatpush1.msra.mxu0 0.0
    %3014 = vmatprep.subr.mxu0 0.0
    %3015 = vmatpush1.msra.mxu0 0.0
    %3016 = vmatprep.subr.mxu0 0.0
    %3017 = vmatpush1.msra.mxu0 0.0
    %3018 = vmatprep.subr.mxu0 0.0
    %3019 = vmatpush1.msra.mxu0 0.0
    %3020 = vmatprep.subr.mxu0 0.0
    %3021 = vmatpush1.msra.mxu0 0.0
    %3022 = vmatprep.subr.mxu0 0.0
    %3023 = vmatpush1.msra.mxu0 0.0
    %3024 = vmatprep.subr.mxu0 0.0
    %3025 = vmatpush1.msra.mxu0 0.0
    %3026 = vmatprep.subr.mxu0 0.0
    %3027 = vmatpush1.msra.mxu0 0.0
    %3028 = vmatprep.subr.mxu0 0.0
    %3029 = vmatpush1.msra.mxu0 0.0
    %3030 = vmatprep.subr.mxu0 0.0
    %3031 = vmatpush1.msra.mxu0 0.0
    %3032 = vmatprep.subr.mxu0 0.0
    %3033 = vmatpush1.msra.mxu0 0.0
    %3034 = vmatprep.mubr.f32.mxu0 0.0
    %3035 = vmatmul.mubr.f32.gmra.mrb[0].mxu0 %v622
    %v3036 = vpop.f32.mrb[0].mxu0
    %v3037 = vadd.f32 %v2968, %v3036
    %v3038 = vpop.f32.mrb[0].mxu0
    %3039 = vmatprep.mubr.f32.mxu0 0.0
    %3040 = vmatmul.mubr.f32.gmra.mrb[0].mxu0 %v1064
    %v3041 = vpop.f32.mrb[0].mxu0
    %v3042 = vadd.f32 %v2968, %v3041
    %v3043 = vpop.f32.mrb[0].mxu0
    %3044 = vmatprep.mubr.f32.mxu0 0.0
    %3045 = vmatmul.mubr.f32.gmra.mrb[0].mxu0 %v1495
    %v3046 = vpop.f32.mrb[0].mxu0
    %v3047 = vadd.f32 %v2968, %v3046
    %v3048 = vpop.f32.mrb[0].mxu0
    %3049 = vmatprep.mubr.f32.mxu0 0.0
    %3050 = vmatmul.mubr.f32.gmra.mrb[0].mxu0 %v1926
    %v3051 = vpop.f32.mrb[0].mxu0
    %v3052 = vadd.f32 %v2968, %v3051
    %v3053 = vpop.f32.mrb[0].mxu0
    %3054 = vmatprep.mubr.f32.mxu0 0.0
    %3055 = vmatmul.mubr.f32.gmra.mrb[0].mxu0 %v2357
    %v3056 = vpop.f32.mrb[0].mxu0
    %v3057 = vadd.f32 %v2968, %v3056
    %v3058 = vpop.f32.mrb[0].mxu0
    %3059 = vmatprep.mubr.f32.mxu0 0.0
    %3060 = vmatmul.mubr.f32.gmra.mrb[0].mxu0 %v2788
    %v3061 = vpop.f32.mrb[0].mxu0
    %v3062 = vadd.f32 %v2968, %v3061
    %v3063 = vpop.f32.mrb[0].mxu0
    %3064 = vdwg.mxu0
    %v3065 = vmax.f32 %v3037, 0.0
    %v3066 = vmax.f32 %v3042, 0.0
    %v3067 = vmax.f32 %v3047, 0.0
    %v3068 = vmax.f32 %v3052, 0.0
    %v3069 = vmax.f32 %v3057, 0.0
    %v3070 = vmax.f32 %v3062, 0.0
    %v3071 = vld [vmem:[%s16] sm:$0xff]
    %v3072 = vld [vmem:[%s16 + $0x8] sm:$0xff]
    %v3073 = vld [vmem:[%s16 + $0x10] sm:$0xff]
    %v3074 = vld [vmem:[%s16 + $0x18] sm:$0xff]
    %v3075 = vld [vmem:[%s17] sm:$0x1]
    %v3077 = vlaneseq
    %v3078 = vshrl.u32 %v3077, 7
    %v3079 = vsub.s32 0, %v3078
    %v3080 = vrot.slane %v3075, %v3079
    %v3083 = vsel %vm425, %v3065, 0
    %v3086 = vsel %vm425, %v3066, 0
    %v3089 = vsel %vm425, %v3067, 0
    %v3092 = vsel %vm425, %v3068, 0
    %v3095 = vsel %vm425, %v3069, 0
    %v3098 = vsel %vm425, %v3070, 0
    %3100 = vmatprep.subr.mxu0 0.0
    %3101 = vmatpush1.msra.mxu0 %v3071
    %3102 = vmatprep.subr.mxu0 0.0
    %3103 = vmatpush1.msra.mxu0 %v3072
    %3104 = vmatprep.subr.mxu0 0.0
    %3105 = vmatpush1.msra.mxu0 %v3073
    %3106 = vmatprep.subr.mxu0 0.0
    %3107 = vmatpush1.msra.mxu0 %v3074
    %3108 = vmatprep.subr.mxu0 0.0
    %3109 = vmatpush1.msra.mxu0 0.0
    %3110 = vmatprep.subr.mxu0 0.0
    %3111 = vmatpush1.msra.mxu0 0.0
    %3112 = vmatprep.subr.mxu0 0.0
    %3113 = vmatpush1.msra.mxu0 0.0
    %3114 = vmatprep.subr.mxu0 0.0
    %3115 = vmatpush1.msra.mxu0 0.0
    %3116 = vmatprep.subr.mxu0 0.0
    %3117 = vmatpush1.msra.mxu0 0.0
    %3118 = vmatprep.subr.mxu0 0.0
    %3119 = vmatpush1.msra.mxu0 0.0
    %3120 = vmatprep.subr.mxu0 0.0
    %3121 = vmatpush1.msra.mxu0 0.0
    %3122 = vmatprep.subr.mxu0 0.0
    %3123 = vmatpush1.msra.mxu0 0.0
    %3124 = vmatprep.subr.mxu0 0.0
    %3125 = vmatpush1.msra.mxu0 0.0
    %3126 = vmatprep.subr.mxu0 0.0
    %3127 = vmatpush1.msra.mxu0 0.0
    %3128 = vmatprep.subr.mxu0 0.0
    %3129 = vmatpush1.msra.mxu0 0.0
    %3130 = vmatprep.subr.mxu0 0.0
    %3131 = vmatpush1.msra.mxu0 0.0
    %3132 = vmatprep.subr.mxu0 0.0
    %3133 = vmatpush1.msra.mxu0 0.0
    %3134 = vmatprep.subr.mxu0 0.0
    %3135 = vmatpush1.msra.mxu0 0.0
    %3136 = vmatprep.subr.mxu0 0.0
    %3137 = vmatpush1.msra.mxu0 0.0
    %3138 = vmatprep.subr.mxu0 0.0
    %3139 = vmatpush1.msra.mxu0 0.0
    %3140 = vmatprep.subr.mxu0 0.0
    %3141 = vmatpush1.msra.mxu0 0.0
    %3142 = vmatprep.subr.mxu0 0.0
    %3143 = vmatpush1.msra.mxu0 0.0
    %3144 = vmatprep.subr.mxu0 0.0
    %3145 = vmatpush1.msra.mxu0 0.0
    %3146 = vmatprep.subr.mxu0 0.0
    %3147 = vmatpush1.msra.mxu0 0.0
    %3148 = vmatprep.subr.mxu0 0.0
    %3149 = vmatpush1.msra.mxu0 0.0
    %3150 = vmatprep.subr.mxu0 0.0
    %3151 = vmatpush1.msra.mxu0 0.0
    %3152 = vmatprep.subr.mxu0 0.0
    %3153 = vmatpush1.msra.mxu0 0.0
    %3154 = vmatprep.subr.mxu0 0.0
    %3155 = vmatpush1.msra.mxu0 0.0
    %3156 = vmatprep.subr.mxu0 0.0
    %3157 = vmatpush1.msra.mxu0 0.0
    %3158 = vmatprep.subr.mxu0 0.0
    %3159 = vmatpush1.msra.mxu0 0.0
    %3160 = vmatprep.subr.mxu0 0.0
    %3161 = vmatpush1.msra.mxu0 0.0
    %3162 = vmatprep.subr.mxu0 0.0
    %3163 = vmatpush1.msra.mxu0 0.0
    %3164 = vmatprep.mubr.f32.mxu0 0.0
    %3165 = vmatmul.mubr.f32.gmra.mrb[0].mxu0 %v3083
    %v3166 = vpop.f32.mrb[0].mxu0
    %v3167 = vadd.f32 %v3080, %v3166
    %v3168 = vpop.f32.mrb[0].mxu0
    %3169 = vmatprep.mubr.f32.mxu0 0.0
    %3170 = vmatmul.mubr.f32.gmra.mrb[0].mxu0 %v3086
    %v3171 = vpop.f32.mrb[0].mxu0
    %v3172 = vadd.f32 %v3080, %v3171
    %v3173 = vpop.f32.mrb[0].mxu0
    %3174 = vmatprep.mubr.f32.mxu0 0.0
    %3175 = vmatmul.mubr.f32.gmra.mrb[0].mxu0 %v3089
    %v3176 = vpop.f32.mrb[0].mxu0
    %v3177 = vadd.f32 %v3080, %v3176
    %v3178 = vpop.f32.mrb[0].mxu0
    %3179 = vmatprep.mubr.f32.mxu0 0.0
    %3180 = vmatmul.mubr.f32.gmra.mrb[0].mxu0 %v3092
    %v3181 = vpop.f32.mrb[0].mxu0
    %v3182 = vadd.f32 %v3080, %v3181
    %v3183 = vpop.f32.mrb[0].mxu0
    %3184 = vmatprep.mubr.f32.mxu0 0.0
    %3185 = vmatmul.mubr.f32.gmra.mrb[0].mxu0 %v3095
    %v3186 = vpop.f32.mrb[0].mxu0
    %v3187 = vadd.f32 %v3080, %v3186
    %v3188 = vpop.f32.mrb[0].mxu0
    %3189 = vmatprep.mubr.f32.mxu0 0.0
    %3190 = vmatmul.mubr.f32.gmra.mrb[0].mxu0 %v3098
    %v3191 = vpop.f32.mrb[0].mxu0
    %v3192 = vadd.f32 %v3080, %v3191
    %v3193 = vpop.f32.mrb[0].mxu0
    %3194 = vdwg.mxu0
    %vm3195 = vcmp.gt.f32.partialorder %v3167, 20.0
    %vm3196 = vcmp.gt.f32.partialorder %v3172, 20.0
    %vm3197 = vcmp.gt.f32.partialorder %v3177, 20.0
    %vm3198 = vcmp.gt.f32.partialorder %v3182, 20.0
    %vm3199 = vcmp.gt.f32.partialorder %v3187, 20.0
    %vm3200 = vcmp.gt.f32.partialorder %v3192, 20.0
    %v3201 = vmul.f32 %v3167, 1.442695
    %v3202 = vpow.pop %v3201
    %v3203 = vmul.f32 %v3172, 1.442695
    %v3204 = vpow.pop %v3203
    %v3205 = vmul.f32 %v3177, 1.442695
    %v3206 = vpow.pop %v3205
    %v3207 = vmul.f32 %v3182, 1.442695
    %v3208 = vpow.pop %v3207
    %v3209 = vmul.f32 %v3187, 1.442695
    %v3210 = vpow.pop %v3209
    %v3211 = vmul.f32 %v3192, 1.442695
    %v3212 = vpow.pop %v3211
    %v3213 = vadd.f32 %v3202, 1.0
    %v3214 = vlog2.pop %v3213
    %v3215 = vmul.f32 %v3214, 0.6931472
    %v3216 = vmul.f32 -0.5, %v3202
    %v3217 = vadd.f32 %v3216, 1.0
    %v3218 = vmul.f32 %v3217, %v3202
    %v3219 = vand.u32 2147483647, %v3202
    %vm3220 = vcmp.lt.f32.partialorder %v3219, 0.0004427343
    %v3221 = vsel %vm3220, %v3218, %v3215
    %v3222 = vadd.f32 %v3204, 1.0
    %v3223 = vlog2.pop %v3222
    %v3224 = vmul.f32 %v3223, 0.6931472
    %v3225 = vmul.f32 -0.5, %v3204
    %v3226 = vadd.f32 %v3225, 1.0
    %v3227 = vmul.f32 %v3226, %v3204
    %v3228 = vand.u32 2147483647, %v3204
    %vm3229 = vcmp.lt.f32.partialorder %v3228, 0.0004427343
    %v3230 = vsel %vm3229, %v3227, %v3224
    %v3231 = vadd.f32 %v3206, 1.0
    %v3232 = vlog2.pop %v3231
    %v3233 = vmul.f32 %v3232, 0.6931472
    %v3234 = vmul.f32 -0.5, %v3206
    %v3235 = vadd.f32 %v3234, 1.0
    %v3236 = vmul.f32 %v3235, %v3206
    %v3237 = vand.u32 2147483647, %v3206
    %vm3238 = vcmp.lt.f32.partialorder %v3237, 0.0004427343
    %v3239 = vsel %vm3238, %v3236, %v3233
    %v3240 = vadd.f32 %v3208, 1.0
    %v3241 = vlog2.pop %v3240
    %v3242 = vmul.f32 %v3241, 0.6931472
    %v3243 = vmul.f32 -0.5, %v3208
    %v3244 = vadd.f32 %v3243, 1.0
    %v3245 = vmul.f32 %v3244, %v3208
    %v3246 = vand.u32 2147483647, %v3208
    %vm3247 = vcmp.lt.f32.partialorder %v3246, 0.0004427343
    %v3248 = vsel %vm3247, %v3245, %v3242
    %v3249 = vadd.f32 %v3210, 1.0
    %v3250 = vlog2.pop %v3249
    %v3251 = vmul.f32 %v3250, 0.6931472
    %v3252 = vmul.f32 -0.5, %v3210
    %v3253 = vadd.f32 %v3252, 1.0
    %v3254 = vmul.f32 %v3253, %v3210
    %v3255 = vand.u32 2147483647, %v3210
    %vm3256 = vcmp.lt.f32.partialorder %v3255, 0.0004427343
    %v3257 = vsel %vm3256, %v3254, %v3251
    %v3258 = vadd.f32 %v3212, 1.0
    %v3259 = vlog2.pop %v3258
    %v3260 = vmul.f32 %v3259, 0.6931472
    %v3261 = vmul.f32 -0.5, %v3212
    %v3262 = vadd.f32 %v3261, 1.0
    %v3263 = vmul.f32 %v3262, %v3212
    %v3264 = vand.u32 2147483647, %v3212
    %vm3265 = vcmp.lt.f32.partialorder %v3264, 0.0004427343
    %v3266 = vsel %vm3265, %v3263, %v3260
    %v3267 = vsel %vm3195, %v3167, %v3221
    %v3268 = vsel %vm3196, %v3172, %v3230
    %v3269 = vsel %vm3197, %v3177, %v3239
    %v3270 = vsel %vm3198, %v3182, %v3248
    %v3271 = vsel %vm3199, %v3187, %v3257
    %v3272 = vsel %vm3200, %v3192, %v3266
    %v3273 = vadd.f32 %v3267, 0.1
    %v3274 = vadd.f32 %v3268, 0.1
    %v3275 = vadd.f32 %v3269, 0.1
    %v3276 = vadd.f32 %v3270, 0.1
    %v3277 = vadd.f32 %v3271, 0.1
    %v3278 = vadd.f32 %v3272, 0.1
    %v3279 = vld [vmem:[%s3] sm:$0xff]
    %v3280 = vld [vmem:[%s3 + $0x8] sm:$0xff]
    %v3281 = vld [vmem:[%s3 + $0x10] sm:$0xff]
    %v3282 = vld [vmem:[%s3 + $0x18] sm:$0xff]
    %v3283 = vld [vmem:[%s3 + $0x20] sm:$0xff]
    %v3284 = vld [vmem:[%s3 + $0x28] sm:$0xff]
    %3291 = vrot.lane.b32.xlu0 %v3279, 8
    %v3292 = vpop.permute.xlu0 %3291
    %3293 = vrot.lane.b32.xlu0 %v3280, 8
    %v3294 = vpop.permute.xlu0 %3293
    %3295 = vrot.lane.b32.xlu0 %v3281, 8
    %v3296 = vpop.permute.xlu0 %3295
    %3297 = vrot.lane.b32.xlu0 %v3282, 8
    %v3298 = vpop.permute.xlu0 %3297
    %3299 = vrot.lane.b32.xlu0 %v3283, 8
    %v3300 = vpop.permute.xlu0 %3299
    %3301 = vrot.lane.b32.xlu0 %v3284, 8
    %v3302 = vpop.permute.xlu0 %3301
    %v3309 = vmul.f32 %v3273, %v3292
    %v3310 = vmul.f32 %v3274, %v3294
    %v3311 = vmul.f32 %v3275, %v3296
    %v3312 = vmul.f32 %v3276, %v3298
    %v3313 = vmul.f32 %v3277, %v3300
    %v3314 = vmul.f32 %v3278, %v3302
    %3321 = vrot.lane.b32.xlu0 %v3309, 120
    %v3322 = vpop.permute.xlu0 %3321
    %3323 = vrot.lane.b32.xlu0 %v3310, 120
    %v3324 = vpop.permute.xlu0 %3323
    %3325 = vrot.lane.b32.xlu0 %v3311, 120
    %v3326 = vpop.permute.xlu0 %3325
    %3327 = vrot.lane.b32.xlu0 %v3312, 120
    %v3328 = vpop.permute.xlu0 %3327
    %3329 = vrot.lane.b32.xlu0 %v3313, 120
    %v3330 = vpop.permute.xlu0 %3329
    %3331 = vrot.lane.b32.xlu0 %v3314, 120
    %v3332 = vpop.permute.xlu0 %3331
    %v3339 = vadd.f32 %v3167, %v3322
    %v3340 = vadd.f32 %v3172, %v3324
    %v3341 = vadd.f32 %v3177, %v3326
    %v3342 = vadd.f32 %v3182, %v3328
    %v3343 = vadd.f32 %v3187, %v3330
    %v3344 = vadd.f32 %v3192, %v3332
    %3351 = vst.msk [vmem:[#allocation2] sm:$0xff] %vm425, %v621
    %3352 = vst.msk [vmem:[#allocation2 + $0x8] sm:$0xff] %vm425, %v1063
    %3353 = vst.msk [vmem:[#allocation2 + $0x10] sm:$0xff] %vm425, %v1494
    %3354 = vst.msk [vmem:[#allocation2 + $0x18] sm:$0xff] %vm425, %v1925
    %3355 = vst.msk [vmem:[#allocation2 + $0x20] sm:$0xff] %vm425, %v2356
    %3356 = vst.msk [vmem:[#allocation2 + $0x28] sm:$0xff] %vm425, %v2787
    %3363 = vrot.lane.b32.xlu0 %v3167, 32
    %v3364 = vpop.permute.xlu0 %3363
    %3365 = vrot.lane.b32.xlu0 %v3172, 32
    %v3366 = vpop.permute.xlu0 %3365
    %3367 = vrot.lane.b32.xlu0 %v3177, 32
    %v3368 = vpop.permute.xlu0 %3367
    %3369 = vrot.lane.b32.xlu0 %v3182, 32
    %v3370 = vpop.permute.xlu0 %3369
    %3371 = vrot.lane.b32.xlu0 %v3187, 32
    %v3372 = vpop.permute.xlu0 %3371
    %3373 = vrot.lane.b32.xlu0 %v3192, 32
    %v3374 = vpop.permute.xlu0 %3373
    %vm3381 = vcmask 326912
    %3382 = vst.msk [vmem:[#allocation2] sm:$0xff] %vm3381, %v3364
    %3383 = vst.msk [vmem:[#allocation2 + $0x8] sm:$0xff] %vm3381, %v3366
    %3384 = vst.msk [vmem:[#allocation2 + $0x10] sm:$0xff] %vm3381, %v3368
    %3385 = vst.msk [vmem:[#allocation2 + $0x18] sm:$0xff] %vm3381, %v3370
    %3386 = vst.msk [vmem:[#allocation2 + $0x20] sm:$0xff] %vm3381, %v3372
    %3387 = vst.msk [vmem:[#allocation2 + $0x28] sm:$0xff] %vm3381, %v3374
    %3394 = vrot.lane.b32.xlu0 %v3273, 32
    %v3395 = vpop.permute.xlu0 %3394
    %3396 = vrot.lane.b32.xlu0 %v3274, 32
    %v3397 = vpop.permute.xlu0 %3396
    %3398 = vrot.lane.b32.xlu0 %v3275, 32
    %v3399 = vpop.permute.xlu0 %3398
    %3400 = vrot.lane.b32.xlu0 %v3276, 32
    %v3401 = vpop.permute.xlu0 %3400
    %3402 = vrot.lane.b32.xlu0 %v3277, 32
    %v3403 = vpop.permute.xlu0 %3402
    %3404 = vrot.lane.b32.xlu0 %v3278, 32
    %v3405 = vpop.permute.xlu0 %3404
    %vm3412 = vcmask 392512
    %3413 = vst.msk [vmem:[#allocation2] sm:$0xff] %vm3412, %v3395
    %3414 = vst.msk [vmem:[#allocation2 + $0x8] sm:$0xff] %vm3412, %v3397
    %3415 = vst.msk [vmem:[#allocation2 + $0x10] sm:$0xff] %vm3412, %v3399
    %3416 = vst.msk [vmem:[#allocation2 + $0x18] sm:$0xff] %vm3412, %v3401
    %3417 = vst.msk [vmem:[#allocation2 + $0x20] sm:$0xff] %vm3412, %v3403
    %3418 = vst.msk [vmem:[#allocation2 + $0x28] sm:$0xff] %vm3412, %v3405
    %3425 = vrot.lane.b32.xlu0 %v3339, 48
    %v3426 = vpop.permute.xlu0 %3425
    %3427 = vrot.lane.b32.xlu0 %v3340, 48
    %v3428 = vpop.permute.xlu0 %3427
    %3429 = vrot.lane.b32.xlu0 %v3341, 48
    %v3430 = vpop.permute.xlu0 %3429
    %3431 = vrot.lane.b32.xlu0 %v3342, 48
    %v3432 = vpop.permute.xlu0 %3431
    %3433 = vrot.lane.b32.xlu0 %v3343, 48
    %v3434 = vpop.permute.xlu0 %3433
    %3435 = vrot.lane.b32.xlu0 %v3344, 48
    %v3436 = vpop.permute.xlu0 %3435
    %vm3443 = vcmask 458112
    %3444 = vst.msk [vmem:[#allocation2] sm:$0xff] %vm3443, %v3426
    %3445 = vst.msk [vmem:[#allocation2 + $0x8] sm:$0xff] %vm3443, %v3428
    %3446 = vst.msk [vmem:[#allocation2 + $0x10] sm:$0xff] %vm3443, %v3430
    %3447 = vst.msk [vmem:[#allocation2 + $0x18] sm:$0xff] %vm3443, %v3432
    %3448 = vst.msk [vmem:[#allocation2 + $0x20] sm:$0xff] %vm3443, %v3434
    %3449 = vst.msk [vmem:[#allocation2 + $0x28] sm:$0xff] %vm3443, %v3436
    %3456 = vrot.lane.b32.xlu0 %v776, 56
    %v3457 = vpop.permute.xlu0 %3456
    %3458 = vrot.lane.b32.xlu0 %v1207, 56
    %v3459 = vpop.permute.xlu0 %3458
    %3460 = vrot.lane.b32.xlu0 %v1638, 56
    %v3461 = vpop.permute.xlu0 %3460
    %3462 = vrot.lane.b32.xlu0 %v2069, 56
    %v3463 = vpop.permute.xlu0 %3462
    %3464 = vrot.lane.b32.xlu0 %v2500, 56
    %v3465 = vpop.permute.xlu0 %3464
    %3466 = vrot.lane.b32.xlu0 %v2931, 56
    %v3467 = vpop.permute.xlu0 %3466
    %vm3474 = vcmask 523712
    %3475 = vst.msk [vmem:[#allocation2] sm:$0xff] %vm3474, %v3457
    %3476 = vst.msk [vmem:[#allocation2 + $0x8] sm:$0xff] %vm3474, %v3459
    %3477 = vst.msk [vmem:[#allocation2 + $0x10] sm:$0xff] %vm3474, %v3461
    %3478 = vst.msk [vmem:[#allocation2 + $0x18] sm:$0xff] %vm3474, %v3463
    %3479 = vst.msk [vmem:[#allocation2 + $0x20] sm:$0xff] %vm3474, %v3465
    %3480 = vst.msk [vmem:[#allocation2 + $0x28] sm:$0xff] %vm3474, %v3467
    %3487 = vrot.lane.b32.xlu0 %v792, 56
    %v3488 = vpop.permute.xlu0 %3487
    %3489 = vrot.lane.b32.xlu0 %v1223, 56
    %v3490 = vpop.permute.xlu0 %3489
    %3491 = vrot.lane.b32.xlu0 %v1654, 56
    %v3492 = vpop.permute.xlu0 %3491
    %3493 = vrot.lane.b32.xlu0 %v2085, 56
    %v3494 = vpop.permute.xlu0 %3493
    %3495 = vrot.lane.b32.xlu0 %v2516, 56
    %v3496 = vpop.permute.xlu0 %3495
    %3497 = vrot.lane.b32.xlu0 %v2947, 56
    %v3498 = vpop.permute.xlu0 %3497
    %vm3505 = vcmask 589312
    %3506 = vst.msk [vmem:[#allocation2] sm:$0xff] %vm3505, %v3488
    %3507 = vst.msk [vmem:[#allocation2 + $0x8] sm:$0xff] %vm3505, %v3490
    %3508 = vst.msk [vmem:[#allocation2 + $0x10] sm:$0xff] %vm3505, %v3492
    %3509 = vst.msk [vmem:[#allocation2 + $0x18] sm:$0xff] %vm3505, %v3494
    %3510 = vst.msk [vmem:[#allocation2 + $0x20] sm:$0xff] %vm3505, %v3496
    %3511 = vst.msk [vmem:[#allocation2 + $0x28] sm:$0xff] %vm3505, %v3498
    %3518 = vrot.lane.b32.xlu0 %v803, 72
    %v3519 = vpop.permute.xlu0 %3518
    %3520 = vrot.lane.b32.xlu0 %v1234, 72
    %v3521 = vpop.permute.xlu0 %3520
    %3522 = vrot.lane.b32.xlu0 %v1665, 72
    %v3523 = vpop.permute.xlu0 %3522
    %3524 = vrot.lane.b32.xlu0 %v2096, 72
    %v3525 = vpop.permute.xlu0 %3524
    %3526 = vrot.lane.b32.xlu0 %v2527, 72
    %v3527 = vpop.permute.xlu0 %3526
    %3528 = vrot.lane.b32.xlu0 %v2958, 72
    %v3529 = vpop.permute.xlu0 %3528
    %vm3536 = vcmask 654912
    %3537 = vst.msk [vmem:[#allocation2] sm:$0xff] %vm3536, %v3519
    %3538 = vst.msk [vmem:[#allocation2 + $0x8] sm:$0xff] %vm3536, %v3521
    %3539 = vst.msk [vmem:[#allocation2 + $0x10] sm:$0xff] %vm3536, %v3523
    %3540 = vst.msk [vmem:[#allocation2 + $0x18] sm:$0xff] %vm3536, %v3525
    %3541 = vst.msk [vmem:[#allocation2 + $0x20] sm:$0xff] %vm3536, %v3527
    %3542 = vst.msk [vmem:[#allocation2 + $0x28] sm:$0xff] %vm3536, %v3529
    // Predicated region
    $region94: #{tpu_custom_call.1} parent=1 // pred_check
      _
    $region95: #{tpu_custom_call.1} parent=1 // pred_check_branch
      %3544 = sbr.rel (0) target = $region97
    $region96: #{tpu_custom_call.1} parent=1 // pred_region
      %s3546 = ssub.s32 768, 768
      %3547 = vsyncadd [#allocation3], %s3546
      %s3548 = sshll.u32 [#allocation2], 4
      %s3549 = int_to_ptr.vmem [resolvable:$true] %s3548
      %3554 = dma.vmem_to_hbm [thread:$0]  %s3549, 768, %s23, [#allocation3], 128, 128, 8
    $region97: #{tpu_custom_call.1} parent=1 // pred_fallthru
      _
    // Predicated region
    $region98: #{tpu_custom_call.1} parent=1 // pred_check
      _
    $region99: #{tpu_custom_call.1} parent=1 // pred_check_branch
      %3556 = sbr.rel (0) target = $region101
    $region100: #{tpu_custom_call.1} parent=1 // pred_region
      %3557 = dma.done [#allocation3], 768
    $region101: #{tpu_custom_call.1} parent=1 // pred_fallthru
      _
    %3558 = vsyncpa [#allocation3], 1

</llo_original>
